<compile_context>
chip_gen: v7x
topology: tpu7x:2x2x1
jax: 0.10.0
libtpu: 0.0.40
codegen_flags: <defaults>
</compile_context>

<pallas_src>
import jax
import jax.numpy as jnp
from jax.experimental import pallas as pl
from jax.experimental.pallas import tpu as pltpu

EPS = 1e-5
LANE = 128
# Intermediate activation storage dtype. float32 keeps a tight numerical match
# with the reference; switch to jnp.bfloat16 to halve activation HBM traffic at
# real ResNet sizes (accumulation and BN math stay in f32 either way).
ACT_DTYPE = jnp.float32


# ---------------------------------------------------------------------------
# small host-side helpers (padding / packing glue)
# ---------------------------------------------------------------------------
def _round_up(x, m):
    return (x + m - 1) // m * m


def _pad_vec(v, cp):
    return jnp.pad(v, (0, cp - v.shape[0]))


def _pad_ch(x, cp):
    return jnp.pad(x, ((0, 0),) * (x.ndim - 1) + ((0, cp - x.shape[-1]),))


def _pack_weight(w_hwio, cpi, cpo):
    """(KH,KW,Cin,Cout) -> zero-padded, bf16, (KH*KW*Cpi, Cpo) matmul layout."""
    kh, kw, ci, co = w_hwio.shape
    wp = jnp.pad(w_hwio, ((0, 0), (0, 0), (0, cpi - ci), (0, cpo - co)))
    return wp.reshape(kh * kw * cpi, cpo).astype(jnp.bfloat16)


def _fold_bn(psum, psq, gamma, beta, count, cp):
    """Fold per-image (sum, sumsq) partials + gamma/beta into scale/shift."""
    total = jnp.sum(psum.reshape(-1, cp), axis=0)
    total_sq = jnp.sum(psq.reshape(-1, cp), axis=0)
    mean = total / count
    var = jnp.maximum(total_sq / count - mean * mean, 0.0)
    g = _pad_vec(gamma, cp)
    b = _pad_vec(beta, cp)
    scale = g * jax.lax.rsqrt(var + EPS)
    shift = b - mean * scale
    return scale.reshape(1, cp).astype(jnp.float32), shift.reshape(1, cp).astype(jnp.float32)


# ---------------------------------------------------------------------------
# Conv kernel: per-tap bf16 MXU matmuls accumulated in f32, fused BN statistics,
# optional fused (scale, shift, ReLU) prologue for the *previous* BN.
# ---------------------------------------------------------------------------
def _make_conv_kernel(KH, KW, stride, pad, Hi, Wi, Ho, Wo, Cpi, Cpo, fuse_affine):
    def kernel(*refs):
        if fuse_affine:
            x_ref, s_ref, t_ref, w_ref, b_ref = refs[:5]
            rest = refs[5:]
        else:
            x_ref, w_ref, b_ref = refs[:3]
            s_ref = t_ref = None
            rest = refs[3:]
        y_ref, psum_ref, psq_ref = rest[0], rest[1], rest[2]
        pad_ref = rest[3] if pad else None

        a = x_ref[0].astype(jnp.float32)                         # (Hi, Wi, Cpi)
        if fuse_affine:                                          # previous BN + ReLU
            a = a * s_ref[...].reshape(1, 1, Cpi) + t_ref[...].reshape(1, 1, Cpi)
            a = jnp.maximum(a, 0.0)

        if pad:
            # spatial zero-padding done in VMEM scratch (keeps the BN-affine
            # fusion correct: padded positions stay exactly zero)
            pad_ref[...] = jnp.zeros_like(pad_ref)
            pad_ref[pad:pad + Hi, pad:pad + Wi, :] = a
            xn = pad_ref[...]
        else:
            xn = a

        w = w_ref[...]                                           # (KH*KW*Cpi, Cpo) bf16

        # Per-tap MXU matmuls, accumulated in f32 (K = Cpi = 128 per tap).
        acc = jnp.zeros((Ho * Wo, Cpo), jnp.float32)
        tap = 0
        for kh in range(KH):                                     # static KHxKW loop
            for kw in range(KW):
                if stride == 1:
                    patch = xn[kh:kh + Ho, kw:kw + Wo, :]
                else:
                    # TODO(synk): for stride>1 push the stride into the BlockSpec/DMA
                    # (phase decomposition) instead of an in-kernel strided slice;
                    # only the downsampling block takes this branch.
                    patch = jax.lax.slice(
                        xn, (kh, kw, 0),
                        (kh + (Ho - 1) * stride + 1, kw + (Wo - 1) * stride + 1, Cpi),
                        (stride, stride, 1))
                lhs = patch.reshape(Ho * Wo, Cpi).astype(jnp.bfloat16)
                rhs = w[tap * Cpi:(tap + 1) * Cpi, :]            # (Cpi, Cpo), aligned
                acc = acc + jnp.dot(lhs, rhs, preferred_element_type=jnp.float32)
                tap += 1

        acc = acc + b_ref[...]                                   # (1, Cpo) broadcast

        # fused per-image BN statistics (reduced over spatial positions)
        psum_ref[...] = jnp.sum(acc, axis=0).reshape(1, 1, Cpo)
        psq_ref[...] = jnp.sum(acc * acc, axis=0).reshape(1, 1, Cpo)
        y_ref[...] = acc.reshape(1, Ho, Wo, Cpo).astype(y_ref.dtype)

    return kernel


def conv_bn_pallas(x, w_packed, bias, *, KH, KW, stride, pad, affine=None,
                   act_dtype=ACT_DTYPE):
    """Conv (+ optional fused previous-BN affine+ReLU) + fused batch statistics."""
    N, Hi, Wi, Cpi = x.shape
    Kdim, Cpo = w_packed.shape
    assert Kdim == KH * KW * Cpi
    Hp, Wp = Hi + 2 * pad, Wi + 2 * pad
    Ho = (Hp - KH) // stride + 1
    Wo = (Wp - KW) // stride + 1
    fuse = affine is not None

    kernel = _make_conv_kernel(KH, KW, stride, pad, Hi, Wi, Ho, Wo, Cpi, Cpo, fuse)

    in_specs = [pl.BlockSpec((1, Hi, Wi, Cpi), lambda n: (n, 0, 0, 0))]
    args = [x]
    if fuse:
        in_specs += [pl.BlockSpec((1, Cpi), lambda n: (0, 0)),
                     pl.BlockSpec((1, Cpi), lambda n: (0, 0))]
        args += [affine[0], affine[1]]
    in_specs += [pl.BlockSpec((Kdim, Cpo), lambda n: (0, 0)),    # resident weights
                 pl.BlockSpec((1, Cpo), lambda n: (0, 0))]
    args += [w_packed, bias]

    scratch = [pltpu.VMEM((Hp, Wp, Cpi), jnp.float32)] if pad else []

    return pl.pallas_call(
        kernel,
        out_shape=(jax.ShapeDtypeStruct((N, Ho, Wo, Cpo), act_dtype),
                   jax.ShapeDtypeStruct((N, 1, Cpo), jnp.float32),
                   jax.ShapeDtypeStruct((N, 1, Cpo), jnp.float32)),
        grid=(N,),
        in_specs=in_specs,
        out_specs=(pl.BlockSpec((1, Ho, Wo, Cpo), lambda n: (n, 0, 0, 0)),
                   pl.BlockSpec((1, 1, Cpo), lambda n: (n, 0, 0)),
                   pl.BlockSpec((1, 1, Cpo), lambda n: (n, 0, 0))),
        scratch_shapes=scratch,
        compiler_params=pltpu.CompilerParams(dimension_semantics=("parallel",)),
    )(*args)


# ---------------------------------------------------------------------------
# Fused epilogue: bn2-affine + shortcut-bn-affine + residual add + ReLU.
# Row-tiled over a lane-dense (rows, 128) view.
# ---------------------------------------------------------------------------
def _bn_add_relu_kernel(y_ref, sc_ref, s2_ref, t2_ref, ss_ref, ts_ref, o_ref):
    y = y_ref[...].astype(jnp.float32)
    sc = sc_ref[...].astype(jnp.float32)
    o = y * s2_ref[...] + t2_ref[...] + sc * ss_ref[...] + ts_ref[...]
    o_ref[...] = jnp.maximum(o, 0.0).astype(o_ref.dtype)


def bn_add_relu_pallas(y_flat, sc_flat, s2, t2, ss, ts):
    R, Cp = y_flat.shape
    TR = R
    for cand in (256, 128, 64, 32, 16, 8):
        if R % cand == 0:
            TR = cand
            break
    vec_spec = lambda: pl.BlockSpec((1, Cp), lambda i: (0, 0))
    return pl.pallas_call(
        _bn_add_relu_kernel,
        out_shape=jax.ShapeDtypeStruct((R, Cp), jnp.float32),
        grid=(R // TR,),
        in_specs=[pl.BlockSpec((TR, Cp), lambda i: (i, 0)),
                  pl.BlockSpec((TR, Cp), lambda i: (i, 0)),
                  vec_spec(), vec_spec(), vec_spec(), vec_spec()],
        out_specs=pl.BlockSpec((TR, Cp), lambda i: (i, 0)),
        compiler_params=pltpu.CompilerParams(dimension_semantics=("parallel",)),
    )(y_flat, sc_flat, s2, t2, ss, ts)


# ---------------------------------------------------------------------------
# BasicBlock forward (Pallas).
# ---------------------------------------------------------------------------
def basic_block_forward(x_nchw, params, *, stride=1):
    N, Cin, H, W = x_nchw.shape
    Cout = params["w1"].shape[-1]
    Cpi = _round_up(Cin, LANE)
    Cpo = _round_up(Cout, LANE)

    x = jnp.transpose(x_nchw, (0, 2, 3, 1))            # NCHW -> NHWC
    x_p = _pad_ch(x, Cpi).astype(jnp.float32)          # lane-dense channels

    Ho = (H + 2 - 3) // stride + 1
    Wo = (W + 2 - 3) // stride + 1
    count = N * Ho * Wo

    # conv1 (3x3, stride) with fused batch statistics
    w1 = _pack_weight(params["w1"], Cpi, Cpo)
    b1 = _pad_vec(params["b1"], Cpo).reshape(1, Cpo)
    y1, ps1, pq1 = conv_bn_pallas(x_p, w1, b1, KH=3, KW=3, stride=stride, pad=1)
    s1, t1 = _fold_bn(ps1, pq1, params["g1"], params["be1"], count, Cpo)

    # conv2 (3x3, stride 1): bn1-affine + ReLU fused into its prologue,
    # its own batch statistics fused into its epilogue
    w2 = _pack_weight(params["w2"], Cpo, Cpo)
    b2 = _pad_vec(params["b2"], Cpo).reshape(1, Cpo)
    y2, ps2, pq2 = conv_bn_pallas(y1, w2, b2, KH=3, KW=3, stride=1, pad=1,
                                  affine=(s1, t1))
    s2, t2 = _fold_bn(ps2, pq2, params["g2"], params["be2"], count, Cpo)

    # shortcut
    if stride != 1:
        # 1x1 stride-s conv == 1x1 stride-1 conv on the subsampled input (glue)
        xs = x_p[:, ::stride, ::stride, :]
        ws = _pack_weight(params["ws"], Cpi, Cpo)
        bs = _pad_vec(params["bs"], Cpo).reshape(1, Cpo)
        sc, pss, pqs = conv_bn_pallas(xs, ws, bs, KH=1, KW=1, stride=1, pad=0)
        ss, ts = _fold_bn(pss, pqs, params["gs"], params["bes"], count, Cpo)
    else:
        assert Cin == Cout, "identity shortcut requires in_ch == out_ch"
        sc = x_p
        ss = jnp.ones((1, Cpo), jnp.float32)
        ts = jnp.zeros((1, Cpo), jnp.float32)

    # bn2 + shortcut-bn + residual add + ReLU in one lane-dense pass
    R = N * Ho * Wo
    out_flat = bn_add_relu_pallas(y2.reshape(R, Cpo), sc.reshape(R, Cpo),
                                  s2, t2, ss, ts)
    out = out_flat.reshape(N, Ho, Wo, Cpo)[..., :Cout]
    return jnp.transpose(out, (0, 3, 1, 2))            # NHWC -> NCHW


# ---------------------------------------------------------------------------
# Pure-JAX reference with matching MXU numerics (bf16 conv inputs, f32 accum).
# ---------------------------------------------------------------------------
def basic_block_reference(x_nchw, params, *, stride=1):
    def conv(x, w, b, s, p):
        y = jax.lax.conv_general_dilated(
            x.astype(jnp.bfloat16), w.astype(jnp.bfloat16), (s, s),
            [(p, p), (p, p)], dimension_numbers=("NHWC", "HWIO", "NHWC"),
            preferred_element_type=jnp.float32)
        return y + b

    def bn(y, g, b):
        m = jnp.mean(y, axis=(0, 1, 2))
        v = jnp.mean(jnp.square(y - m), axis=(0, 1, 2))
        return (y - m) * (g * jax.lax.rsqrt(v + EPS)) + b

    x = jnp.transpose(x_nchw, (0, 2, 3, 1))
    o = jax.nn.relu(bn(conv(x, params["w1"], params["b1"], stride, 1),
                       params["g1"], params["be1"]))
    o = bn(conv(o, params["w2"], params["b2"], 1, 1), params["g2"], params["be2"])
    if stride != 1:
        sc = bn(conv(x, params["ws"], params["bs"], stride, 0),
                params["gs"], params["bes"])
    else:
        sc = x
    return jnp.transpose(jax.nn.relu(o + sc), (0, 3, 1, 2))


# ---------------------------------------------------------------------------
if __name__ == "__main__":
    # Small shapes consistent with the module: batch=2, in_ch=out_ch=4, 16x16.
    N, C_IN, C_OUT, H, W = 2, 4, 4, 16, 16
    STRIDE = 1  # identity-shortcut path (stride != 1 path implemented above)

    key = jax.random.PRNGKey(0)
    k1, k2, k3, k4, kx = jax.random.split(key, 5)

    params = {
        # conv weights in HWIO for the NHWC kernels
        "w1": 0.1 * jax.random.normal(k1, (3, 3, C_IN, C_OUT), jnp.float32),
        "b1": 0.1 * jax.random.normal(k2, (C_OUT,), jnp.float32),
        "w2": 0.1 * jax.random.normal(k3, (3, 3, C_OUT, C_OUT), jnp.float32),
        "b2": 0.1 * jax.random.normal(k4, (C_OUT,), jnp.float32),
        # BatchNorm affine params (PyTorch init: gamma=1, beta=0); training-mode
        # batch statistics are computed on the fly inside the conv kernels.
        "g1": jnp.ones((C_OUT,), jnp.float32),
        "be1": jnp.zeros((C_OUT,), jnp.float32),
        "g2": jnp.ones((C_OUT,), jnp.float32),
        "be2": jnp.zeros((C_OUT,), jnp.float32),
    }

    x = jax.random.normal(kx, (N, C_IN, H, W), jnp.float32)

    out = jax.block_until_ready(basic_block_forward(x, params, stride=STRIDE))
    ref = jax.block_until_ready(basic_block_reference(x, params, stride=STRIDE))

    assert out.shape == (N, C_OUT, H, W), out.shape
    err = float(jnp.max(jnp.abs(out - ref)))
    assert err < 2e-3, err
    print("KERNEL_OK")
</pallas_src>

<mosaic_0001>
module attributes {stable_mosaic.version = 11 : i64} {
  func.func @kernel(%arg0: i32, %arg1: memref<1x16x16x128xf32, #tpu.memory_space<vmem>>, %arg2: memref<1152x128xbf16, #tpu.memory_space<vmem>>, %arg3: memref<1x128xf32, #tpu.memory_space<vmem>>, %arg4: memref<1x16x16x128xf32, #tpu.memory_space<vmem>>, %arg5: memref<1x1x128xf32, #tpu.memory_space<vmem>>, %arg6: memref<1x1x128xf32, #tpu.memory_space<vmem>>, %arg7: memref<18x18x128xf32, #tpu.memory_space<vmem>>) attributes {dimension_semantics = [#tpu.dimension_semantics<parallel>], iteration_bounds = array<i64: 2>, scalar_prefetch = 0 : i64, scratch_operands = 1 : i64, tpu.core_type = #tpu.core_type<tc>, window_params = [{transform_indices = @transform_0, window_bounds = array<i64: 1, 16, 16, 128>}, {pipeline_mode = #tpu.pipeline_mode<synchronous>, transform_indices = @transform_1, window_bounds = array<i64: 1152, 128>}, {pipeline_mode = #tpu.pipeline_mode<synchronous>, transform_indices = @transform_2, window_bounds = array<i64: 1, 128>}, {transform_indices = @transform_3, window_bounds = array<i64: 1, 16, 16, 128>}, {transform_indices = @transform_4, window_bounds = array<i64: 1, 1, 128>}, {transform_indices = @transform_5, window_bounds = array<i64: 1, 1, 128>}]} {
    %c0 = arith.constant 0 : index
    %c0_0 = arith.constant 0 : index
    %c0_1 = arith.constant 0 : index
    %c0_2 = arith.constant 0 : index
    %0 = vector.load %arg1[%c0, %c0_0, %c0_1, %c0_2] : memref<1x16x16x128xf32, #tpu.memory_space<vmem>>, vector<1x16x16x128xf32>
    %1 = vector.shape_cast %0 : vector<1x16x16x128xf32> to vector<16x16x128xf32>
    %cst = arith.constant 0.000000e+00 : f32
    %2 = vector.broadcast %cst : f32 to vector<18x18x128xf32>
    %c0_3 = arith.constant 0 : index
    %c0_4 = arith.constant 0 : index
    %c0_5 = arith.constant 0 : index
    %3 = vector.load %arg7[%c0_3, %c0_4, %c0_5] : memref<18x18x128xf32, #tpu.memory_space<vmem>>, vector<18x18x128xf32>
    tpu.vector_store %arg7[%c0_3, %c0_4, %c0_5], %2 {strides = array<i32>} : memref<18x18x128xf32, #tpu.memory_space<vmem>>, vector<18x18x128xf32>,
    %c1 = arith.constant 1 : index
    %c1_6 = arith.constant 1 : index
    %c0_7 = arith.constant 0 : index
    %4 = vector.load %arg7[%c1, %c1_6, %c0_7] : memref<18x18x128xf32, #tpu.memory_space<vmem>>, vector<16x16x128xf32>
    tpu.vector_store %arg7[%c1, %c1_6, %c0_7], %1 {strides = array<i32>} : memref<18x18x128xf32, #tpu.memory_space<vmem>>, vector<16x16x128xf32>,
    %c0_8 = arith.constant 0 : index
    %c0_9 = arith.constant 0 : index
    %c0_10 = arith.constant 0 : index
    %5 = vector.load %arg7[%c0_8, %c0_9, %c0_10] : memref<18x18x128xf32, #tpu.memory_space<vmem>>, vector<18x18x128xf32>
    %c0_11 = arith.constant 0 : index
    %c0_12 = arith.constant 0 : index
    %6 = vector.load %arg2[%c0_11, %c0_12] : memref<1152x128xbf16, #tpu.memory_space<vmem>>, vector<1152x128xbf16>
    %cst_13 = arith.constant 0.000000e+00 : f32
    %7 = vector.broadcast %cst_13 : f32 to vector<256x128xf32>
    %8 = vector.extract_strided_slice %5 {offsets = [0, 0, 0], sizes = [16, 16, 128], strides = [1, 1, 1]} : vector<18x18x128xf32> to vector<16x16x128xf32>
    %9 = vector.shape_cast %8 : vector<16x16x128xf32> to vector<256x128xf32>
    %10 = arith.truncf %9 : vector<256x128xf32> to vector<256x128xbf16>
    %11 = vector.extract_strided_slice %6 {offsets = [0, 0], sizes = [128, 128], strides = [1, 1]} : vector<1152x128xbf16> to vector<128x128xbf16>
    %cst_14 = arith.constant dense<0.000000e+00> : vector<256x128xf32>
    %12 = tpu.matmul %10, %11, %cst_14 {dimension_numbers = #tpu.dot_dimension_numbers<[1], [0], [0], [1], [0, 0, 1, 1], [], []>} : vector<256x128xbf16>, vector<128x128xbf16>, vector<256x128xf32> -> vector<256x128xf32>
    %13 = arith.addf %7, %12 : vector<256x128xf32>
    %14 = vector.extract_strided_slice %5 {offsets = [0, 1, 0], sizes = [16, 16, 128], strides = [1, 1, 1]} : vector<18x18x128xf32> to vector<16x16x128xf32>
    %15 = vector.shape_cast %14 : vector<16x16x128xf32> to vector<256x128xf32>
    %16 = arith.truncf %15 : vector<256x128xf32> to vector<256x128xbf16>
    %17 = vector.extract_strided_slice %6 {offsets = [128, 0], sizes = [128, 128], strides = [1, 1]} : vector<1152x128xbf16> to vector<128x128xbf16>
    %cst_15 = arith.constant dense<0.000000e+00> : vector<256x128xf32>
    %18 = tpu.matmul %16, %17, %cst_15 {dimension_numbers = #tpu.dot_dimension_numbers<[1], [0], [0], [1], [0, 0, 1, 1], [], []>} : vector<256x128xbf16>, vector<128x128xbf16>, vector<256x128xf32> -> vector<256x128xf32>
    %19 = arith.addf %13, %18 : vector<256x128xf32>
    %20 = vector.extract_strided_slice %5 {offsets = [0, 2, 0], sizes = [16, 16, 128], strides = [1, 1, 1]} : vector<18x18x128xf32> to vector<16x16x128xf32>
    %21 = vector.shape_cast %20 : vector<16x16x128xf32> to vector<256x128xf32>
    %22 = arith.truncf %21 : vector<256x128xf32> to vector<256x128xbf16>
    %23 = vector.extract_strided_slice %6 {offsets = [256, 0], sizes = [128, 128], strides = [1, 1]} : vector<1152x128xbf16> to vector<128x128xbf16>
    %cst_16 = arith.constant dense<0.000000e+00> : vector<256x128xf32>
    %24 = tpu.matmul %22, %23, %cst_16 {dimension_numbers = #tpu.dot_dimension_numbers<[1], [0], [0], [1], [0, 0, 1, 1], [], []>} : vector<256x128xbf16>, vector<128x128xbf16>, vector<256x128xf32> -> vector<256x128xf32>
    %25 = arith.addf %19, %24 : vector<256x128xf32>
    %26 = vector.extract_strided_slice %5 {offsets = [1, 0, 0], sizes = [16, 16, 128], strides = [1, 1, 1]} : vector<18x18x128xf32> to vector<16x16x128xf32>
    %27 = vector.shape_cast %26 : vector<16x16x128xf32> to vector<256x128xf32>
    %28 = arith.truncf %27 : vector<256x128xf32> to vector<256x128xbf16>
    %29 = vector.extract_strided_slice %6 {offsets = [384, 0], sizes = [128, 128], strides = [1, 1]} : vector<1152x128xbf16> to vector<128x128xbf16>
    %cst_17 = arith.constant dense<0.000000e+00> : vector<256x128xf32>
    %30 = tpu.matmul %28, %29, %cst_17 {dimension_numbers = #tpu.dot_dimension_numbers<[1], [0], [0], [1], [0, 0, 1, 1], [], []>} : vector<256x128xbf16>, vector<128x128xbf16>, vector<256x128xf32> -> vector<256x128xf32>
    %31 = arith.addf %25, %30 : vector<256x128xf32>
    %32 = vector.extract_strided_slice %5 {offsets = [1, 1, 0], sizes = [16, 16, 128], strides = [1, 1, 1]} : vector<18x18x128xf32> to vector<16x16x128xf32>
    %33 = vector.shape_cast %32 : vector<16x16x128xf32> to vector<256x128xf32>
    %34 = arith.truncf %33 : vector<256x128xf32> to vector<256x128xbf16>
    %35 = vector.extract_strided_slice %6 {offsets = [512, 0], sizes = [128, 128], strides = [1, 1]} : vector<1152x128xbf16> to vector<128x128xbf16>
    %cst_18 = arith.constant dense<0.000000e+00> : vector<256x128xf32>
    %36 = tpu.matmul %34, %35, %cst_18 {dimension_numbers = #tpu.dot_dimension_numbers<[1], [0], [0], [1], [0, 0, 1, 1], [], []>} : vector<256x128xbf16>, vector<128x128xbf16>, vector<256x128xf32> -> vector<256x128xf32>
    %37 = arith.addf %31, %36 : vector<256x128xf32>
    %38 = vector.extract_strided_slice %5 {offsets = [1, 2, 0], sizes = [16, 16, 128], strides = [1, 1, 1]} : vector<18x18x128xf32> to vector<16x16x128xf32>
    %39 = vector.shape_cast %38 : vector<16x16x128xf32> to vector<256x128xf32>
    %40 = arith.truncf %39 : vector<256x128xf32> to vector<256x128xbf16>
    %41 = vector.extract_strided_slice %6 {offsets = [640, 0], sizes = [128, 128], strides = [1, 1]} : vector<1152x128xbf16> to vector<128x128xbf16>
    %cst_19 = arith.constant dense<0.000000e+00> : vector<256x128xf32>
    %42 = tpu.matmul %40, %41, %cst_19 {dimension_numbers = #tpu.dot_dimension_numbers<[1], [0], [0], [1], [0, 0, 1, 1], [], []>} : vector<256x128xbf16>, vector<128x128xbf16>, vector<256x128xf32> -> vector<256x128xf32>
    %43 = arith.addf %37, %42 : vector<256x128xf32>
    %44 = vector.extract_strided_slice %5 {offsets = [2, 0, 0], sizes = [16, 16, 128], strides = [1, 1, 1]} : vector<18x18x128xf32> to vector<16x16x128xf32>
    %45 = vector.shape_cast %44 : vector<16x16x128xf32> to vector<256x128xf32>
    %46 = arith.truncf %45 : vector<256x128xf32> to vector<256x128xbf16>
    %47 = vector.extract_strided_slice %6 {offsets = [768, 0], sizes = [128, 128], strides = [1, 1]} : vector<1152x128xbf16> to vector<128x128xbf16>
    %cst_20 = arith.constant dense<0.000000e+00> : vector<256x128xf32>
    %48 = tpu.matmul %46, %47, %cst_20 {dimension_numbers = #tpu.dot_dimension_numbers<[1], [0], [0], [1], [0, 0, 1, 1], [], []>} : vector<256x128xbf16>, vector<128x128xbf16>, vector<256x128xf32> -> vector<256x128xf32>
    %49 = arith.addf %43, %48 : vector<256x128xf32>
    %50 = vector.extract_strided_slice %5 {offsets = [2, 1, 0], sizes = [16, 16, 128], strides = [1, 1, 1]} : vector<18x18x128xf32> to vector<16x16x128xf32>
    %51 = vector.shape_cast %50 : vector<16x16x128xf32> to vector<256x128xf32>
    %52 = arith.truncf %51 : vector<256x128xf32> to vector<256x128xbf16>
    %53 = vector.extract_strided_slice %6 {offsets = [896, 0], sizes = [128, 128], strides = [1, 1]} : vector<1152x128xbf16> to vector<128x128xbf16>
    %cst_21 = arith.constant dense<0.000000e+00> : vector<256x128xf32>
    %54 = tpu.matmul %52, %53, %cst_21 {dimension_numbers = #tpu.dot_dimension_numbers<[1], [0], [0], [1], [0, 0, 1, 1], [], []>} : vector<256x128xbf16>, vector<128x128xbf16>, vector<256x128xf32> -> vector<256x128xf32>
    %55 = arith.addf %49, %54 : vector<256x128xf32>
    %56 = vector.extract_strided_slice %5 {offsets = [2, 2, 0], sizes = [16, 16, 128], strides = [1, 1, 1]} : vector<18x18x128xf32> to vector<16x16x128xf32>
    %57 = vector.shape_cast %56 : vector<16x16x128xf32> to vector<256x128xf32>
    %58 = arith.truncf %57 : vector<256x128xf32> to vector<256x128xbf16>
    %59 = vector.extract_strided_slice %6 {offsets = [1024, 0], sizes = [128, 128], strides = [1, 1]} : vector<1152x128xbf16> to vector<128x128xbf16>
    %cst_22 = arith.constant dense<0.000000e+00> : vector<256x128xf32>
    %60 = tpu.matmul %58, %59, %cst_22 {dimension_numbers = #tpu.dot_dimension_numbers<[1], [0], [0], [1], [0, 0, 1, 1], [], []>} : vector<256x128xbf16>, vector<128x128xbf16>, vector<256x128xf32> -> vector<256x128xf32>
    %61 = arith.addf %55, %60 : vector<256x128xf32>
    %c0_23 = arith.constant 0 : index
    %c0_24 = arith.constant 0 : index
    %62 = vector.load %arg3[%c0_23, %c0_24] : memref<1x128xf32, #tpu.memory_space<vmem>>, vector<1x128xf32>
    %63 = vector.broadcast %62 : vector<1x128xf32> to vector<256x128xf32>
    %64 = arith.addf %61, %63 : vector<256x128xf32>
    %cst_25 = arith.constant dense<0.000000e+00> : vector<128xf32>
    %65 = vector.multi_reduction <add>, %64, %cst_25 [0] : vector<256x128xf32> to vector<128xf32>
    %66 = vector.shape_cast %65 : vector<128xf32> to vector<1x1x128xf32>
    %c0_26 = arith.constant 0 : index
    %c0_27 = arith.constant 0 : index
    %c0_28 = arith.constant 0 : index
    %67 = vector.load %arg5[%c0_26, %c0_27, %c0_28] : memref<1x1x128xf32, #tpu.memory_space<vmem>>, vector<1x1x128xf32>
    tpu.vector_store %arg5[%c0_26, %c0_27, %c0_28], %66 {strides = array<i32>} : memref<1x1x128xf32, #tpu.memory_space<vmem>>, vector<1x1x128xf32>,
    %68 = arith.mulf %64, %64 : vector<256x128xf32>
    %cst_29 = arith.constant dense<0.000000e+00> : vector<128xf32>
    %69 = vector.multi_reduction <add>, %68, %cst_29 [0] : vector<256x128xf32> to vector<128xf32>
    %70 = vector.shape_cast %69 : vector<128xf32> to vector<1x1x128xf32>
    %c0_30 = arith.constant 0 : index
    %c0_31 = arith.constant 0 : index
    %c0_32 = arith.constant 0 : index
    %71 = vector.load %arg6[%c0_30, %c0_31, %c0_32] : memref<1x1x128xf32, #tpu.memory_space<vmem>>, vector<1x1x128xf32>
    tpu.vector_store %arg6[%c0_30, %c0_31, %c0_32], %70 {strides = array<i32>} : memref<1x1x128xf32, #tpu.memory_space<vmem>>, vector<1x1x128xf32>,
    %72 = vector.shape_cast %64 : vector<256x128xf32> to vector<1x16x16x128xf32>
    %c0_33 = arith.constant 0 : index
    %c0_34 = arith.constant 0 : index
    %c0_35 = arith.constant 0 : index
    %c0_36 = arith.constant 0 : index
    %73 = vector.load %arg4[%c0_33, %c0_34, %c0_35, %c0_36] : memref<1x16x16x128xf32, #tpu.memory_space<vmem>>, vector<1x16x16x128xf32>
    tpu.vector_store %arg4[%c0_33, %c0_34, %c0_35, %c0_36], %72 {strides = array<i32>} : memref<1x16x16x128xf32, #tpu.memory_space<vmem>>, vector<1x16x16x128xf32>,
    return
  }
  func.func @transform_0(%arg0: i32) -> (i32, i32, i32, i32) {
    %c0_i32 = arith.constant 0 : i32
    %c0_i32_0 = arith.constant 0 : i32
    %c0_i32_1 = arith.constant 0 : i32
    %c0_i32_2 = arith.constant 0 : i32
    return %arg0, %c0_i32, %c0_i32_0, %c0_i32_1 : i32, i32, i32, i32
  }
  func.func @transform_1(%arg0: i32) -> (i32, i32) {
    %c0_i32 = arith.constant 0 : i32
    %c0_i32_0 = arith.constant 0 : i32
    %c0_i32_1 = arith.constant 0 : i32
    return %c0_i32, %c0_i32_0 : i32, i32
  }
  func.func @transform_2(%arg0: i32) -> (i32, i32) {
    %c0_i32 = arith.constant 0 : i32
    %c0_i32_0 = arith.constant 0 : i32
    %c0_i32_1 = arith.constant 0 : i32
    return %c0_i32, %c0_i32_0 : i32, i32
  }
  func.func @transform_3(%arg0: i32) -> (i32, i32, i32, i32) {
    %c0_i32 = arith.constant 0 : i32
    %c0_i32_0 = arith.constant 0 : i32
    %c0_i32_1 = arith.constant 0 : i32
    %c0_i32_2 = arith.constant 0 : i32
    return %arg0, %c0_i32, %c0_i32_0, %c0_i32_1 : i32, i32, i32, i32
  }
  func.func @transform_4(%arg0: i32) -> (i32, i32, i32) {
    %c0_i32 = arith.constant 0 : i32
    %c0_i32_0 = arith.constant 0 : i32
    %c0_i32_1 = arith.constant 0 : i32
    return %arg0, %c0_i32, %c0_i32_0 : i32, i32, i32
  }
  func.func @transform_5(%arg0: i32) -> (i32, i32, i32) {
    %c0_i32 = arith.constant 0 : i32
    %c0_i32_0 = arith.constant 0 : i32
    %c0_i32_1 = arith.constant 0 : i32
    return %arg0, %c0_i32, %c0_i32_0 : i32, i32, i32
  }
}

</mosaic_0001>

<llo_original>
// kernel: tpu_custom_call.1
$region0: #{tpu_custom_call.1}
  #allocation0 [shape = 'u32[]', space=smem, size = 0x4, offset = 0x4, fixed_abs, tag = 'smem constant byte address 0x4 - core index']
  #allocation1 [shape = 'u32[144,128]{1,0:T(1,128)}', space=vmem, size = 0x12000, scoped, tag = 'internal scratch']
  #allocation2 [shape = 'f32[18,18,128]{2,1,0:T(8,128)}', space=vmem, size = 0x36000, scoped, tag = 'scratch operand']
  %s0 = inlined_call_operand.hbm [shape: f32[2,16,16,128], index: 0, kind: input, shape index: {}]
  %s1 = inlined_call_operand.hbm [shape: bf16[1152,128], index: 1, kind: input, shape index: {}]
  %s2 = inlined_call_operand.vmem [shape: f32[1,128], index: 2, kind: input, shape index: {}]
  %s3 = inlined_call_operand.hbm [shape: f32[2,16,16,128], index: 3, kind: output, shape index: {0}]
  %s4 = inlined_call_operand.hbm [shape: f32[2,1,128], index: 4, kind: output, shape index: {1}]
  %s5 = inlined_call_operand.hbm [shape: f32[2,1,128], index: 5, kind: output, shape index: {2}]
  %6 = xla_tuple %s3, %s4, %s5
  %s7 = sld [smem:[#allocation0]]
  $region69: #{tpu_custom_call.1} parent=0
    _
  %s9 = ssub.s32 1, %s7
  %s10 = scalar_select 0, %s9, %s7
  $region1: #{tpu_custom_call.1} parent=0
    #allocation3 [shape = 'u8[262144]{0}', space=vmem, size = 0x40000, scoped, tag = 'input window, operand 0']
    #allocation4 [shape = 's32[2]{0}', space=sflag, size = 0x8, scoped, tag = 'scoped memory for tpu_custom_call.1']
    #allocation5 [shape = 's32[2]{0}', space=sflag, size = 0x8, scoped, tag = 'scoped memory for tpu_custom_call.1']
    #allocation6 [shape = 'u8[294912]{0}', space=vmem, size = 0x48000, scoped, tag = 'input window, operand 1, single buffered']
    #allocation7 [shape = 's32[1]{0}', space=sflag, size = 0x4, scoped, tag = 'scoped memory for tpu_custom_call.1']
    #allocation8 [shape = 'u8[262144]{0}', space=vmem, size = 0x40000, scoped, tag = 'output window, operand 0']
    #allocation9 [shape = 'u8[1024]{0}', space=vmem, size = 0x400, scoped, tag = 'output window, operand 1']
    #allocation10 [shape = 's32[2]{0}', space=sflag, size = 0x8, scoped, tag = 'scoped memory for tpu_custom_call.1']
    #allocation11 [shape = 'u8[1024]{0}', space=vmem, size = 0x400, scoped, tag = 'output window, operand 2']
    %11 = vsyncpa [#allocation4], 0
    %s12 = scalar_lea.sflag [#allocation4], 1
    %13 = vsyncpa %s12, 0
    %14 = vsyncpa [#allocation7], 0
    %15 = vsyncpa [#allocation5], 0
    %s16 = scalar_lea.sflag [#allocation5], 1
    %17 = vsyncpa %s16, 0
    %18 = vsyncpa [#allocation10], 0
    %s19 = scalar_lea.sflag [#allocation10], 1
    %20 = vsyncpa %s19, 0
    loop: start=0, step=1, limit=4
    $region2: #{tpu_custom_call.1} parent=1 // loop_pre_header
      _
    $region3: #{tpu_custom_call.1} parent=1 // loop_header
      %s22 = sphi 0, %s26
      %p23 = scmp.ge.s32.totalorder %s22, 4
      %s32 = sphi 0, %s34
      %s35 = sphi 0, %s32
      %s36 = sphi 0, %s35
      %s52 = sphi 0, %s36
      %s56 = sphi 0, %s56
      %s58 = sphi 0, %s56
      %s59 = sphi 0, %s58
      %s73 = sphi 0, %s59
      %s77 = sphi 0, %s77
      %s79 = sphi 0, %s77
      %s80 = sphi 0, %s79
      %s94 = sphi 0, %s80
      %s100 = sphi 0, %s102
      %s103 = sphi 0, %s100
      %s104 = sphi 0, %s103
      %s120 = sphi 0, %s104
      %s126 = sphi 0, %s128
      %s129 = sphi 0, %s126
      %s130 = sphi 0, %s129
      %s146 = sphi 0, %s130
      %s152 = sphi 0, %s154
      %s155 = sphi 0, %s152
      %s156 = sphi 0, %s155
      %s172 = sphi 0, %s156
    $region4: #{tpu_custom_call.1} parent=1 // loop_header_branch
      %25 = sbr.rel (%p23) target = $region8
    $region5: #{tpu_custom_call.1} parent=1 // loop_body
      %s27 = ssub.s32 %s22, 1
      %s28 = ssub.s32 %s22, 2
      %s29 = sadd.s32 %s22, 1
      %s30 = ssub.s32 %s22, %s29
      %p31 = scmp.eq.s32.totalorder %s30, 0
      %s33 = sadd.s32 %s32, 1
      %s34 = scalar_select %p31, %s32, %s33
      %p37 = pneg %p31
      %p38 = scmp.eq.s32.totalorder %s22, 1
      %p39 = por %p37, %p38
      %p40 = scmp.ne.s32.totalorder %s32, %s35
      %p41 = scmp.eq.s32.totalorder %s22, 0
      %p42 = por %p40, %p41
      %p43 = scmp.ne.s32.totalorder %s32, %s35
      %p44 = scmp.eq.s32.totalorder %s27, 1
      %p45 = por %p43, %p44
      %p46 = scmp.ne.s32.totalorder %s35, %s36
      %p47 = scmp.eq.s32.totalorder %s27, 0
      %p48 = por %p46, %p47
      %p49 = scmp.ne.s32.totalorder %s35, %s36
      %p50 = scmp.eq.s32.totalorder %s28, 1
      %p51 = por %p49, %p50
      %p53 = scmp.ne.s32.totalorder %s36, %s52
      %p54 = scmp.eq.s32.totalorder %s28, 0
      %p55 = por %p53, %p54
      %s57 = sadd.s32 %s56, 1
      %p60 = scmp.eq.s32.totalorder %s22, 1
      %p61 = scmp.ne.s32.totalorder %s56, %s58
      %p62 = scmp.eq.s32.totalorder %s22, 0
      %p63 = por %p61, %p62
      %p64 = scmp.ne.s32.totalorder %s56, %s58
      %p65 = scmp.eq.s32.totalorder %s27, 1
      %p66 = por %p64, %p65
      %p67 = scmp.ne.s32.totalorder %s58, %s59
      %p68 = scmp.eq.s32.totalorder %s27, 0
      %p69 = por %p67, %p68
      %p70 = scmp.ne.s32.totalorder %s58, %s59
      %p71 = scmp.eq.s32.totalorder %s28, 1
      %p72 = por %p70, %p71
      %p74 = scmp.ne.s32.totalorder %s59, %s73
      %p75 = scmp.eq.s32.totalorder %s28, 0
      %p76 = por %p74, %p75
      %s78 = sadd.s32 %s77, 1
      %p81 = scmp.eq.s32.totalorder %s22, 1
      %p82 = scmp.ne.s32.totalorder %s77, %s79
      %p83 = scmp.eq.s32.totalorder %s22, 0
      %p84 = por %p82, %p83
      %p85 = scmp.ne.s32.totalorder %s77, %s79
      %p86 = scmp.eq.s32.totalorder %s27, 1
      %p87 = por %p85, %p86
      %p88 = scmp.ne.s32.totalorder %s79, %s80
      %p89 = scmp.eq.s32.totalorder %s27, 0
      %p90 = por %p88, %p89
      %p91 = scmp.ne.s32.totalorder %s79, %s80
      %p92 = scmp.eq.s32.totalorder %s28, 1
      %p93 = por %p91, %p92
      %p95 = scmp.ne.s32.totalorder %s80, %s94
      %p96 = scmp.eq.s32.totalorder %s28, 0
      %p97 = por %p95, %p96
      %s98 = ssub.s32 %s22, %s29
      %p99 = scmp.eq.s32.totalorder %s98, 0
      %s101 = sadd.s32 %s100, 1
      %s102 = scalar_select %p99, %s100, %s101
      %p105 = pneg %p99
      %p106 = scmp.eq.s32.totalorder %s22, 1
      %p107 = por %p105, %p106
      %p108 = scmp.ne.s32.totalorder %s100, %s103
      %p109 = scmp.eq.s32.totalorder %s22, 0
      %p110 = por %p108, %p109
      %p111 = scmp.ne.s32.totalorder %s100, %s103
      %p112 = scmp.eq.s32.totalorder %s27, 1
      %p113 = por %p111, %p112
      %p114 = scmp.ne.s32.totalorder %s103, %s104
      %p115 = scmp.eq.s32.totalorder %s27, 0
      %p116 = por %p114, %p115
      %p117 = scmp.ne.s32.totalorder %s103, %s104
      %p118 = scmp.eq.s32.totalorder %s28, 1
      %p119 = por %p117, %p118
      %p121 = scmp.ne.s32.totalorder %s104, %s120
      %p122 = scmp.eq.s32.totalorder %s28, 0
      %p123 = por %p121, %p122
      %s124 = ssub.s32 %s22, %s29
      %p125 = scmp.eq.s32.totalorder %s124, 0
      %s127 = sadd.s32 %s126, 1
      %s128 = scalar_select %p125, %s126, %s127
      %p131 = pneg %p125
      %p132 = scmp.eq.s32.totalorder %s22, 1
      %p133 = por %p131, %p132
      %p134 = scmp.ne.s32.totalorder %s126, %s129
      %p135 = scmp.eq.s32.totalorder %s22, 0
      %p136 = por %p134, %p135
      %p137 = scmp.ne.s32.totalorder %s126, %s129
      %p138 = scmp.eq.s32.totalorder %s27, 1
      %p139 = por %p137, %p138
      %p140 = scmp.ne.s32.totalorder %s129, %s130
      %p141 = scmp.eq.s32.totalorder %s27, 0
      %p142 = por %p140, %p141
      %p143 = scmp.ne.s32.totalorder %s129, %s130
      %p144 = scmp.eq.s32.totalorder %s28, 1
      %p145 = por %p143, %p144
      %p147 = scmp.ne.s32.totalorder %s130, %s146
      %p148 = scmp.eq.s32.totalorder %s28, 0
      %p149 = por %p147, %p148
      %s150 = ssub.s32 %s22, %s29
      %p151 = scmp.eq.s32.totalorder %s150, 0
      %s153 = sadd.s32 %s152, 1
      %s154 = scalar_select %p151, %s152, %s153
      %p157 = pneg %p151
      %p158 = scmp.eq.s32.totalorder %s22, 1
      %p159 = por %p157, %p158
      %p160 = scmp.ne.s32.totalorder %s152, %s155
      %p161 = scmp.eq.s32.totalorder %s22, 0
      %p162 = por %p160, %p161
      %p163 = scmp.ne.s32.totalorder %s152, %s155
      %p164 = scmp.eq.s32.totalorder %s27, 1
      %p165 = por %p163, %p164
      %p166 = scmp.ne.s32.totalorder %s155, %s156
      %p167 = scmp.eq.s32.totalorder %s27, 0
      %p168 = por %p166, %p167
      %p169 = scmp.ne.s32.totalorder %s155, %s156
      %p170 = scmp.eq.s32.totalorder %s28, 1
      %p171 = por %p169, %p170
      %p173 = scmp.ne.s32.totalorder %s156, %s172
      %p174 = scmp.eq.s32.totalorder %s28, 0
      %p175 = por %p173, %p174
      %p176 = scmp.le.s32.totalorder 1, %s22
      %p177 = scmp.lt.s32.totalorder %s22, 3
      %p178 = pnand %p176, %p177
      %p179 = pneg %p178
      // Predicated region
      $region9: #{tpu_custom_call.1} parent=5 // pred_check
        _
      $region10: #{tpu_custom_call.1} parent=5 // pred_check_branch
        %181 = sbr.rel (%p178) target = $region12
      $region11: #{tpu_custom_call.1} parent=5 // pred_region
        %s182 = ssub.s32 %s22, 1
        // Predicated region
        $region13: #{tpu_custom_call.1} parent=11 // pred_check
          %p183 = pneg %p69
        $region14: #{tpu_custom_call.1} parent=11 // pred_check_branch
          %185 = sbr.rel (%p183) target = $region16
        $region15: #{tpu_custom_call.1} parent=11 // pred_region
          %s187 = ssub.s32 9216, 9216
          %188 = vsyncadd [#allocation7], %s187
          %s189 = sshll.u32 [#allocation6], 4
          %s190 = int_to_ptr.vmem [resolvable:$true] %s189
          %195 = dma.hbm_to_vmem [thread:$0]  %s1, 9216, %s190, [#allocation7], 64, 64, 4
        $region16: #{tpu_custom_call.1} parent=11 // pred_fallthru
          _
        // Predicated region
        $region17: #{tpu_custom_call.1} parent=11 // pred_check
          %p196 = pneg %p90
        $region18: #{tpu_custom_call.1} parent=11 // pred_check_branch
          %198 = sbr.rel (%p196) target = $region20
        $region19: #{tpu_custom_call.1} parent=11 // pred_region
          _
        $region20: #{tpu_custom_call.1} parent=11 // pred_fallthru
          _
      $region12: #{tpu_custom_call.1} parent=5 // pred_fallthru
        _
      %p199 = scmp.lt.s32.totalorder %s22, 2
      // Predicated region
      $region21: #{tpu_custom_call.1} parent=5 // pred_check
        %p200 = pneg %p199
      $region22: #{tpu_custom_call.1} parent=5 // pred_check_branch
        %202 = sbr.rel (%p200) target = $region24
      $region23: #{tpu_custom_call.1} parent=5 // pred_region
        // Predicated region
        $region25: #{tpu_custom_call.1} parent=23 // pred_check
          %p203 = pneg %p42
        $region26: #{tpu_custom_call.1} parent=23 // pred_check_branch
          %205 = sbr.rel (%p203) target = $region28
        $region27: #{tpu_custom_call.1} parent=23 // pred_region
          %s206 = sand.u32 %s32, 1
          %s207 = scalar_lea.sflag [#allocation4], %s206
          %s208 = sand.u32 %s32, 1
          %s209 = smul.addr %s208, 256
          %s210 = scalar_lea.vmem [#allocation3], %s209
          %s212 = ssub.s32 4096, 4096
          %213 = vsyncadd %s207, %s212
          %s214 = smul.addr %s22, 32
          %s215 = smul.addr %s214, 128
          %s216 = scalar_lea.hbm %s0, %s215
          %s217 = sshll.u32 %s210, 4
          %s218 = int_to_ptr.vmem [resolvable:$true] %s217
          %223 = dma.hbm_to_vmem [thread:$0]  %s216, 4096, %s218, %s207, 128, 128, 8
        $region28: #{tpu_custom_call.1} parent=23 // pred_fallthru
          _
      $region24: #{tpu_custom_call.1} parent=5 // pred_fallthru
        _
      %p224 = scmp.le.s32.totalorder 1, %s22
      %p225 = scmp.lt.s32.totalorder %s22, 3
      %p226 = pnand %p224, %p225
      %p227 = pneg %p226
      // Predicated region
      $region29: #{tpu_custom_call.1} parent=5 // pred_check
        _
      $region30: #{tpu_custom_call.1} parent=5 // pred_check_branch
        %229 = sbr.rel (%p226) target = $region32
      $region31: #{tpu_custom_call.1} parent=5 // pred_region
        %s230 = ssub.s32 %s22, 1
        %s231 = sand.u32 %s35, 1
        %s232 = scalar_lea.sflag [#allocation4], %s231
        %s233 = sand.u32 %s35, 1
        %s234 = smul.addr %s233, 256
        %s235 = scalar_lea.vmem [#allocation3], %s234
        // Predicated region
        $region33: #{tpu_custom_call.1} parent=31 // pred_check
          %p236 = pneg %p48
        $region34: #{tpu_custom_call.1} parent=31 // pred_check_branch
          %238 = sbr.rel (%p236) target = $region36
        $region35: #{tpu_custom_call.1} parent=31 // pred_region
          %239 = dma.done %s232, 4096
        $region36: #{tpu_custom_call.1} parent=31 // pred_fallthru
          _
        // Predicated region
        $region37: #{tpu_custom_call.1} parent=31 // pred_check
          %p240 = pneg %p69
        $region38: #{tpu_custom_call.1} parent=31 // pred_check_branch
          %242 = sbr.rel (%p240) target = $region40
        $region39: #{tpu_custom_call.1} parent=31 // pred_region
          %243 = dma.done [#allocation7], 9216
        $region40: #{tpu_custom_call.1} parent=31 // pred_fallthru
          _
        %s244 = sand.u32 %s35, 1
        %s245 = scalar_lea.sflag [#allocation4], %s244
        %s246 = sand.u32 %s35, 1
        %s247 = smul.addr %s246, 256
        %s248 = scalar_lea.vmem [#allocation3], %s247
        %p249 = pneg %p48
        %p250 = pneg %p45
        %p251 = pneg %p69
        %p252 = pneg %p66
        %p253 = pneg %p90
        %p254 = pneg %p87
        %p255 = pneg %p116
        %p256 = pneg %p113
        %s257 = sand.u32 %s103, 1
        %s258 = scalar_lea.sflag [#allocation5], %s257
        %s259 = sand.u32 %s103, 1
        %s260 = smul.addr %s259, 256
        %s261 = scalar_lea.vmem [#allocation8], %s260
        %p262 = pneg %p142
        %p263 = pneg %p139
        %s264 = sand.u32 %s27, 1
        %s265 = scalar_lea.sflag [#allocation10], %s264
        %s266 = sand.u32 %s129, 1
        %s267 = scalar_lea.vmem [#allocation9], %s266
        %p268 = pneg %p168
        %p269 = pneg %p165
        %s270 = sand.u32 %s27, 1
        %s271 = scalar_lea.sflag [#allocation10], %s270
        %s272 = sand.u32 %s155, 1
        %s273 = scalar_lea.vmem [#allocation11], %s272
        %v275 = vld [vmem:[%s235] sm:$0xff]
        %v276 = vld [vmem:[%s235 + $0x8] sm:$0xff]
        %v277 = vld [vmem:[%s235 + $0x10] sm:$0xff]
        %v278 = vld [vmem:[%s235 + $0x18] sm:$0xff]
        %v279 = vld [vmem:[%s235 + $0x20] sm:$0xff]
        %v280 = vld [vmem:[%s235 + $0x28] sm:$0xff]
        %v281 = vld [vmem:[%s235 + $0x30] sm:$0xff]
        %v282 = vld [vmem:[%s235 + $0x38] sm:$0xff]
        %v283 = vld [vmem:[%s235 + $0x40] sm:$0xff]
        %v284 = vld [vmem:[%s235 + $0x48] sm:$0xff]
        %v285 = vld [vmem:[%s235 + $0x50] sm:$0xff]
        %v286 = vld [vmem:[%s235 + $0x58] sm:$0xff]
        %v287 = vld [vmem:[%s235 + $0x60] sm:$0xff]
        %v288 = vld [vmem:[%s235 + $0x68] sm:$0xff]
        %v289 = vld [vmem:[%s235 + $0x70] sm:$0xff]
        %v290 = vld [vmem:[%s235 + $0x78] sm:$0xff]
        %v291 = vld [vmem:[%s235 + $0x80] sm:$0xff]
        %v292 = vld [vmem:[%s235 + $0x88] sm:$0xff]
        %v293 = vld [vmem:[%s235 + $0x90] sm:$0xff]
        %v294 = vld [vmem:[%s235 + $0x98] sm:$0xff]
        %v295 = vld [vmem:[%s235 + $0xa0] sm:$0xff]
        %v296 = vld [vmem:[%s235 + $0xa8] sm:$0xff]
        %v297 = vld [vmem:[%s235 + $0xb0] sm:$0xff]
        %v298 = vld [vmem:[%s235 + $0xb8] sm:$0xff]
        %v299 = vld [vmem:[%s235 + $0xc0] sm:$0xff]
        %v300 = vld [vmem:[%s235 + $0xc8] sm:$0xff]
        %v301 = vld [vmem:[%s235 + $0xd0] sm:$0xff]
        %v302 = vld [vmem:[%s235 + $0xd8] sm:$0xff]
        %v303 = vld [vmem:[%s235 + $0xe0] sm:$0xff]
        %v304 = vld [vmem:[%s235 + $0xe8] sm:$0xff]
        %v305 = vld [vmem:[%s235 + $0xf0] sm:$0xff]
        %v306 = vld [vmem:[%s235 + $0xf8] sm:$0xff]
        %307 = vst [vmem:[#allocation2] sm:$0xff] 0.0
        %308 = vst [vmem:[#allocation2 + $0x8] sm:$0xff] 0.0
        %309 = vst [vmem:[#allocation2 + $0x10] sm:$0x3] 0.0
        %310 = vst [vmem:[#allocation2 + $0x18] sm:$0xff] 0.0
        %311 = vst [vmem:[#allocation2 + $0x20] sm:$0xff] 0.0
        %312 = vst [vmem:[#allocation2 + $0x28] sm:$0x3] 0.0
        %313 = vst [vmem:[#allocation2 + $0x30] sm:$0xff] 0.0
        %314 = vst [vmem:[#allocation2 + $0x38] sm:$0xff] 0.0
        %315 = vst [vmem:[#allocation2 + $0x40] sm:$0x3] 0.0
        %316 = vst [vmem:[#allocation2 + $0x48] sm:$0xff] 0.0
        %317 = vst [vmem:[#allocation2 + $0x50] sm:$0xff] 0.0
        %318 = vst [vmem:[#allocation2 + $0x58] sm:$0x3] 0.0
        %319 = vst [vmem:[#allocation2 + $0x60] sm:$0xff] 0.0
        %320 = vst [vmem:[#allocation2 + $0x68] sm:$0xff] 0.0
        %321 = vst [vmem:[#allocation2 + $0x70] sm:$0x3] 0.0
        %322 = vst [vmem:[#allocation2 + $0x78] sm:$0xff] 0.0
        %323 = vst [vmem:[#allocation2 + $0x80] sm:$0xff] 0.0
        %324 = vst [vmem:[#allocation2 + $0x88] sm:$0x3] 0.0
        %325 = vst [vmem:[#allocation2 + $0x90] sm:$0xff] 0.0
        %326 = vst [vmem:[#allocation2 + $0x98] sm:$0xff] 0.0
        %327 = vst [vmem:[#allocation2 + $0xa0] sm:$0x3] 0.0
        %328 = vst [vmem:[#allocation2 + $0xa8] sm:$0xff] 0.0
        %329 = vst [vmem:[#allocation2 + $0xb0] sm:$0xff] 0.0
        %330 = vst [vmem:[#allocation2 + $0xb8] sm:$0x3] 0.0
        %331 = vst [vmem:[#allocation2 + $0xc0] sm:$0xff] 0.0
        %332 = vst [vmem:[#allocation2 + $0xc8] sm:$0xff] 0.0
        %333 = vst [vmem:[#allocation2 + $0xd0] sm:$0x3] 0.0
        %334 = vst [vmem:[#allocation2 + $0xd8] sm:$0xff] 0.0
        %335 = vst [vmem:[#allocation2 + $0xe0] sm:$0xff] 0.0
        %336 = vst [vmem:[#allocation2 + $0xe8] sm:$0x3] 0.0
        %337 = vst [vmem:[#allocation2 + $0xf0] sm:$0xff] 0.0
        %338 = vst [vmem:[#allocation2 + $0xf8] sm:$0xff] 0.0
        %339 = vst [vmem:[#allocation2 + $0x100] sm:$0x3] 0.0
        %340 = vst [vmem:[#allocation2 + $0x108] sm:$0xff] 0.0
        %341 = vst [vmem:[#allocation2 + $0x110] sm:$0xff] 0.0
        %342 = vst [vmem:[#allocation2 + $0x118] sm:$0x3] 0.0
        %343 = vst [vmem:[#allocation2 + $0x120] sm:$0xff] 0.0
        %344 = vst [vmem:[#allocation2 + $0x128] sm:$0xff] 0.0
        %345 = vst [vmem:[#allocation2 + $0x130] sm:$0x3] 0.0
        %346 = vst [vmem:[#allocation2 + $0x138] sm:$0xff] 0.0
        %347 = vst [vmem:[#allocation2 + $0x140] sm:$0xff] 0.0
        %348 = vst [vmem:[#allocation2 + $0x148] sm:$0x3] 0.0
        %349 = vst [vmem:[#allocation2 + $0x150] sm:$0xff] 0.0
        %350 = vst [vmem:[#allocation2 + $0x158] sm:$0xff] 0.0
        %351 = vst [vmem:[#allocation2 + $0x160] sm:$0x3] 0.0
        %352 = vst [vmem:[#allocation2 + $0x168] sm:$0xff] 0.0
        %353 = vst [vmem:[#allocation2 + $0x170] sm:$0xff] 0.0
        %354 = vst [vmem:[#allocation2 + $0x178] sm:$0x3] 0.0
        %355 = vst [vmem:[#allocation2 + $0x180] sm:$0xff] 0.0
        %356 = vst [vmem:[#allocation2 + $0x188] sm:$0xff] 0.0
        %357 = vst [vmem:[#allocation2 + $0x190] sm:$0x3] 0.0
        %358 = vst [vmem:[#allocation2 + $0x198] sm:$0xff] 0.0
        %359 = vst [vmem:[#allocation2 + $0x1a0] sm:$0xff] 0.0
        %360 = vst [vmem:[#allocation2 + $0x1a8] sm:$0x3] 0.0
        %s361 = scalar_lea.vmem [#allocation2], 24
        %362 = vst [vmem:[%s361 + $0x1] sm:$0xff] %v275
        %363 = vst [vmem:[%s361 + $0x9] sm:$0xff] %v276
        %364 = vst [vmem:[%s361 + $0x19] sm:$0xff] %v277
        %365 = vst [vmem:[%s361 + $0x21] sm:$0xff] %v278
        %366 = vst [vmem:[%s361 + $0x31] sm:$0xff] %v279
        %367 = vst [vmem:[%s361 + $0x39] sm:$0xff] %v280
        %368 = vst [vmem:[%s361 + $0x49] sm:$0xff] %v281
        %369 = vst [vmem:[%s361 + $0x51] sm:$0xff] %v282
        %370 = vst [vmem:[%s361 + $0x61] sm:$0xff] %v283
        %371 = vst [vmem:[%s361 + $0x69] sm:$0xff] %v284
        %372 = vst [vmem:[%s361 + $0x79] sm:$0xff] %v285
        %373 = vst [vmem:[%s361 + $0x81] sm:$0xff] %v286
        %374 = vst [vmem:[%s361 + $0x91] sm:$0xff] %v287
        %375 = vst [vmem:[%s361 + $0x99] sm:$0xff] %v288
        %376 = vst [vmem:[%s361 + $0xa9] sm:$0xff] %v289
        %377 = vst [vmem:[%s361 + $0xb1] sm:$0xff] %v290
        %378 = vst [vmem:[%s361 + $0xc1] sm:$0xff] %v291
        %379 = vst [vmem:[%s361 + $0xc9] sm:$0xff] %v292
        %380 = vst [vmem:[%s361 + $0xd9] sm:$0xff] %v293
        %381 = vst [vmem:[%s361 + $0xe1] sm:$0xff] %v294
        %382 = vst [vmem:[%s361 + $0xf1] sm:$0xff] %v295
        %383 = vst [vmem:[%s361 + $0xf9] sm:$0xff] %v296
        %384 = vst [vmem:[%s361 + $0x109] sm:$0xff] %v297
        %385 = vst [vmem:[%s361 + $0x111] sm:$0xff] %v298
        %386 = vst [vmem:[%s361 + $0x121] sm:$0xff] %v299
        %387 = vst [vmem:[%s361 + $0x129] sm:$0xff] %v300
        %388 = vst [vmem:[%s361 + $0x139] sm:$0xff] %v301
        %389 = vst [vmem:[%s361 + $0x141] sm:$0xff] %v302
        %390 = vst [vmem:[%s361 + $0x151] sm:$0xff] %v303
        %391 = vst [vmem:[%s361 + $0x159] sm:$0xff] %v304
        %392 = vst [vmem:[%s361 + $0x169] sm:$0xff] %v305
        %393 = vst [vmem:[%s361 + $0x171] sm:$0xff] %v306
        %v394 = vld [vmem:[#allocation2] sm:$0xff]
        %v395 = vld [vmem:[#allocation2 + $0x8] sm:$0xff]
        %v396 = vld [vmem:[#allocation2 + $0x10] sm:$0x3]
        %v397 = vld [vmem:[#allocation2 + $0x18] sm:$0xff]
        %v398 = vld [vmem:[#allocation2 + $0x20] sm:$0xff]
        %v399 = vld [vmem:[#allocation2 + $0x28] sm:$0x3]
        %v400 = vld [vmem:[#allocation2 + $0x30] sm:$0xff]
        %v401 = vld [vmem:[#allocation2 + $0x38] sm:$0xff]
        %v402 = vld [vmem:[#allocation2 + $0x40] sm:$0x3]
        %v403 = vld [vmem:[#allocation2 + $0x48] sm:$0xff]
        %v404 = vld [vmem:[#allocation2 + $0x50] sm:$0xff]
        %v405 = vld [vmem:[#allocation2 + $0x58] sm:$0x3]
        %v406 = vld [vmem:[#allocation2 + $0x60] sm:$0xff]
        %v407 = vld [vmem:[#allocation2 + $0x68] sm:$0xff]
        %v408 = vld [vmem:[#allocation2 + $0x70] sm:$0x3]
        %v409 = vld [vmem:[#allocation2 + $0x78] sm:$0xff]
        %v410 = vld [vmem:[#allocation2 + $0x80] sm:$0xff]
        %v411 = vld [vmem:[#allocation2 + $0x88] sm:$0x3]
        %v412 = vld [vmem:[#allocation2 + $0x90] sm:$0xff]
        %v413 = vld [vmem:[#allocation2 + $0x98] sm:$0xff]
        %v414 = vld [vmem:[#allocation2 + $0xa0] sm:$0x3]
        %v415 = vld [vmem:[#allocation2 + $0xa8] sm:$0xff]
        %v416 = vld [vmem:[#allocation2 + $0xb0] sm:$0xff]
        %v417 = vld [vmem:[#allocation2 + $0xb8] sm:$0x3]
        %v418 = vld [vmem:[#allocation2 + $0xc0] sm:$0xff]
        %v419 = vld [vmem:[#allocation2 + $0xc8] sm:$0xff]
        %v420 = vld [vmem:[#allocation2 + $0xd0] sm:$0x3]
        %v421 = vld [vmem:[#allocation2 + $0xd8] sm:$0xff]
        %v422 = vld [vmem:[#allocation2 + $0xe0] sm:$0xff]
        %v423 = vld [vmem:[#allocation2 + $0xe8] sm:$0x3]
        %v424 = vld [vmem:[#allocation2 + $0xf0] sm:$0xff]
        %v425 = vld [vmem:[#allocation2 + $0xf8] sm:$0xff]
        %v426 = vld [vmem:[#allocation2 + $0x100] sm:$0x3]
        %v427 = vld [vmem:[#allocation2 + $0x108] sm:$0xff]
        %v428 = vld [vmem:[#allocation2 + $0x110] sm:$0xff]
        %v429 = vld [vmem:[#allocation2 + $0x118] sm:$0x3]
        %v430 = vld [vmem:[#allocation2 + $0x120] sm:$0xff]
        %v431 = vld [vmem:[#allocation2 + $0x128] sm:$0xff]
        %v432 = vld [vmem:[#allocation2 + $0x130] sm:$0x3]
        %v433 = vld [vmem:[#allocation2 + $0x138] sm:$0xff]
        %v434 = vld [vmem:[#allocation2 + $0x140] sm:$0xff]
        %v435 = vld [vmem:[#allocation2 + $0x148] sm:$0x3]
        %v436 = vld [vmem:[#allocation2 + $0x150] sm:$0xff]
        %v437 = vld [vmem:[#allocation2 + $0x158] sm:$0xff]
        %v438 = vld [vmem:[#allocation2 + $0x160] sm:$0x3]
        %v439 = vld [vmem:[#allocation2 + $0x168] sm:$0xff]
        %v440 = vld [vmem:[#allocation2 + $0x170] sm:$0xff]
        %v441 = vld [vmem:[#allocation2 + $0x178] sm:$0x3]
        %v442 = vld [vmem:[#allocation2 + $0x180] sm:$0xff]
        %v443 = vld [vmem:[#allocation2 + $0x188] sm:$0xff]
        %v444 = vld [vmem:[#allocation2 + $0x190] sm:$0x3]
        %v445 = vld [vmem:[#allocation2 + $0x198] sm:$0xff]
        %v446 = vld [vmem:[#allocation2 + $0x1a0] sm:$0xff]
        %v447 = vld [vmem:[#allocation2 + $0x1a8] sm:$0x3]
        %v448 = vld [vmem:[#allocation6] sm:$0xf]
        %v449 = vld [vmem:[#allocation6 + $0x4] sm:$0xf]
        %v450 = vld [vmem:[#allocation6 + $0x8] sm:$0xf]
        %v451 = vld [vmem:[#allocation6 + $0xc] sm:$0xf]
        %v452 = vld [vmem:[#allocation6 + $0x10] sm:$0xf]
        %v453 = vld [vmem:[#allocation6 + $0x14] sm:$0xf]
        %v454 = vld [vmem:[#allocation6 + $0x18] sm:$0xf]
        %v455 = vld [vmem:[#allocation6 + $0x1c] sm:$0xf]
        %v456 = vld [vmem:[#allocation6 + $0x20] sm:$0xf]
        %v457 = vld [vmem:[#allocation6 + $0x24] sm:$0xf]
        %v458 = vld [vmem:[#allocation6 + $0x28] sm:$0xf]
        %v459 = vld [vmem:[#allocation6 + $0x2c] sm:$0xf]
        %v460 = vld [vmem:[#allocation6 + $0x30] sm:$0xf]
        %v461 = vld [vmem:[#allocation6 + $0x34] sm:$0xf]
        %v462 = vld [vmem:[#allocation6 + $0x38] sm:$0xf]
        %v463 = vld [vmem:[#allocation6 + $0x3c] sm:$0xf]
        %v464 = vld [vmem:[#allocation6 + $0x40] sm:$0xf]
        %v465 = vld [vmem:[#allocation6 + $0x44] sm:$0xf]
        %v466 = vld [vmem:[#allocation6 + $0x48] sm:$0xf]
        %v467 = vld [vmem:[#allocation6 + $0x4c] sm:$0xf]
        %v468 = vld [vmem:[#allocation6 + $0x50] sm:$0xf]
        %v469 = vld [vmem:[#allocation6 + $0x54] sm:$0xf]
        %v470 = vld [vmem:[#allocation6 + $0x58] sm:$0xf]
        %v471 = vld [vmem:[#allocation6 + $0x5c] sm:$0xf]
        %v472 = vld [vmem:[#allocation6 + $0x60] sm:$0xf]
        %v473 = vld [vmem:[#allocation6 + $0x64] sm:$0xf]
        %v474 = vld [vmem:[#allocation6 + $0x68] sm:$0xf]
        %v475 = vld [vmem:[#allocation6 + $0x6c] sm:$0xf]
        %v476 = vld [vmem:[#allocation6 + $0x70] sm:$0xf]
        %v477 = vld [vmem:[#allocation6 + $0x74] sm:$0xf]
        %v478 = vld [vmem:[#allocation6 + $0x78] sm:$0xf]
        %v479 = vld [vmem:[#allocation6 + $0x7c] sm:$0xf]
        %v480 = vld [vmem:[#allocation6 + $0x80] sm:$0xf]
        %v481 = vld [vmem:[#allocation6 + $0x84] sm:$0xf]
        %v482 = vld [vmem:[#allocation6 + $0x88] sm:$0xf]
        %v483 = vld [vmem:[#allocation6 + $0x8c] sm:$0xf]
        %v484 = vld [vmem:[#allocation6 + $0x90] sm:$0xf]
        %v485 = vld [vmem:[#allocation6 + $0x94] sm:$0xf]
        %v486 = vld [vmem:[#allocation6 + $0x98] sm:$0xf]
        %v487 = vld [vmem:[#allocation6 + $0x9c] sm:$0xf]
        %v488 = vld [vmem:[#allocation6 + $0xa0] sm:$0xf]
        %v489 = vld [vmem:[#allocation6 + $0xa4] sm:$0xf]
        %v490 = vld [vmem:[#allocation6 + $0xa8] sm:$0xf]
        %v491 = vld [vmem:[#allocation6 + $0xac] sm:$0xf]
        %v492 = vld [vmem:[#allocation6 + $0xb0] sm:$0xf]
        %v493 = vld [vmem:[#allocation6 + $0xb4] sm:$0xf]
        %v494 = vld [vmem:[#allocation6 + $0xb8] sm:$0xf]
        %v495 = vld [vmem:[#allocation6 + $0xbc] sm:$0xf]
        %v496 = vld [vmem:[#allocation6 + $0xc0] sm:$0xf]
        %v497 = vld [vmem:[#allocation6 + $0xc4] sm:$0xf]
        %v498 = vld [vmem:[#allocation6 + $0xc8] sm:$0xf]
        %v499 = vld [vmem:[#allocation6 + $0xcc] sm:$0xf]
        %v500 = vld [vmem:[#allocation6 + $0xd0] sm:$0xf]
        %v501 = vld [vmem:[#allocation6 + $0xd4] sm:$0xf]
        %v502 = vld [vmem:[#allocation6 + $0xd8] sm:$0xf]
        %v503 = vld [vmem:[#allocation6 + $0xdc] sm:$0xf]
        %v504 = vld [vmem:[#allocation6 + $0xe0] sm:$0xf]
        %v505 = vld [vmem:[#allocation6 + $0xe4] sm:$0xf]
        %v506 = vld [vmem:[#allocation6 + $0xe8] sm:$0xf]
        %v507 = vld [vmem:[#allocation6 + $0xec] sm:$0xf]
        %v508 = vld [vmem:[#allocation6 + $0xf0] sm:$0xf]
        %v509 = vld [vmem:[#allocation6 + $0xf4] sm:$0xf]
        %v510 = vld [vmem:[#allocation6 + $0xf8] sm:$0xf]
        %v511 = vld [vmem:[#allocation6 + $0xfc] sm:$0xf]
        %v512 = vld [vmem:[#allocation6 + $0x100] sm:$0xf]
        %v513 = vld [vmem:[#allocation6 + $0x104] sm:$0xf]
        %v514 = vld [vmem:[#allocation6 + $0x108] sm:$0xf]
        %v515 = vld [vmem:[#allocation6 + $0x10c] sm:$0xf]
        %v516 = vld [vmem:[#allocation6 + $0x110] sm:$0xf]
        %v517 = vld [vmem:[#allocation6 + $0x114] sm:$0xf]
        %v518 = vld [vmem:[#allocation6 + $0x118] sm:$0xf]
        %v519 = vld [vmem:[#allocation6 + $0x11c] sm:$0xf]
        %v520 = vld [vmem:[#allocation6 + $0x120] sm:$0xf]
        %v521 = vld [vmem:[#allocation6 + $0x124] sm:$0xf]
        %v522 = vld [vmem:[#allocation6 + $0x128] sm:$0xf]
        %v523 = vld [vmem:[#allocation6 + $0x12c] sm:$0xf]
        %v524 = vld [vmem:[#allocation6 + $0x130] sm:$0xf]
        %v525 = vld [vmem:[#allocation6 + $0x134] sm:$0xf]
        %v526 = vld [vmem:[#allocation6 + $0x138] sm:$0xf]
        %v527 = vld [vmem:[#allocation6 + $0x13c] sm:$0xf]
        %v528 = vld [vmem:[#allocation6 + $0x140] sm:$0xf]
        %v529 = vld [vmem:[#allocation6 + $0x144] sm:$0xf]
        %v530 = vld [vmem:[#allocation6 + $0x148] sm:$0xf]
        %v531 = vld [vmem:[#allocation6 + $0x14c] sm:$0xf]
        %v532 = vld [vmem:[#allocation6 + $0x150] sm:$0xf]
        %v533 = vld [vmem:[#allocation6 + $0x154] sm:$0xf]
        %v534 = vld [vmem:[#allocation6 + $0x158] sm:$0xf]
        %v535 = vld [vmem:[#allocation6 + $0x15c] sm:$0xf]
        %v536 = vld [vmem:[#allocation6 + $0x160] sm:$0xf]
        %v537 = vld [vmem:[#allocation6 + $0x164] sm:$0xf]
        %v538 = vld [vmem:[#allocation6 + $0x168] sm:$0xf]
        %v539 = vld [vmem:[#allocation6 + $0x16c] sm:$0xf]
        %v540 = vld [vmem:[#allocation6 + $0x170] sm:$0xf]
        %v541 = vld [vmem:[#allocation6 + $0x174] sm:$0xf]
        %v542 = vld [vmem:[#allocation6 + $0x178] sm:$0xf]
        %v543 = vld [vmem:[#allocation6 + $0x17c] sm:$0xf]
        %v544 = vld [vmem:[#allocation6 + $0x180] sm:$0xf]
        %v545 = vld [vmem:[#allocation6 + $0x184] sm:$0xf]
        %v546 = vld [vmem:[#allocation6 + $0x188] sm:$0xf]
        %v547 = vld [vmem:[#allocation6 + $0x18c] sm:$0xf]
        %v548 = vld [vmem:[#allocation6 + $0x190] sm:$0xf]
        %v549 = vld [vmem:[#allocation6 + $0x194] sm:$0xf]
        %v550 = vld [vmem:[#allocation6 + $0x198] sm:$0xf]
        %v551 = vld [vmem:[#allocation6 + $0x19c] sm:$0xf]
        %v552 = vld [vmem:[#allocation6 + $0x1a0] sm:$0xf]
        %v553 = vld [vmem:[#allocation6 + $0x1a4] sm:$0xf]
        %v554 = vld [vmem:[#allocation6 + $0x1a8] sm:$0xf]
        %v555 = vld [vmem:[#allocation6 + $0x1ac] sm:$0xf]
        %v556 = vld [vmem:[#allocation6 + $0x1b0] sm:$0xf]
        %v557 = vld [vmem:[#allocation6 + $0x1b4] sm:$0xf]
        %v558 = vld [vmem:[#allocation6 + $0x1b8] sm:$0xf]
        %v559 = vld [vmem:[#allocation6 + $0x1bc] sm:$0xf]
        %v560 = vld [vmem:[#allocation6 + $0x1c0] sm:$0xf]
        %v561 = vld [vmem:[#allocation6 + $0x1c4] sm:$0xf]
        %v562 = vld [vmem:[#allocation6 + $0x1c8] sm:$0xf]
        %v563 = vld [vmem:[#allocation6 + $0x1cc] sm:$0xf]
        %v564 = vld [vmem:[#allocation6 + $0x1d0] sm:$0xf]
        %v565 = vld [vmem:[#allocation6 + $0x1d4] sm:$0xf]
        %v566 = vld [vmem:[#allocation6 + $0x1d8] sm:$0xf]
        %v567 = vld [vmem:[#allocation6 + $0x1dc] sm:$0xf]
        %v568 = vld [vmem:[#allocation6 + $0x1e0] sm:$0xf]
        %v569 = vld [vmem:[#allocation6 + $0x1e4] sm:$0xf]
        %v570 = vld [vmem:[#allocation6 + $0x1e8] sm:$0xf]
        %v571 = vld [vmem:[#allocation6 + $0x1ec] sm:$0xf]
        %v572 = vld [vmem:[#allocation6 + $0x1f0] sm:$0xf]
        %v573 = vld [vmem:[#allocation6 + $0x1f4] sm:$0xf]
        %v574 = vld [vmem:[#allocation6 + $0x1f8] sm:$0xf]
        %v575 = vld [vmem:[#allocation6 + $0x1fc] sm:$0xf]
        %v576 = vld [vmem:[#allocation6 + $0x200] sm:$0xf]
        %v577 = vld [vmem:[#allocation6 + $0x204] sm:$0xf]
        %v578 = vld [vmem:[#allocation6 + $0x208] sm:$0xf]
        %v579 = vld [vmem:[#allocation6 + $0x20c] sm:$0xf]
        %v580 = vld [vmem:[#allocation6 + $0x210] sm:$0xf]
        %v581 = vld [vmem:[#allocation6 + $0x214] sm:$0xf]
        %v582 = vld [vmem:[#allocation6 + $0x218] sm:$0xf]
        %v583 = vld [vmem:[#allocation6 + $0x21c] sm:$0xf]
        %v584 = vld [vmem:[#allocation6 + $0x220] sm:$0xf]
        %v585 = vld [vmem:[#allocation6 + $0x224] sm:$0xf]
        %v586 = vld [vmem:[#allocation6 + $0x228] sm:$0xf]
        %v587 = vld [vmem:[#allocation6 + $0x22c] sm:$0xf]
        %v588 = vld [vmem:[#allocation6 + $0x230] sm:$0xf]
        %v589 = vld [vmem:[#allocation6 + $0x234] sm:$0xf]
        %v590 = vld [vmem:[#allocation6 + $0x238] sm:$0xf]
        %v591 = vld [vmem:[#allocation6 + $0x23c] sm:$0xf]
        %v592 = vpack.c.bf16 %v395, %v394
        %v593 = vpack.c.bf16 %v398, %v397
        %v594 = vpack.c.bf16 %v401, %v400
        %v595 = vpack.c.bf16 %v404, %v403
        %v596 = vpack.c.bf16 %v407, %v406
        %v597 = vpack.c.bf16 %v410, %v409
        %v598 = vpack.c.bf16 %v413, %v412
        %v599 = vpack.c.bf16 %v416, %v415
        %v600 = vpack.c.bf16 %v419, %v418
        %v601 = vpack.c.bf16 %v422, %v421
        %v602 = vpack.c.bf16 %v425, %v424
        %v603 = vpack.c.bf16 %v428, %v427
        %v604 = vpack.c.bf16 %v431, %v430
        %v605 = vpack.c.bf16 %v434, %v433
        %v606 = vpack.c.bf16 %v437, %v436
        %v607 = vpack.c.bf16 %v440, %v439
        %vm656 = vcmask 1046528
        %v657 = vrot.slane %v394, 1
        %v658 = vrot.slane %v395, 1
        %v659 = vsel %vm656, %v657, %v658
        %v660 = vrot.slane %v396, 1
        %v661 = vsel %vm656, %v658, %v660
        %v662 = vrot.slane %v397, 1
        %v663 = vrot.slane %v398, 1
        %v664 = vsel %vm656, %v662, %v663
        %v665 = vrot.slane %v399, 1
        %v666 = vsel %vm656, %v663, %v665
        %v667 = vrot.slane %v400, 1
        %v668 = vrot.slane %v401, 1
        %v669 = vsel %vm656, %v667, %v668
        %v670 = vrot.slane %v402, 1
        %v671 = vsel %vm656, %v668, %v670
        %v672 = vrot.slane %v403, 1
        %v673 = vrot.slane %v404, 1
        %v674 = vsel %vm656, %v672, %v673
        %v675 = vrot.slane %v405, 1
        %v676 = vsel %vm656, %v673, %v675
        %v677 = vrot.slane %v406, 1
        %v678 = vrot.slane %v407, 1
        %v679 = vsel %vm656, %v677, %v678
        %v680 = vrot.slane %v408, 1
        %v681 = vsel %vm656, %v678, %v680
        %v682 = vrot.slane %v409, 1
        %v683 = vrot.slane %v410, 1
        %v684 = vsel %vm656, %v682, %v683
        %v685 = vrot.slane %v411, 1
        %v686 = vsel %vm656, %v683, %v685
        %v687 = vrot.slane %v412, 1
        %v688 = vrot.slane %v413, 1
        %v689 = vsel %vm656, %v687, %v688
        %v690 = vrot.slane %v414, 1
        %v691 = vsel %vm656, %v688, %v690
        %v692 = vrot.slane %v415, 1
        %v693 = vrot.slane %v416, 1
        %v694 = vsel %vm656, %v692, %v693
        %v695 = vrot.slane %v417, 1
        %v696 = vsel %vm656, %v693, %v695
        %v697 = vrot.slane %v418, 1
        %v698 = vrot.slane %v419, 1
        %v699 = vsel %vm656, %v697, %v698
        %v700 = vrot.slane %v420, 1
        %v701 = vsel %vm656, %v698, %v700
        %v702 = vrot.slane %v421, 1
        %v703 = vrot.slane %v422, 1
        %v704 = vsel %vm656, %v702, %v703
        %v705 = vrot.slane %v423, 1
        %v706 = vsel %vm656, %v703, %v705
        %v707 = vrot.slane %v424, 1
        %v708 = vrot.slane %v425, 1
        %v709 = vsel %vm656, %v707, %v708
        %v710 = vrot.slane %v426, 1
        %v711 = vsel %vm656, %v708, %v710
        %v712 = vrot.slane %v427, 1
        %v713 = vrot.slane %v428, 1
        %v714 = vsel %vm656, %v712, %v713
        %v715 = vrot.slane %v429, 1
        %v716 = vsel %vm656, %v713, %v715
        %v717 = vrot.slane %v430, 1
        %v718 = vrot.slane %v431, 1
        %v719 = vsel %vm656, %v717, %v718
        %v720 = vrot.slane %v432, 1
        %v721 = vsel %vm656, %v718, %v720
        %v722 = vrot.slane %v433, 1
        %v723 = vrot.slane %v434, 1
        %v724 = vsel %vm656, %v722, %v723
        %v725 = vrot.slane %v435, 1
        %v726 = vsel %vm656, %v723, %v725
        %v727 = vrot.slane %v436, 1
        %v728 = vrot.slane %v437, 1
        %v729 = vsel %vm656, %v727, %v728
        %v730 = vrot.slane %v438, 1
        %v731 = vsel %vm656, %v728, %v730
        %v732 = vrot.slane %v439, 1
        %v733 = vrot.slane %v440, 1
        %v734 = vsel %vm656, %v732, %v733
        %v735 = vrot.slane %v441, 1
        %v736 = vsel %vm656, %v733, %v735
        %v769 = vpack.c.bf16 %v661, %v659
        %v770 = vpack.c.bf16 %v666, %v664
        %v771 = vpack.c.bf16 %v671, %v669
        %v772 = vpack.c.bf16 %v676, %v674
        %v773 = vpack.c.bf16 %v681, %v679
        %v774 = vpack.c.bf16 %v686, %v684
        %v775 = vpack.c.bf16 %v691, %v689
        %v776 = vpack.c.bf16 %v696, %v694
        %v777 = vpack.c.bf16 %v701, %v699
        %v778 = vpack.c.bf16 %v706, %v704
        %v779 = vpack.c.bf16 %v711, %v709
        %v780 = vpack.c.bf16 %v716, %v714
        %v781 = vpack.c.bf16 %v721, %v719
        %v782 = vpack.c.bf16 %v726, %v724
        %v783 = vpack.c.bf16 %v731, %v729
        %v784 = vpack.c.bf16 %v736, %v734
        %v801 = vunpack.c.l.b16 %v464
        %v802 = vunpack.c.l.b16 %v465
        %v803 = vunpack.c.l.b16 %v466
        %v804 = vunpack.c.l.b16 %v467
        %v805 = vunpack.c.l.b16 %v468
        %v806 = vunpack.c.l.b16 %v469
        %v807 = vunpack.c.l.b16 %v470
        %v808 = vunpack.c.l.b16 %v471
        %v809 = vunpack.c.l.b16 %v472
        %v810 = vunpack.c.l.b16 %v473
        %v811 = vunpack.c.l.b16 %v474
        %v812 = vunpack.c.l.b16 %v475
        %v813 = vunpack.c.l.b16 %v476
        %v814 = vunpack.c.l.b16 %v477
        %v815 = vunpack.c.l.b16 %v478
        %v816 = vunpack.c.l.b16 %v479
        %v817 = vpack.c.b16 %v802, %v801
        %v818 = vpack.c.b16 %v804, %v803
        %v819 = vpack.c.b16 %v806, %v805
        %v820 = vpack.c.b16 %v808, %v807
        %v821 = vpack.c.b16 %v810, %v809
        %v822 = vpack.c.b16 %v812, %v811
        %v823 = vpack.c.b16 %v814, %v813
        %v824 = vpack.c.b16 %v816, %v815
        %833 = vmatprep.subr.bf16.mxu0 0
        %834 = vmatpush1.bf16.msra.mxu0 %v817
        %835 = vmatprep.subr.bf16.mxu0 0
        %836 = vmatpush1.bf16.msra.mxu0 %v818
        %837 = vmatprep.subr.bf16.mxu0 0
        %838 = vmatpush1.bf16.msra.mxu0 %v819
        %839 = vmatprep.subr.bf16.mxu0 0
        %840 = vmatpush1.bf16.msra.mxu0 %v820
        %841 = vmatprep.subr.bf16.mxu0 0
        %842 = vmatpush1.bf16.msra.mxu0 %v821
        %843 = vmatprep.subr.bf16.mxu0 0
        %844 = vmatpush1.bf16.msra.mxu0 %v822
        %845 = vmatprep.subr.bf16.mxu0 0
        %846 = vmatpush1.bf16.msra.mxu0 %v823
        %847 = vmatprep.subr.bf16.mxu0 0
        %848 = vmatpush1.bf16.msra.mxu0 %v824
        %849 = vmatprep.subr.bf16.mxu0 0
        %850 = vmatpush1.bf16.msra.mxu0 0
        %851 = vmatprep.subr.bf16.mxu0 0
        %852 = vmatpush1.bf16.msra.mxu0 0
        %853 = vmatprep.subr.bf16.mxu0 0
        %854 = vmatpush1.bf16.msra.mxu0 0
        %855 = vmatprep.subr.bf16.mxu0 0
        %856 = vmatpush1.bf16.msra.mxu0 0
        %857 = vmatprep.subr.bf16.mxu0 0
        %858 = vmatpush1.bf16.msra.mxu0 0
        %859 = vmatprep.subr.bf16.mxu0 0
        %860 = vmatpush1.bf16.msra.mxu0 0
        %861 = vmatprep.subr.bf16.mxu0 0
        %862 = vmatpush1.bf16.msra.mxu0 0
        %863 = vmatprep.subr.bf16.mxu0 0
        %864 = vmatpush1.bf16.msra.mxu0 0
        %865 = vmatprep.mubr.bf16.mxu0 0
        %866 = vmatmul.mubr.bf16.gmra.mrb[0].mxu0 %v769
        %v867 = vpop.f32.mrb[0].mxu0
        %v868 = vadd.f32 0.0, %v867
        %v869 = vpop.f32.mrb[0].mxu0
        %v870 = vpop.f32.mrb[0].mxu0
        %v871 = vadd.f32 0.0, %v870
        %v872 = vpop.f32.mrb[0].mxu0
        %873 = vmatprep.mubr.bf16.mxu0 0
        %874 = vmatmul.mubr.bf16.gmra.mrb[0].mxu0 %v770
        %v875 = vpop.f32.mrb[0].mxu0
        %v876 = vadd.f32 0.0, %v875
        %v877 = vpop.f32.mrb[0].mxu0
        %v878 = vpop.f32.mrb[0].mxu0
        %v879 = vadd.f32 0.0, %v878
        %v880 = vpop.f32.mrb[0].mxu0
        %881 = vmatprep.mubr.bf16.mxu0 0
        %882 = vmatmul.mubr.bf16.gmra.mrb[0].mxu0 %v771
        %v883 = vpop.f32.mrb[0].mxu0
        %v884 = vadd.f32 0.0, %v883
        %v885 = vpop.f32.mrb[0].mxu0
        %v886 = vpop.f32.mrb[0].mxu0
        %v887 = vadd.f32 0.0, %v886
        %v888 = vpop.f32.mrb[0].mxu0
        %889 = vmatprep.mubr.bf16.mxu0 0
        %890 = vmatmul.mubr.bf16.gmra.mrb[0].mxu0 %v772
        %v891 = vpop.f32.mrb[0].mxu0
        %v892 = vadd.f32 0.0, %v891
        %v893 = vpop.f32.mrb[0].mxu0
        %v894 = vpop.f32.mrb[0].mxu0
        %v895 = vadd.f32 0.0, %v894
        %v896 = vpop.f32.mrb[0].mxu0
        %897 = vmatprep.mubr.bf16.mxu0 0
        %898 = vmatmul.mubr.bf16.gmra.mrb[0].mxu0 %v773
        %v899 = vpop.f32.mrb[0].mxu0
        %v900 = vadd.f32 0.0, %v899
        %v901 = vpop.f32.mrb[0].mxu0
        %v902 = vpop.f32.mrb[0].mxu0
        %v903 = vadd.f32 0.0, %v902
        %v904 = vpop.f32.mrb[0].mxu0
        %905 = vmatprep.mubr.bf16.mxu0 0
        %906 = vmatmul.mubr.bf16.gmra.mrb[0].mxu0 %v774
        %v907 = vpop.f32.mrb[0].mxu0
        %v908 = vadd.f32 0.0, %v907
        %v909 = vpop.f32.mrb[0].mxu0
        %v910 = vpop.f32.mrb[0].mxu0
        %v911 = vadd.f32 0.0, %v910
        %v912 = vpop.f32.mrb[0].mxu0
        %913 = vmatprep.mubr.bf16.mxu0 0
        %914 = vmatmul.mubr.bf16.gmra.mrb[0].mxu0 %v775
        %v915 = vpop.f32.mrb[0].mxu0
        %v916 = vadd.f32 0.0, %v915
        %v917 = vpop.f32.mrb[0].mxu0
        %v918 = vpop.f32.mrb[0].mxu0
        %v919 = vadd.f32 0.0, %v918
        %v920 = vpop.f32.mrb[0].mxu0
        %921 = vmatprep.mubr.bf16.mxu0 0
        %922 = vmatmul.mubr.bf16.gmra.mrb[0].mxu0 %v776
        %v923 = vpop.f32.mrb[0].mxu0
        %v924 = vadd.f32 0.0, %v923
        %v925 = vpop.f32.mrb[0].mxu0
        %v926 = vpop.f32.mrb[0].mxu0
        %v927 = vadd.f32 0.0, %v926
        %v928 = vpop.f32.mrb[0].mxu0
        %929 = vmatprep.mubr.bf16.mxu0 0
        %930 = vmatmul.mubr.bf16.gmra.mrb[0].mxu0 %v777
        %v931 = vpop.f32.mrb[0].mxu0
        %v932 = vadd.f32 0.0, %v931
        %v933 = vpop.f32.mrb[0].mxu0
        %v934 = vpop.f32.mrb[0].mxu0
        %v935 = vadd.f32 0.0, %v934
        %v936 = vpop.f32.mrb[0].mxu0
        %937 = vmatprep.mubr.bf16.mxu0 0
        %938 = vmatmul.mubr.bf16.gmra.mrb[0].mxu0 %v778
        %v939 = vpop.f32.mrb[0].mxu0
        %v940 = vadd.f32 0.0, %v939
        %v941 = vpop.f32.mrb[0].mxu0
        %v942 = vpop.f32.mrb[0].mxu0
        %v943 = vadd.f32 0.0, %v942
        %v944 = vpop.f32.mrb[0].mxu0
        %945 = vmatprep.mubr.bf16.mxu0 0
        %946 = vmatmul.mubr.bf16.gmra.mrb[0].mxu0 %v779
        %v947 = vpop.f32.mrb[0].mxu0
        %v948 = vadd.f32 0.0, %v947
        %v949 = vpop.f32.mrb[0].mxu0
        %v950 = vpop.f32.mrb[0].mxu0
        %v951 = vadd.f32 0.0, %v950
        %v952 = vpop.f32.mrb[0].mxu0
        %953 = vmatprep.mubr.bf16.mxu0 0
        %954 = vmatmul.mubr.bf16.gmra.mrb[0].mxu0 %v780
        %v955 = vpop.f32.mrb[0].mxu0
        %v956 = vadd.f32 0.0, %v955
        %v957 = vpop.f32.mrb[0].mxu0
        %v958 = vpop.f32.mrb[0].mxu0
        %v959 = vadd.f32 0.0, %v958
        %v960 = vpop.f32.mrb[0].mxu0
        %961 = vmatprep.mubr.bf16.mxu0 0
        %962 = vmatmul.mubr.bf16.gmra.mrb[0].mxu0 %v781
        %v963 = vpop.f32.mrb[0].mxu0
        %v964 = vadd.f32 0.0, %v963
        %v965 = vpop.f32.mrb[0].mxu0
        %v966 = vpop.f32.mrb[0].mxu0
        %v967 = vadd.f32 0.0, %v966
        %v968 = vpop.f32.mrb[0].mxu0
        %969 = vmatprep.mubr.bf16.mxu0 0
        %970 = vmatmul.mubr.bf16.gmra.mrb[0].mxu0 %v782
        %v971 = vpop.f32.mrb[0].mxu0
        %v972 = vadd.f32 0.0, %v971
        %v973 = vpop.f32.mrb[0].mxu0
        %v974 = vpop.f32.mrb[0].mxu0
        %v975 = vadd.f32 0.0, %v974
        %v976 = vpop.f32.mrb[0].mxu0
        %977 = vmatprep.mubr.bf16.mxu0 0
        %978 = vmatmul.mubr.bf16.gmra.mrb[0].mxu0 %v783
        %v979 = vpop.f32.mrb[0].mxu0
        %v980 = vadd.f32 0.0, %v979
        %v981 = vpop.f32.mrb[0].mxu0
        %v982 = vpop.f32.mrb[0].mxu0
        %v983 = vadd.f32 0.0, %v982
        %v984 = vpop.f32.mrb[0].mxu0
        %985 = vmatprep.mubr.bf16.mxu0 0
        %986 = vmatmul.mubr.bf16.gmra.mrb[0].mxu0 %v784
        %v987 = vpop.f32.mrb[0].mxu0
        %v988 = vadd.f32 0.0, %v987
        %v989 = vpop.f32.mrb[0].mxu0
        %v990 = vpop.f32.mrb[0].mxu0
        %v991 = vadd.f32 0.0, %v990
        %v992 = vpop.f32.mrb[0].mxu0
        %993 = vdwg.mxu0
        %v1010 = vunpack.c.l.b16 %v448
        %v1011 = vunpack.c.l.b16 %v449
        %v1012 = vunpack.c.l.b16 %v450
        %v1013 = vunpack.c.l.b16 %v451
        %v1014 = vunpack.c.l.b16 %v452
        %v1015 = vunpack.c.l.b16 %v453
        %v1016 = vunpack.c.l.b16 %v454
        %v1017 = vunpack.c.l.b16 %v455
        %v1018 = vunpack.c.l.b16 %v456
        %v1019 = vunpack.c.l.b16 %v457
        %v1020 = vunpack.c.l.b16 %v458
        %v1021 = vunpack.c.l.b16 %v459
        %v1022 = vunpack.c.l.b16 %v460
        %v1023 = vunpack.c.l.b16 %v461
        %v1024 = vunpack.c.l.b16 %v462
        %v1025 = vunpack.c.l.b16 %v463
        %v1026 = vpack.c.b16 %v1011, %v1010
        %v1027 = vpack.c.b16 %v1013, %v1012
        %v1028 = vpack.c.b16 %v1015, %v1014
        %v1029 = vpack.c.b16 %v1017, %v1016
        %v1030 = vpack.c.b16 %v1019, %v1018
        %v1031 = vpack.c.b16 %v1021, %v1020
        %v1032 = vpack.c.b16 %v1023, %v1022
        %v1033 = vpack.c.b16 %v1025, %v1024
        %1042 = vmatprep.subr.bf16.mxu0 0
        %1043 = vmatpush1.bf16.msra.mxu0 %v1026
        %1044 = vmatprep.subr.bf16.mxu0 0
        %1045 = vmatpush1.bf16.msra.mxu0 %v1027
        %1046 = vmatprep.subr.bf16.mxu0 0
        %1047 = vmatpush1.bf16.msra.mxu0 %v1028
        %1048 = vmatprep.subr.bf16.mxu0 0
        %1049 = vmatpush1.bf16.msra.mxu0 %v1029
        %1050 = vmatprep.subr.bf16.mxu0 0
        %1051 = vmatpush1.bf16.msra.mxu0 %v1030
        %1052 = vmatprep.subr.bf16.mxu0 0
        %1053 = vmatpush1.bf16.msra.mxu0 %v1031
        %1054 = vmatprep.subr.bf16.mxu0 0
        %1055 = vmatpush1.bf16.msra.mxu0 %v1032
        %1056 = vmatprep.subr.bf16.mxu0 0
        %1057 = vmatpush1.bf16.msra.mxu0 %v1033
        %1058 = vmatprep.subr.bf16.mxu0 0
        %1059 = vmatpush1.bf16.msra.mxu0 0
        %1060 = vmatprep.subr.bf16.mxu0 0
        %1061 = vmatpush1.bf16.msra.mxu0 0
        %1062 = vmatprep.subr.bf16.mxu0 0
        %1063 = vmatpush1.bf16.msra.mxu0 0
        %1064 = vmatprep.subr.bf16.mxu0 0
        %1065 = vmatpush1.bf16.msra.mxu0 0
        %1066 = vmatprep.subr.bf16.mxu0 0
        %1067 = vmatpush1.bf16.msra.mxu0 0
        %1068 = vmatprep.subr.bf16.mxu0 0
        %1069 = vmatpush1.bf16.msra.mxu0 0
        %1070 = vmatprep.subr.bf16.mxu0 0
        %1071 = vmatpush1.bf16.msra.mxu0 0
        %1072 = vmatprep.subr.bf16.mxu0 0
        %1073 = vmatpush1.bf16.msra.mxu0 0
        %1074 = vmatprep.mubr.bf16.mxu0 0
        %1075 = vmatmul.mubr.bf16.gmra.mrb[0].mxu0 %v592
        %v1076 = vpop.f32.mrb[0].mxu0
        %v1077 = vadd.f32 %v868, %v1076
        %v1078 = vpop.f32.mrb[0].mxu0
        %v1079 = vpop.f32.mrb[0].mxu0
        %v1080 = vadd.f32 %v871, %v1079
        %v1081 = vpop.f32.mrb[0].mxu0
        %1082 = vmatprep.mubr.bf16.mxu0 0
        %1083 = vmatmul.mubr.bf16.gmra.mrb[0].mxu0 %v593
        %v1084 = vpop.f32.mrb[0].mxu0
        %v1085 = vadd.f32 %v876, %v1084
        %v1086 = vpop.f32.mrb[0].mxu0
        %v1087 = vpop.f32.mrb[0].mxu0
        %v1088 = vadd.f32 %v879, %v1087
        %v1089 = vpop.f32.mrb[0].mxu0
        %1090 = vmatprep.mubr.bf16.mxu0 0
        %1091 = vmatmul.mubr.bf16.gmra.mrb[0].mxu0 %v594
        %v1092 = vpop.f32.mrb[0].mxu0
        %v1093 = vadd.f32 %v884, %v1092
        %v1094 = vpop.f32.mrb[0].mxu0
        %v1095 = vpop.f32.mrb[0].mxu0
        %v1096 = vadd.f32 %v887, %v1095
        %v1097 = vpop.f32.mrb[0].mxu0
        %1098 = vmatprep.mubr.bf16.mxu0 0
        %1099 = vmatmul.mubr.bf16.gmra.mrb[0].mxu0 %v595
        %v1100 = vpop.f32.mrb[0].mxu0
        %v1101 = vadd.f32 %v892, %v1100
        %v1102 = vpop.f32.mrb[0].mxu0
        %v1103 = vpop.f32.mrb[0].mxu0
        %v1104 = vadd.f32 %v895, %v1103
        %v1105 = vpop.f32.mrb[0].mxu0
        %1106 = vmatprep.mubr.bf16.mxu0 0
        %1107 = vmatmul.mubr.bf16.gmra.mrb[0].mxu0 %v596
        %v1108 = vpop.f32.mrb[0].mxu0
        %v1109 = vadd.f32 %v900, %v1108
        %v1110 = vpop.f32.mrb[0].mxu0
        %v1111 = vpop.f32.mrb[0].mxu0
        %v1112 = vadd.f32 %v903, %v1111
        %v1113 = vpop.f32.mrb[0].mxu0
        %1114 = vmatprep.mubr.bf16.mxu0 0
        %1115 = vmatmul.mubr.bf16.gmra.mrb[0].mxu0 %v597
        %v1116 = vpop.f32.mrb[0].mxu0
        %v1117 = vadd.f32 %v908, %v1116
        %v1118 = vpop.f32.mrb[0].mxu0
        %v1119 = vpop.f32.mrb[0].mxu0
        %v1120 = vadd.f32 %v911, %v1119
        %v1121 = vpop.f32.mrb[0].mxu0
        %1122 = vmatprep.mubr.bf16.mxu0 0
        %1123 = vmatmul.mubr.bf16.gmra.mrb[0].mxu0 %v598
        %v1124 = vpop.f32.mrb[0].mxu0
        %v1125 = vadd.f32 %v916, %v1124
        %v1126 = vpop.f32.mrb[0].mxu0
        %v1127 = vpop.f32.mrb[0].mxu0
        %v1128 = vadd.f32 %v919, %v1127
        %v1129 = vpop.f32.mrb[0].mxu0
        %1130 = vmatprep.mubr.bf16.mxu0 0
        %1131 = vmatmul.mubr.bf16.gmra.mrb[0].mxu0 %v599
        %v1132 = vpop.f32.mrb[0].mxu0
        %v1133 = vadd.f32 %v924, %v1132
        %v1134 = vpop.f32.mrb[0].mxu0
        %v1135 = vpop.f32.mrb[0].mxu0
        %v1136 = vadd.f32 %v927, %v1135
        %v1137 = vpop.f32.mrb[0].mxu0
        %1138 = vmatprep.mubr.bf16.mxu0 0
        %1139 = vmatmul.mubr.bf16.gmra.mrb[0].mxu0 %v600
        %v1140 = vpop.f32.mrb[0].mxu0
        %v1141 = vadd.f32 %v932, %v1140
        %v1142 = vpop.f32.mrb[0].mxu0
        %v1143 = vpop.f32.mrb[0].mxu0
        %v1144 = vadd.f32 %v935, %v1143
        %v1145 = vpop.f32.mrb[0].mxu0
        %1146 = vmatprep.mubr.bf16.mxu0 0
        %1147 = vmatmul.mubr.bf16.gmra.mrb[0].mxu0 %v601
        %v1148 = vpop.f32.mrb[0].mxu0
        %v1149 = vadd.f32 %v940, %v1148
        %v1150 = vpop.f32.mrb[0].mxu0
        %v1151 = vpop.f32.mrb[0].mxu0
        %v1152 = vadd.f32 %v943, %v1151
        %v1153 = vpop.f32.mrb[0].mxu0
        %1154 = vmatprep.mubr.bf16.mxu0 0
        %1155 = vmatmul.mubr.bf16.gmra.mrb[0].mxu0 %v602
        %v1156 = vpop.f32.mrb[0].mxu0
        %v1157 = vadd.f32 %v948, %v1156
        %v1158 = vpop.f32.mrb[0].mxu0
        %v1159 = vpop.f32.mrb[0].mxu0
        %v1160 = vadd.f32 %v951, %v1159
        %v1161 = vpop.f32.mrb[0].mxu0
        %1162 = vmatprep.mubr.bf16.mxu0 0
        %1163 = vmatmul.mubr.bf16.gmra.mrb[0].mxu0 %v603
        %v1164 = vpop.f32.mrb[0].mxu0
        %v1165 = vadd.f32 %v956, %v1164
        %v1166 = vpop.f32.mrb[0].mxu0
        %v1167 = vpop.f32.mrb[0].mxu0
        %v1168 = vadd.f32 %v959, %v1167
        %v1169 = vpop.f32.mrb[0].mxu0
        %1170 = vmatprep.mubr.bf16.mxu0 0
        %1171 = vmatmul.mubr.bf16.gmra.mrb[0].mxu0 %v604
        %v1172 = vpop.f32.mrb[0].mxu0
        %v1173 = vadd.f32 %v964, %v1172
        %v1174 = vpop.f32.mrb[0].mxu0
        %v1175 = vpop.f32.mrb[0].mxu0
        %v1176 = vadd.f32 %v967, %v1175
        %v1177 = vpop.f32.mrb[0].mxu0
        %1178 = vmatprep.mubr.bf16.mxu0 0
        %1179 = vmatmul.mubr.bf16.gmra.mrb[0].mxu0 %v605
        %v1180 = vpop.f32.mrb[0].mxu0
        %v1181 = vadd.f32 %v972, %v1180
        %v1182 = vpop.f32.mrb[0].mxu0
        %v1183 = vpop.f32.mrb[0].mxu0
        %v1184 = vadd.f32 %v975, %v1183
        %v1185 = vpop.f32.mrb[0].mxu0
        %1186 = vmatprep.mubr.bf16.mxu0 0
        %1187 = vmatmul.mubr.bf16.gmra.mrb[0].mxu0 %v606
        %v1188 = vpop.f32.mrb[0].mxu0
        %v1189 = vadd.f32 %v980, %v1188
        %v1190 = vpop.f32.mrb[0].mxu0
        %v1191 = vpop.f32.mrb[0].mxu0
        %v1192 = vadd.f32 %v983, %v1191
        %v1193 = vpop.f32.mrb[0].mxu0
        %1194 = vmatprep.mubr.bf16.mxu0 0
        %1195 = vmatmul.mubr.bf16.gmra.mrb[0].mxu0 %v607
        %v1196 = vpop.f32.mrb[0].mxu0
        %v1197 = vadd.f32 %v988, %v1196
        %v1198 = vpop.f32.mrb[0].mxu0
        %v1199 = vpop.f32.mrb[0].mxu0
        %v1200 = vadd.f32 %v991, %v1199
        %v1201 = vpop.f32.mrb[0].mxu0
        %1202 = vdwg.mxu0
        %vm1203 = vcmask 1045504
        %v1204 = vrot.slane %v394, 2
        %v1205 = vrot.slane %v395, 2
        %v1206 = vsel %vm1203, %v1204, %v1205
        %v1207 = vrot.slane %v396, 2
        %v1208 = vsel %vm1203, %v1205, %v1207
        %v1209 = vrot.slane %v397, 2
        %v1210 = vrot.slane %v398, 2
        %v1211 = vsel %vm1203, %v1209, %v1210
        %v1212 = vrot.slane %v399, 2
        %v1213 = vsel %vm1203, %v1210, %v1212
        %v1214 = vrot.slane %v400, 2
        %v1215 = vrot.slane %v401, 2
        %v1216 = vsel %vm1203, %v1214, %v1215
        %v1217 = vrot.slane %v402, 2
        %v1218 = vsel %vm1203, %v1215, %v1217
        %v1219 = vrot.slane %v403, 2
        %v1220 = vrot.slane %v404, 2
        %v1221 = vsel %vm1203, %v1219, %v1220
        %v1222 = vrot.slane %v405, 2
        %v1223 = vsel %vm1203, %v1220, %v1222
        %v1224 = vrot.slane %v406, 2
        %v1225 = vrot.slane %v407, 2
        %v1226 = vsel %vm1203, %v1224, %v1225
        %v1227 = vrot.slane %v408, 2
        %v1228 = vsel %vm1203, %v1225, %v1227
        %v1229 = vrot.slane %v409, 2
        %v1230 = vrot.slane %v410, 2
        %v1231 = vsel %vm1203, %v1229, %v1230
        %v1232 = vrot.slane %v411, 2
        %v1233 = vsel %vm1203, %v1230, %v1232
        %v1234 = vrot.slane %v412, 2
        %v1235 = vrot.slane %v413, 2
        %v1236 = vsel %vm1203, %v1234, %v1235
        %v1237 = vrot.slane %v414, 2
        %v1238 = vsel %vm1203, %v1235, %v1237
        %v1239 = vrot.slane %v415, 2
        %v1240 = vrot.slane %v416, 2
        %v1241 = vsel %vm1203, %v1239, %v1240
        %v1242 = vrot.slane %v417, 2
        %v1243 = vsel %vm1203, %v1240, %v1242
        %v1244 = vrot.slane %v418, 2
        %v1245 = vrot.slane %v419, 2
        %v1246 = vsel %vm1203, %v1244, %v1245
        %v1247 = vrot.slane %v420, 2
        %v1248 = vsel %vm1203, %v1245, %v1247
        %v1249 = vrot.slane %v421, 2
        %v1250 = vrot.slane %v422, 2
        %v1251 = vsel %vm1203, %v1249, %v1250
        %v1252 = vrot.slane %v423, 2
        %v1253 = vsel %vm1203, %v1250, %v1252
        %v1254 = vrot.slane %v424, 2
        %v1255 = vrot.slane %v425, 2
        %v1256 = vsel %vm1203, %v1254, %v1255
        %v1257 = vrot.slane %v426, 2
        %v1258 = vsel %vm1203, %v1255, %v1257
        %v1259 = vrot.slane %v427, 2
        %v1260 = vrot.slane %v428, 2
        %v1261 = vsel %vm1203, %v1259, %v1260
        %v1262 = vrot.slane %v429, 2
        %v1263 = vsel %vm1203, %v1260, %v1262
        %v1264 = vrot.slane %v430, 2
        %v1265 = vrot.slane %v431, 2
        %v1266 = vsel %vm1203, %v1264, %v1265
        %v1267 = vrot.slane %v432, 2
        %v1268 = vsel %vm1203, %v1265, %v1267
        %v1269 = vrot.slane %v433, 2
        %v1270 = vrot.slane %v434, 2
        %v1271 = vsel %vm1203, %v1269, %v1270
        %v1272 = vrot.slane %v435, 2
        %v1273 = vsel %vm1203, %v1270, %v1272
        %v1274 = vrot.slane %v436, 2
        %v1275 = vrot.slane %v437, 2
        %v1276 = vsel %vm1203, %v1274, %v1275
        %v1277 = vrot.slane %v438, 2
        %v1278 = vsel %vm1203, %v1275, %v1277
        %v1279 = vrot.slane %v439, 2
        %v1280 = vrot.slane %v440, 2
        %v1281 = vsel %vm1203, %v1279, %v1280
        %v1282 = vrot.slane %v441, 2
        %v1283 = vsel %vm1203, %v1280, %v1282
        %v1316 = vpack.c.bf16 %v1208, %v1206
        %v1317 = vpack.c.bf16 %v1213, %v1211
        %v1318 = vpack.c.bf16 %v1218, %v1216
        %v1319 = vpack.c.bf16 %v1223, %v1221
        %v1320 = vpack.c.bf16 %v1228, %v1226
        %v1321 = vpack.c.bf16 %v1233, %v1231
        %v1322 = vpack.c.bf16 %v1238, %v1236
        %v1323 = vpack.c.bf16 %v1243, %v1241
        %v1324 = vpack.c.bf16 %v1248, %v1246
        %v1325 = vpack.c.bf16 %v1253, %v1251
        %v1326 = vpack.c.bf16 %v1258, %v1256
        %v1327 = vpack.c.bf16 %v1263, %v1261
        %v1328 = vpack.c.bf16 %v1268, %v1266
        %v1329 = vpack.c.bf16 %v1273, %v1271
        %v1330 = vpack.c.bf16 %v1278, %v1276
        %v1331 = vpack.c.bf16 %v1283, %v1281
        %v1348 = vunpack.c.l.b16 %v480
        %v1349 = vunpack.c.l.b16 %v481
        %v1350 = vunpack.c.l.b16 %v482
        %v1351 = vunpack.c.l.b16 %v483
        %v1352 = vunpack.c.l.b16 %v484
        %v1353 = vunpack.c.l.b16 %v485
        %v1354 = vunpack.c.l.b16 %v486
        %v1355 = vunpack.c.l.b16 %v487
        %v1356 = vunpack.c.l.b16 %v488
        %v1357 = vunpack.c.l.b16 %v489
        %v1358 = vunpack.c.l.b16 %v490
        %v1359 = vunpack.c.l.b16 %v491
        %v1360 = vunpack.c.l.b16 %v492
        %v1361 = vunpack.c.l.b16 %v493
        %v1362 = vunpack.c.l.b16 %v494
        %v1363 = vunpack.c.l.b16 %v495
        %v1364 = vpack.c.b16 %v1349, %v1348
        %v1365 = vpack.c.b16 %v1351, %v1350
        %v1366 = vpack.c.b16 %v1353, %v1352
        %v1367 = vpack.c.b16 %v1355, %v1354
        %v1368 = vpack.c.b16 %v1357, %v1356
        %v1369 = vpack.c.b16 %v1359, %v1358
        %v1370 = vpack.c.b16 %v1361, %v1360
        %v1371 = vpack.c.b16 %v1363, %v1362
        %1380 = vmatprep.subr.bf16.mxu0 0
        %1381 = vmatpush1.bf16.msra.mxu0 %v1364
        %1382 = vmatprep.subr.bf16.mxu0 0
        %1383 = vmatpush1.bf16.msra.mxu0 %v1365
        %1384 = vmatprep.subr.bf16.mxu0 0
        %1385 = vmatpush1.bf16.msra.mxu0 %v1366
        %1386 = vmatprep.subr.bf16.mxu0 0
        %1387 = vmatpush1.bf16.msra.mxu0 %v1367
        %1388 = vmatprep.subr.bf16.mxu0 0
        %1389 = vmatpush1.bf16.msra.mxu0 %v1368
        %1390 = vmatprep.subr.bf16.mxu0 0
        %1391 = vmatpush1.bf16.msra.mxu0 %v1369
        %1392 = vmatprep.subr.bf16.mxu0 0
        %1393 = vmatpush1.bf16.msra.mxu0 %v1370
        %1394 = vmatprep.subr.bf16.mxu0 0
        %1395 = vmatpush1.bf16.msra.mxu0 %v1371
        %1396 = vmatprep.subr.bf16.mxu0 0
        %1397 = vmatpush1.bf16.msra.mxu0 0
        %1398 = vmatprep.subr.bf16.mxu0 0
        %1399 = vmatpush1.bf16.msra.mxu0 0
        %1400 = vmatprep.subr.bf16.mxu0 0
        %1401 = vmatpush1.bf16.msra.mxu0 0
        %1402 = vmatprep.subr.bf16.mxu0 0
        %1403 = vmatpush1.bf16.msra.mxu0 0
        %1404 = vmatprep.subr.bf16.mxu0 0
        %1405 = vmatpush1.bf16.msra.mxu0 0
        %1406 = vmatprep.subr.bf16.mxu0 0
        %1407 = vmatpush1.bf16.msra.mxu0 0
        %1408 = vmatprep.subr.bf16.mxu0 0
        %1409 = vmatpush1.bf16.msra.mxu0 0
        %1410 = vmatprep.subr.bf16.mxu0 0
        %1411 = vmatpush1.bf16.msra.mxu0 0
        %1412 = vmatprep.mubr.bf16.mxu0 0
        %1413 = vmatmul.mubr.bf16.gmra.mrb[0].mxu0 %v1316
        %v1414 = vpop.f32.mrb[0].mxu0
        %v1415 = vadd.f32 0.0, %v1414
        %v1416 = vpop.f32.mrb[0].mxu0
        %v1417 = vpop.f32.mrb[0].mxu0
        %v1418 = vadd.f32 0.0, %v1417
        %v1419 = vpop.f32.mrb[0].mxu0
        %1420 = vmatprep.mubr.bf16.mxu0 0
        %1421 = vmatmul.mubr.bf16.gmra.mrb[0].mxu0 %v1317
        %v1422 = vpop.f32.mrb[0].mxu0
        %v1423 = vadd.f32 0.0, %v1422
        %v1424 = vpop.f32.mrb[0].mxu0
        %v1425 = vpop.f32.mrb[0].mxu0
        %v1426 = vadd.f32 0.0, %v1425
        %v1427 = vpop.f32.mrb[0].mxu0
        %1428 = vmatprep.mubr.bf16.mxu0 0
        %1429 = vmatmul.mubr.bf16.gmra.mrb[0].mxu0 %v1318
        %v1430 = vpop.f32.mrb[0].mxu0
        %v1431 = vadd.f32 0.0, %v1430
        %v1432 = vpop.f32.mrb[0].mxu0
        %v1433 = vpop.f32.mrb[0].mxu0
        %v1434 = vadd.f32 0.0, %v1433
        %v1435 = vpop.f32.mrb[0].mxu0
        %1436 = vmatprep.mubr.bf16.mxu0 0
        %1437 = vmatmul.mubr.bf16.gmra.mrb[0].mxu0 %v1319
        %v1438 = vpop.f32.mrb[0].mxu0
        %v1439 = vadd.f32 0.0, %v1438
        %v1440 = vpop.f32.mrb[0].mxu0
        %v1441 = vpop.f32.mrb[0].mxu0
        %v1442 = vadd.f32 0.0, %v1441
        %v1443 = vpop.f32.mrb[0].mxu0
        %1444 = vmatprep.mubr.bf16.mxu0 0
        %1445 = vmatmul.mubr.bf16.gmra.mrb[0].mxu0 %v1320
        %v1446 = vpop.f32.mrb[0].mxu0
        %v1447 = vadd.f32 0.0, %v1446
        %v1448 = vpop.f32.mrb[0].mxu0
        %v1449 = vpop.f32.mrb[0].mxu0
        %v1450 = vadd.f32 0.0, %v1449
        %v1451 = vpop.f32.mrb[0].mxu0
        %1452 = vmatprep.mubr.bf16.mxu0 0
        %1453 = vmatmul.mubr.bf16.gmra.mrb[0].mxu0 %v1321
        %v1454 = vpop.f32.mrb[0].mxu0
        %v1455 = vadd.f32 0.0, %v1454
        %v1456 = vpop.f32.mrb[0].mxu0
        %v1457 = vpop.f32.mrb[0].mxu0
        %v1458 = vadd.f32 0.0, %v1457
        %v1459 = vpop.f32.mrb[0].mxu0
        %1460 = vmatprep.mubr.bf16.mxu0 0
        %1461 = vmatmul.mubr.bf16.gmra.mrb[0].mxu0 %v1322
        %v1462 = vpop.f32.mrb[0].mxu0
        %v1463 = vadd.f32 0.0, %v1462
        %v1464 = vpop.f32.mrb[0].mxu0
        %v1465 = vpop.f32.mrb[0].mxu0
        %v1466 = vadd.f32 0.0, %v1465
        %v1467 = vpop.f32.mrb[0].mxu0
        %1468 = vmatprep.mubr.bf16.mxu0 0
        %1469 = vmatmul.mubr.bf16.gmra.mrb[0].mxu0 %v1323
        %v1470 = vpop.f32.mrb[0].mxu0
        %v1471 = vadd.f32 0.0, %v1470
        %v1472 = vpop.f32.mrb[0].mxu0
        %v1473 = vpop.f32.mrb[0].mxu0
        %v1474 = vadd.f32 0.0, %v1473
        %v1475 = vpop.f32.mrb[0].mxu0
        %1476 = vmatprep.mubr.bf16.mxu0 0
        %1477 = vmatmul.mubr.bf16.gmra.mrb[0].mxu0 %v1324
        %v1478 = vpop.f32.mrb[0].mxu0
        %v1479 = vadd.f32 0.0, %v1478
        %v1480 = vpop.f32.mrb[0].mxu0
        %v1481 = vpop.f32.mrb[0].mxu0
        %v1482 = vadd.f32 0.0, %v1481
        %v1483 = vpop.f32.mrb[0].mxu0
        %1484 = vmatprep.mubr.bf16.mxu0 0
        %1485 = vmatmul.mubr.bf16.gmra.mrb[0].mxu0 %v1325
        %v1486 = vpop.f32.mrb[0].mxu0
        %v1487 = vadd.f32 0.0, %v1486
        %v1488 = vpop.f32.mrb[0].mxu0
        %v1489 = vpop.f32.mrb[0].mxu0
        %v1490 = vadd.f32 0.0, %v1489
        %v1491 = vpop.f32.mrb[0].mxu0
        %1492 = vmatprep.mubr.bf16.mxu0 0
        %1493 = vmatmul.mubr.bf16.gmra.mrb[0].mxu0 %v1326
        %v1494 = vpop.f32.mrb[0].mxu0
        %v1495 = vadd.f32 0.0, %v1494
        %v1496 = vpop.f32.mrb[0].mxu0
        %v1497 = vpop.f32.mrb[0].mxu0
        %v1498 = vadd.f32 0.0, %v1497
        %v1499 = vpop.f32.mrb[0].mxu0
        %1500 = vmatprep.mubr.bf16.mxu0 0
        %1501 = vmatmul.mubr.bf16.gmra.mrb[0].mxu0 %v1327
        %v1502 = vpop.f32.mrb[0].mxu0
        %v1503 = vadd.f32 0.0, %v1502
        %v1504 = vpop.f32.mrb[0].mxu0
        %v1505 = vpop.f32.mrb[0].mxu0
        %v1506 = vadd.f32 0.0, %v1505
        %v1507 = vpop.f32.mrb[0].mxu0
        %1508 = vmatprep.mubr.bf16.mxu0 0
        %1509 = vmatmul.mubr.bf16.gmra.mrb[0].mxu0 %v1328
        %v1510 = vpop.f32.mrb[0].mxu0
        %v1511 = vadd.f32 0.0, %v1510
        %v1512 = vpop.f32.mrb[0].mxu0
        %v1513 = vpop.f32.mrb[0].mxu0
        %v1514 = vadd.f32 0.0, %v1513
        %v1515 = vpop.f32.mrb[0].mxu0
        %1516 = vmatprep.mubr.bf16.mxu0 0
        %1517 = vmatmul.mubr.bf16.gmra.mrb[0].mxu0 %v1329
        %v1518 = vpop.f32.mrb[0].mxu0
        %v1519 = vadd.f32 0.0, %v1518
        %v1520 = vpop.f32.mrb[0].mxu0
        %v1521 = vpop.f32.mrb[0].mxu0
        %v1522 = vadd.f32 0.0, %v1521
        %v1523 = vpop.f32.mrb[0].mxu0
        %1524 = vmatprep.mubr.bf16.mxu0 0
        %1525 = vmatmul.mubr.bf16.gmra.mrb[0].mxu0 %v1330
        %v1526 = vpop.f32.mrb[0].mxu0
        %v1527 = vadd.f32 0.0, %v1526
        %v1528 = vpop.f32.mrb[0].mxu0
        %v1529 = vpop.f32.mrb[0].mxu0
        %v1530 = vadd.f32 0.0, %v1529
        %v1531 = vpop.f32.mrb[0].mxu0
        %1532 = vmatprep.mubr.bf16.mxu0 0
        %1533 = vmatmul.mubr.bf16.gmra.mrb[0].mxu0 %v1331
        %v1534 = vpop.f32.mrb[0].mxu0
        %v1535 = vadd.f32 0.0, %v1534
        %v1536 = vpop.f32.mrb[0].mxu0
        %v1537 = vpop.f32.mrb[0].mxu0
        %v1538 = vadd.f32 0.0, %v1537
        %v1539 = vpop.f32.mrb[0].mxu0
        %1540 = vdwg.mxu0
        %v1541 = vadd.f32 %v1077, %v1415
        %v1542 = vadd.f32 %v1080, %v1418
        %v1543 = vadd.f32 %v1085, %v1423
        %v1544 = vadd.f32 %v1088, %v1426
        %v1545 = vadd.f32 %v1093, %v1431
        %v1546 = vadd.f32 %v1096, %v1434
        %v1547 = vadd.f32 %v1101, %v1439
        %v1548 = vadd.f32 %v1104, %v1442
        %v1549 = vadd.f32 %v1109, %v1447
        %v1550 = vadd.f32 %v1112, %v1450
        %v1551 = vadd.f32 %v1117, %v1455
        %v1552 = vadd.f32 %v1120, %v1458
        %v1553 = vadd.f32 %v1125, %v1463
        %v1554 = vadd.f32 %v1128, %v1466
        %v1555 = vadd.f32 %v1133, %v1471
        %v1556 = vadd.f32 %v1136, %v1474
        %v1557 = vadd.f32 %v1141, %v1479
        %v1558 = vadd.f32 %v1144, %v1482
        %v1559 = vadd.f32 %v1149, %v1487
        %v1560 = vadd.f32 %v1152, %v1490
        %v1561 = vadd.f32 %v1157, %v1495
        %v1562 = vadd.f32 %v1160, %v1498
        %v1563 = vadd.f32 %v1165, %v1503
        %v1564 = vadd.f32 %v1168, %v1506
        %v1565 = vadd.f32 %v1173, %v1511
        %v1566 = vadd.f32 %v1176, %v1514
        %v1567 = vadd.f32 %v1181, %v1519
        %v1568 = vadd.f32 %v1184, %v1522
        %v1569 = vadd.f32 %v1189, %v1527
        %v1570 = vadd.f32 %v1192, %v1530
        %v1571 = vadd.f32 %v1197, %v1535
        %v1572 = vadd.f32 %v1200, %v1538
        %v1573 = vpack.c.bf16 %v443, %v442
        %v1590 = vunpack.c.l.b16 %v496
        %v1591 = vunpack.c.l.b16 %v497
        %v1592 = vunpack.c.l.b16 %v498
        %v1593 = vunpack.c.l.b16 %v499
        %v1594 = vunpack.c.l.b16 %v500
        %v1595 = vunpack.c.l.b16 %v501
        %v1596 = vunpack.c.l.b16 %v502
        %v1597 = vunpack.c.l.b16 %v503
        %v1598 = vunpack.c.l.b16 %v504
        %v1599 = vunpack.c.l.b16 %v505
        %v1600 = vunpack.c.l.b16 %v506
        %v1601 = vunpack.c.l.b16 %v507
        %v1602 = vunpack.c.l.b16 %v508
        %v1603 = vunpack.c.l.b16 %v509
        %v1604 = vunpack.c.l.b16 %v510
        %v1605 = vunpack.c.l.b16 %v511
        %v1606 = vpack.c.b16 %v1591, %v1590
        %v1607 = vpack.c.b16 %v1593, %v1592
        %v1608 = vpack.c.b16 %v1595, %v1594
        %v1609 = vpack.c.b16 %v1597, %v1596
        %v1610 = vpack.c.b16 %v1599, %v1598
        %v1611 = vpack.c.b16 %v1601, %v1600
        %v1612 = vpack.c.b16 %v1603, %v1602
        %v1613 = vpack.c.b16 %v1605, %v1604
        %1622 = vmatprep.subr.bf16.mxu0 0
        %1623 = vmatpush1.bf16.msra.mxu0 %v1606
        %1624 = vmatprep.subr.bf16.mxu0 0
        %1625 = vmatpush1.bf16.msra.mxu0 %v1607
        %1626 = vmatprep.subr.bf16.mxu0 0
        %1627 = vmatpush1.bf16.msra.mxu0 %v1608
        %1628 = vmatprep.subr.bf16.mxu0 0
        %1629 = vmatpush1.bf16.msra.mxu0 %v1609
        %1630 = vmatprep.subr.bf16.mxu0 0
        %1631 = vmatpush1.bf16.msra.mxu0 %v1610
        %1632 = vmatprep.subr.bf16.mxu0 0
        %1633 = vmatpush1.bf16.msra.mxu0 %v1611
        %1634 = vmatprep.subr.bf16.mxu0 0
        %1635 = vmatpush1.bf16.msra.mxu0 %v1612
        %1636 = vmatprep.subr.bf16.mxu0 0
        %1637 = vmatpush1.bf16.msra.mxu0 %v1613
        %1638 = vmatprep.subr.bf16.mxu0 0
        %1639 = vmatpush1.bf16.msra.mxu0 0
        %1640 = vmatprep.subr.bf16.mxu0 0
        %1641 = vmatpush1.bf16.msra.mxu0 0
        %1642 = vmatprep.subr.bf16.mxu0 0
        %1643 = vmatpush1.bf16.msra.mxu0 0
        %1644 = vmatprep.subr.bf16.mxu0 0
        %1645 = vmatpush1.bf16.msra.mxu0 0
        %1646 = vmatprep.subr.bf16.mxu0 0
        %1647 = vmatpush1.bf16.msra.mxu0 0
        %1648 = vmatprep.subr.bf16.mxu0 0
        %1649 = vmatpush1.bf16.msra.mxu0 0
        %1650 = vmatprep.subr.bf16.mxu0 0
        %1651 = vmatpush1.bf16.msra.mxu0 0
        %1652 = vmatprep.subr.bf16.mxu0 0
        %1653 = vmatpush1.bf16.msra.mxu0 0
        %1654 = vmatprep.mubr.bf16.mxu0 0
        %1655 = vmatmul.mubr.bf16.gmra.mrb[0].mxu0 %v593
        %v1656 = vpop.f32.mrb[0].mxu0
        %v1657 = vadd.f32 0.0, %v1656
        %v1658 = vpop.f32.mrb[0].mxu0
        %v1659 = vpop.f32.mrb[0].mxu0
        %v1660 = vadd.f32 0.0, %v1659
        %v1661 = vpop.f32.mrb[0].mxu0
        %1662 = vmatprep.mubr.bf16.mxu0 0
        %1663 = vmatmul.mubr.bf16.gmra.mrb[0].mxu0 %v594
        %v1664 = vpop.f32.mrb[0].mxu0
        %v1665 = vadd.f32 0.0, %v1664
        %v1666 = vpop.f32.mrb[0].mxu0
        %v1667 = vpop.f32.mrb[0].mxu0
        %v1668 = vadd.f32 0.0, %v1667
        %v1669 = vpop.f32.mrb[0].mxu0
        %1670 = vmatprep.mubr.bf16.mxu0 0
        %1671 = vmatmul.mubr.bf16.gmra.mrb[0].mxu0 %v595
        %v1672 = vpop.f32.mrb[0].mxu0
        %v1673 = vadd.f32 0.0, %v1672
        %v1674 = vpop.f32.mrb[0].mxu0
        %v1675 = vpop.f32.mrb[0].mxu0
        %v1676 = vadd.f32 0.0, %v1675
        %v1677 = vpop.f32.mrb[0].mxu0
        %1678 = vmatprep.mubr.bf16.mxu0 0
        %1679 = vmatmul.mubr.bf16.gmra.mrb[0].mxu0 %v596
        %v1680 = vpop.f32.mrb[0].mxu0
        %v1681 = vadd.f32 0.0, %v1680
        %v1682 = vpop.f32.mrb[0].mxu0
        %v1683 = vpop.f32.mrb[0].mxu0
        %v1684 = vadd.f32 0.0, %v1683
        %v1685 = vpop.f32.mrb[0].mxu0
        %1686 = vmatprep.mubr.bf16.mxu0 0
        %1687 = vmatmul.mubr.bf16.gmra.mrb[0].mxu0 %v597
        %v1688 = vpop.f32.mrb[0].mxu0
        %v1689 = vadd.f32 0.0, %v1688
        %v1690 = vpop.f32.mrb[0].mxu0
        %v1691 = vpop.f32.mrb[0].mxu0
        %v1692 = vadd.f32 0.0, %v1691
        %v1693 = vpop.f32.mrb[0].mxu0
        %1694 = vmatprep.mubr.bf16.mxu0 0
        %1695 = vmatmul.mubr.bf16.gmra.mrb[0].mxu0 %v598
        %v1696 = vpop.f32.mrb[0].mxu0
        %v1697 = vadd.f32 0.0, %v1696
        %v1698 = vpop.f32.mrb[0].mxu0
        %v1699 = vpop.f32.mrb[0].mxu0
        %v1700 = vadd.f32 0.0, %v1699
        %v1701 = vpop.f32.mrb[0].mxu0
        %1702 = vmatprep.mubr.bf16.mxu0 0
        %1703 = vmatmul.mubr.bf16.gmra.mrb[0].mxu0 %v599
        %v1704 = vpop.f32.mrb[0].mxu0
        %v1705 = vadd.f32 0.0, %v1704
        %v1706 = vpop.f32.mrb[0].mxu0
        %v1707 = vpop.f32.mrb[0].mxu0
        %v1708 = vadd.f32 0.0, %v1707
        %v1709 = vpop.f32.mrb[0].mxu0
        %1710 = vmatprep.mubr.bf16.mxu0 0
        %1711 = vmatmul.mubr.bf16.gmra.mrb[0].mxu0 %v600
        %v1712 = vpop.f32.mrb[0].mxu0
        %v1713 = vadd.f32 0.0, %v1712
        %v1714 = vpop.f32.mrb[0].mxu0
        %v1715 = vpop.f32.mrb[0].mxu0
        %v1716 = vadd.f32 0.0, %v1715
        %v1717 = vpop.f32.mrb[0].mxu0
        %1718 = vmatprep.mubr.bf16.mxu0 0
        %1719 = vmatmul.mubr.bf16.gmra.mrb[0].mxu0 %v601
        %v1720 = vpop.f32.mrb[0].mxu0
        %v1721 = vadd.f32 0.0, %v1720
        %v1722 = vpop.f32.mrb[0].mxu0
        %v1723 = vpop.f32.mrb[0].mxu0
        %v1724 = vadd.f32 0.0, %v1723
        %v1725 = vpop.f32.mrb[0].mxu0
        %1726 = vmatprep.mubr.bf16.mxu0 0
        %1727 = vmatmul.mubr.bf16.gmra.mrb[0].mxu0 %v602
        %v1728 = vpop.f32.mrb[0].mxu0
        %v1729 = vadd.f32 0.0, %v1728
        %v1730 = vpop.f32.mrb[0].mxu0
        %v1731 = vpop.f32.mrb[0].mxu0
        %v1732 = vadd.f32 0.0, %v1731
        %v1733 = vpop.f32.mrb[0].mxu0
        %1734 = vmatprep.mubr.bf16.mxu0 0
        %1735 = vmatmul.mubr.bf16.gmra.mrb[0].mxu0 %v603
        %v1736 = vpop.f32.mrb[0].mxu0
        %v1737 = vadd.f32 0.0, %v1736
        %v1738 = vpop.f32.mrb[0].mxu0
        %v1739 = vpop.f32.mrb[0].mxu0
        %v1740 = vadd.f32 0.0, %v1739
        %v1741 = vpop.f32.mrb[0].mxu0
        %1742 = vmatprep.mubr.bf16.mxu0 0
        %1743 = vmatmul.mubr.bf16.gmra.mrb[0].mxu0 %v604
        %v1744 = vpop.f32.mrb[0].mxu0
        %v1745 = vadd.f32 0.0, %v1744
        %v1746 = vpop.f32.mrb[0].mxu0
        %v1747 = vpop.f32.mrb[0].mxu0
        %v1748 = vadd.f32 0.0, %v1747
        %v1749 = vpop.f32.mrb[0].mxu0
        %1750 = vmatprep.mubr.bf16.mxu0 0
        %1751 = vmatmul.mubr.bf16.gmra.mrb[0].mxu0 %v605
        %v1752 = vpop.f32.mrb[0].mxu0
        %v1753 = vadd.f32 0.0, %v1752
        %v1754 = vpop.f32.mrb[0].mxu0
        %v1755 = vpop.f32.mrb[0].mxu0
        %v1756 = vadd.f32 0.0, %v1755
        %v1757 = vpop.f32.mrb[0].mxu0
        %1758 = vmatprep.mubr.bf16.mxu0 0
        %1759 = vmatmul.mubr.bf16.gmra.mrb[0].mxu0 %v606
        %v1760 = vpop.f32.mrb[0].mxu0
        %v1761 = vadd.f32 0.0, %v1760
        %v1762 = vpop.f32.mrb[0].mxu0
        %v1763 = vpop.f32.mrb[0].mxu0
        %v1764 = vadd.f32 0.0, %v1763
        %v1765 = vpop.f32.mrb[0].mxu0
        %1766 = vmatprep.mubr.bf16.mxu0 0
        %1767 = vmatmul.mubr.bf16.gmra.mrb[0].mxu0 %v607
        %v1768 = vpop.f32.mrb[0].mxu0
        %v1769 = vadd.f32 0.0, %v1768
        %v1770 = vpop.f32.mrb[0].mxu0
        %v1771 = vpop.f32.mrb[0].mxu0
        %v1772 = vadd.f32 0.0, %v1771
        %v1773 = vpop.f32.mrb[0].mxu0
        %1774 = vmatprep.mubr.bf16.mxu0 0
        %1775 = vmatmul.mubr.bf16.gmra.mrb[0].mxu0 %v1573
        %v1776 = vpop.f32.mrb[0].mxu0
        %v1777 = vadd.f32 0.0, %v1776
        %v1778 = vpop.f32.mrb[0].mxu0
        %v1779 = vpop.f32.mrb[0].mxu0
        %v1780 = vadd.f32 0.0, %v1779
        %v1781 = vpop.f32.mrb[0].mxu0
        %1782 = vdwg.mxu0
        %v1783 = vadd.f32 %v1541, %v1657
        %v1784 = vadd.f32 %v1542, %v1660
        %v1785 = vadd.f32 %v1543, %v1665
        %v1786 = vadd.f32 %v1544, %v1668
        %v1787 = vadd.f32 %v1545, %v1673
        %v1788 = vadd.f32 %v1546, %v1676
        %v1789 = vadd.f32 %v1547, %v1681
        %v1790 = vadd.f32 %v1548, %v1684
        %v1791 = vadd.f32 %v1549, %v1689
        %v1792 = vadd.f32 %v1550, %v1692
        %v1793 = vadd.f32 %v1551, %v1697
        %v1794 = vadd.f32 %v1552, %v1700
        %v1795 = vadd.f32 %v1553, %v1705
        %v1796 = vadd.f32 %v1554, %v1708
        %v1797 = vadd.f32 %v1555, %v1713
        %v1798 = vadd.f32 %v1556, %v1716
        %v1799 = vadd.f32 %v1557, %v1721
        %v1800 = vadd.f32 %v1558, %v1724
        %v1801 = vadd.f32 %v1559, %v1729
        %v1802 = vadd.f32 %v1560, %v1732
        %v1803 = vadd.f32 %v1561, %v1737
        %v1804 = vadd.f32 %v1562, %v1740
        %v1805 = vadd.f32 %v1563, %v1745
        %v1806 = vadd.f32 %v1564, %v1748
        %v1807 = vadd.f32 %v1565, %v1753
        %v1808 = vadd.f32 %v1566, %v1756
        %v1809 = vadd.f32 %v1567, %v1761
        %v1810 = vadd.f32 %v1568, %v1764
        %v1811 = vadd.f32 %v1569, %v1769
        %v1812 = vadd.f32 %v1570, %v1772
        %v1813 = vadd.f32 %v1571, %v1777
        %v1814 = vadd.f32 %v1572, %v1780
        %v1818 = vrot.slane %v442, 1
        %v1819 = vrot.slane %v443, 1
        %v1820 = vsel %vm656, %v1818, %v1819
        %v1821 = vrot.slane %v444, 1
        %v1822 = vsel %vm656, %v1819, %v1821
        %v1825 = vpack.c.bf16 %v1822, %v1820
        %v1842 = vunpack.c.l.b16 %v512
        %v1843 = vunpack.c.l.b16 %v513
        %v1844 = vunpack.c.l.b16 %v514
        %v1845 = vunpack.c.l.b16 %v515
        %v1846 = vunpack.c.l.b16 %v516
        %v1847 = vunpack.c.l.b16 %v517
        %v1848 = vunpack.c.l.b16 %v518
        %v1849 = vunpack.c.l.b16 %v519
        %v1850 = vunpack.c.l.b16 %v520
        %v1851 = vunpack.c.l.b16 %v521
        %v1852 = vunpack.c.l.b16 %v522
        %v1853 = vunpack.c.l.b16 %v523
        %v1854 = vunpack.c.l.b16 %v524
        %v1855 = vunpack.c.l.b16 %v525
        %v1856 = vunpack.c.l.b16 %v526
        %v1857 = vunpack.c.l.b16 %v527
        %v1858 = vpack.c.b16 %v1843, %v1842
        %v1859 = vpack.c.b16 %v1845, %v1844
        %v1860 = vpack.c.b16 %v1847, %v1846
        %v1861 = vpack.c.b16 %v1849, %v1848
        %v1862 = vpack.c.b16 %v1851, %v1850
        %v1863 = vpack.c.b16 %v1853, %v1852
        %v1864 = vpack.c.b16 %v1855, %v1854
        %v1865 = vpack.c.b16 %v1857, %v1856
        %1874 = vmatprep.subr.bf16.mxu0 0
        %1875 = vmatpush1.bf16.msra.mxu0 %v1858
        %1876 = vmatprep.subr.bf16.mxu0 0
        %1877 = vmatpush1.bf16.msra.mxu0 %v1859
        %1878 = vmatprep.subr.bf16.mxu0 0
        %1879 = vmatpush1.bf16.msra.mxu0 %v1860
        %1880 = vmatprep.subr.bf16.mxu0 0
        %1881 = vmatpush1.bf16.msra.mxu0 %v1861
        %1882 = vmatprep.subr.bf16.mxu0 0
        %1883 = vmatpush1.bf16.msra.mxu0 %v1862
        %1884 = vmatprep.subr.bf16.mxu0 0
        %1885 = vmatpush1.bf16.msra.mxu0 %v1863
        %1886 = vmatprep.subr.bf16.mxu0 0
        %1887 = vmatpush1.bf16.msra.mxu0 %v1864
        %1888 = vmatprep.subr.bf16.mxu0 0
        %1889 = vmatpush1.bf16.msra.mxu0 %v1865
        %1890 = vmatprep.subr.bf16.mxu0 0
        %1891 = vmatpush1.bf16.msra.mxu0 0
        %1892 = vmatprep.subr.bf16.mxu0 0
        %1893 = vmatpush1.bf16.msra.mxu0 0
        %1894 = vmatprep.subr.bf16.mxu0 0
        %1895 = vmatpush1.bf16.msra.mxu0 0
        %1896 = vmatprep.subr.bf16.mxu0 0
        %1897 = vmatpush1.bf16.msra.mxu0 0
        %1898 = vmatprep.subr.bf16.mxu0 0
        %1899 = vmatpush1.bf16.msra.mxu0 0
        %1900 = vmatprep.subr.bf16.mxu0 0
        %1901 = vmatpush1.bf16.msra.mxu0 0
        %1902 = vmatprep.subr.bf16.mxu0 0
        %1903 = vmatpush1.bf16.msra.mxu0 0
        %1904 = vmatprep.subr.bf16.mxu0 0
        %1905 = vmatpush1.bf16.msra.mxu0 0
        %1906 = vmatprep.mubr.bf16.mxu0 0
        %1907 = vmatmul.mubr.bf16.gmra.mrb[0].mxu0 %v770
        %v1908 = vpop.f32.mrb[0].mxu0
        %v1909 = vadd.f32 0.0, %v1908
        %v1910 = vpop.f32.mrb[0].mxu0
        %v1911 = vpop.f32.mrb[0].mxu0
        %v1912 = vadd.f32 0.0, %v1911
        %v1913 = vpop.f32.mrb[0].mxu0
        %1914 = vmatprep.mubr.bf16.mxu0 0
        %1915 = vmatmul.mubr.bf16.gmra.mrb[0].mxu0 %v771
        %v1916 = vpop.f32.mrb[0].mxu0
        %v1917 = vadd.f32 0.0, %v1916
        %v1918 = vpop.f32.mrb[0].mxu0
        %v1919 = vpop.f32.mrb[0].mxu0
        %v1920 = vadd.f32 0.0, %v1919
        %v1921 = vpop.f32.mrb[0].mxu0
        %1922 = vmatprep.mubr.bf16.mxu0 0
        %1923 = vmatmul.mubr.bf16.gmra.mrb[0].mxu0 %v772
        %v1924 = vpop.f32.mrb[0].mxu0
        %v1925 = vadd.f32 0.0, %v1924
        %v1926 = vpop.f32.mrb[0].mxu0
        %v1927 = vpop.f32.mrb[0].mxu0
        %v1928 = vadd.f32 0.0, %v1927
        %v1929 = vpop.f32.mrb[0].mxu0
        %1930 = vmatprep.mubr.bf16.mxu0 0
        %1931 = vmatmul.mubr.bf16.gmra.mrb[0].mxu0 %v773
        %v1932 = vpop.f32.mrb[0].mxu0
        %v1933 = vadd.f32 0.0, %v1932
        %v1934 = vpop.f32.mrb[0].mxu0
        %v1935 = vpop.f32.mrb[0].mxu0
        %v1936 = vadd.f32 0.0, %v1935
        %v1937 = vpop.f32.mrb[0].mxu0
        %1938 = vmatprep.mubr.bf16.mxu0 0
        %1939 = vmatmul.mubr.bf16.gmra.mrb[0].mxu0 %v774
        %v1940 = vpop.f32.mrb[0].mxu0
        %v1941 = vadd.f32 0.0, %v1940
        %v1942 = vpop.f32.mrb[0].mxu0
        %v1943 = vpop.f32.mrb[0].mxu0
        %v1944 = vadd.f32 0.0, %v1943
        %v1945 = vpop.f32.mrb[0].mxu0
        %1946 = vmatprep.mubr.bf16.mxu0 0
        %1947 = vmatmul.mubr.bf16.gmra.mrb[0].mxu0 %v775
        %v1948 = vpop.f32.mrb[0].mxu0
        %v1949 = vadd.f32 0.0, %v1948
        %v1950 = vpop.f32.mrb[0].mxu0
        %v1951 = vpop.f32.mrb[0].mxu0
        %v1952 = vadd.f32 0.0, %v1951
        %v1953 = vpop.f32.mrb[0].mxu0
        %1954 = vmatprep.mubr.bf16.mxu0 0
        %1955 = vmatmul.mubr.bf16.gmra.mrb[0].mxu0 %v776
        %v1956 = vpop.f32.mrb[0].mxu0
        %v1957 = vadd.f32 0.0, %v1956
        %v1958 = vpop.f32.mrb[0].mxu0
        %v1959 = vpop.f32.mrb[0].mxu0
        %v1960 = vadd.f32 0.0, %v1959
        %v1961 = vpop.f32.mrb[0].mxu0
        %1962 = vmatprep.mubr.bf16.mxu0 0
        %1963 = vmatmul.mubr.bf16.gmra.mrb[0].mxu0 %v777
        %v1964 = vpop.f32.mrb[0].mxu0
        %v1965 = vadd.f32 0.0, %v1964
        %v1966 = vpop.f32.mrb[0].mxu0
        %v1967 = vpop.f32.mrb[0].mxu0
        %v1968 = vadd.f32 0.0, %v1967
        %v1969 = vpop.f32.mrb[0].mxu0
        %1970 = vmatprep.mubr.bf16.mxu0 0
        %1971 = vmatmul.mubr.bf16.gmra.mrb[0].mxu0 %v778
        %v1972 = vpop.f32.mrb[0].mxu0
        %v1973 = vadd.f32 0.0, %v1972
        %v1974 = vpop.f32.mrb[0].mxu0
        %v1975 = vpop.f32.mrb[0].mxu0
        %v1976 = vadd.f32 0.0, %v1975
        %v1977 = vpop.f32.mrb[0].mxu0
        %1978 = vmatprep.mubr.bf16.mxu0 0
        %1979 = vmatmul.mubr.bf16.gmra.mrb[0].mxu0 %v779
        %v1980 = vpop.f32.mrb[0].mxu0
        %v1981 = vadd.f32 0.0, %v1980
        %v1982 = vpop.f32.mrb[0].mxu0
        %v1983 = vpop.f32.mrb[0].mxu0
        %v1984 = vadd.f32 0.0, %v1983
        %v1985 = vpop.f32.mrb[0].mxu0
        %1986 = vmatprep.mubr.bf16.mxu0 0
        %1987 = vmatmul.mubr.bf16.gmra.mrb[0].mxu0 %v780
        %v1988 = vpop.f32.mrb[0].mxu0
        %v1989 = vadd.f32 0.0, %v1988
        %v1990 = vpop.f32.mrb[0].mxu0
        %v1991 = vpop.f32.mrb[0].mxu0
        %v1992 = vadd.f32 0.0, %v1991
        %v1993 = vpop.f32.mrb[0].mxu0
        %1994 = vmatprep.mubr.bf16.mxu0 0
        %1995 = vmatmul.mubr.bf16.gmra.mrb[0].mxu0 %v781
        %v1996 = vpop.f32.mrb[0].mxu0
        %v1997 = vadd.f32 0.0, %v1996
        %v1998 = vpop.f32.mrb[0].mxu0
        %v1999 = vpop.f32.mrb[0].mxu0
        %v2000 = vadd.f32 0.0, %v1999
        %v2001 = vpop.f32.mrb[0].mxu0
        %2002 = vmatprep.mubr.bf16.mxu0 0
        %2003 = vmatmul.mubr.bf16.gmra.mrb[0].mxu0 %v782
        %v2004 = vpop.f32.mrb[0].mxu0
        %v2005 = vadd.f32 0.0, %v2004
        %v2006 = vpop.f32.mrb[0].mxu0
        %v2007 = vpop.f32.mrb[0].mxu0
        %v2008 = vadd.f32 0.0, %v2007
        %v2009 = vpop.f32.mrb[0].mxu0
        %2010 = vmatprep.mubr.bf16.mxu0 0
        %2011 = vmatmul.mubr.bf16.gmra.mrb[0].mxu0 %v783
        %v2012 = vpop.f32.mrb[0].mxu0
        %v2013 = vadd.f32 0.0, %v2012
        %v2014 = vpop.f32.mrb[0].mxu0
        %v2015 = vpop.f32.mrb[0].mxu0
        %v2016 = vadd.f32 0.0, %v2015
        %v2017 = vpop.f32.mrb[0].mxu0
        %2018 = vmatprep.mubr.bf16.mxu0 0
        %2019 = vmatmul.mubr.bf16.gmra.mrb[0].mxu0 %v784
        %v2020 = vpop.f32.mrb[0].mxu0
        %v2021 = vadd.f32 0.0, %v2020
        %v2022 = vpop.f32.mrb[0].mxu0
        %v2023 = vpop.f32.mrb[0].mxu0
        %v2024 = vadd.f32 0.0, %v2023
        %v2025 = vpop.f32.mrb[0].mxu0
        %2026 = vmatprep.mubr.bf16.mxu0 0
        %2027 = vmatmul.mubr.bf16.gmra.mrb[0].mxu0 %v1825
        %v2028 = vpop.f32.mrb[0].mxu0
        %v2029 = vadd.f32 0.0, %v2028
        %v2030 = vpop.f32.mrb[0].mxu0
        %v2031 = vpop.f32.mrb[0].mxu0
        %v2032 = vadd.f32 0.0, %v2031
        %v2033 = vpop.f32.mrb[0].mxu0
        %2034 = vdwg.mxu0
        %v2035 = vadd.f32 %v1783, %v1909
        %v2036 = vadd.f32 %v1784, %v1912
        %v2037 = vadd.f32 %v1785, %v1917
        %v2038 = vadd.f32 %v1786, %v1920
        %v2039 = vadd.f32 %v1787, %v1925
        %v2040 = vadd.f32 %v1788, %v1928
        %v2041 = vadd.f32 %v1789, %v1933
        %v2042 = vadd.f32 %v1790, %v1936
        %v2043 = vadd.f32 %v1791, %v1941
        %v2044 = vadd.f32 %v1792, %v1944
        %v2045 = vadd.f32 %v1793, %v1949
        %v2046 = vadd.f32 %v1794, %v1952
        %v2047 = vadd.f32 %v1795, %v1957
        %v2048 = vadd.f32 %v1796, %v1960
        %v2049 = vadd.f32 %v1797, %v1965
        %v2050 = vadd.f32 %v1798, %v1968
        %v2051 = vadd.f32 %v1799, %v1973
        %v2052 = vadd.f32 %v1800, %v1976
        %v2053 = vadd.f32 %v1801, %v1981
        %v2054 = vadd.f32 %v1802, %v1984
        %v2055 = vadd.f32 %v1803, %v1989
        %v2056 = vadd.f32 %v1804, %v1992
        %v2057 = vadd.f32 %v1805, %v1997
        %v2058 = vadd.f32 %v1806, %v2000
        %v2059 = vadd.f32 %v1807, %v2005
        %v2060 = vadd.f32 %v1808, %v2008
        %v2061 = vadd.f32 %v1809, %v2013
        %v2062 = vadd.f32 %v1810, %v2016
        %v2063 = vadd.f32 %v1811, %v2021
        %v2064 = vadd.f32 %v1812, %v2024
        %v2065 = vadd.f32 %v1813, %v2029
        %v2066 = vadd.f32 %v1814, %v2032
        %v2067 = vrot.slane %v442, 2
        %v2068 = vrot.slane %v443, 2
        %v2069 = vsel %vm1203, %v2067, %v2068
        %v2070 = vrot.slane %v444, 2
        %v2071 = vsel %vm1203, %v2068, %v2070
        %v2074 = vpack.c.bf16 %v2071, %v2069
        %v2091 = vunpack.c.l.b16 %v528
        %v2092 = vunpack.c.l.b16 %v529
        %v2093 = vunpack.c.l.b16 %v530
        %v2094 = vunpack.c.l.b16 %v531
        %v2095 = vunpack.c.l.b16 %v532
        %v2096 = vunpack.c.l.b16 %v533
        %v2097 = vunpack.c.l.b16 %v534
        %v2098 = vunpack.c.l.b16 %v535
        %v2099 = vunpack.c.l.b16 %v536
        %v2100 = vunpack.c.l.b16 %v537
        %v2101 = vunpack.c.l.b16 %v538
        %v2102 = vunpack.c.l.b16 %v539
        %v2103 = vunpack.c.l.b16 %v540
        %v2104 = vunpack.c.l.b16 %v541
        %v2105 = vunpack.c.l.b16 %v542
        %v2106 = vunpack.c.l.b16 %v543
        %v2107 = vpack.c.b16 %v2092, %v2091
        %v2108 = vpack.c.b16 %v2094, %v2093
        %v2109 = vpack.c.b16 %v2096, %v2095
        %v2110 = vpack.c.b16 %v2098, %v2097
        %v2111 = vpack.c.b16 %v2100, %v2099
        %v2112 = vpack.c.b16 %v2102, %v2101
        %v2113 = vpack.c.b16 %v2104, %v2103
        %v2114 = vpack.c.b16 %v2106, %v2105
        %2123 = vmatprep.subr.bf16.mxu0 0
        %2124 = vmatpush1.bf16.msra.mxu0 %v2107
        %2125 = vmatprep.subr.bf16.mxu0 0
        %2126 = vmatpush1.bf16.msra.mxu0 %v2108
        %2127 = vmatprep.subr.bf16.mxu0 0
        %2128 = vmatpush1.bf16.msra.mxu0 %v2109
        %2129 = vmatprep.subr.bf16.mxu0 0
        %2130 = vmatpush1.bf16.msra.mxu0 %v2110
        %2131 = vmatprep.subr.bf16.mxu0 0
        %2132 = vmatpush1.bf16.msra.mxu0 %v2111
        %2133 = vmatprep.subr.bf16.mxu0 0
        %2134 = vmatpush1.bf16.msra.mxu0 %v2112
        %2135 = vmatprep.subr.bf16.mxu0 0
        %2136 = vmatpush1.bf16.msra.mxu0 %v2113
        %2137 = vmatprep.subr.bf16.mxu0 0
        %2138 = vmatpush1.bf16.msra.mxu0 %v2114
        %2139 = vmatprep.subr.bf16.mxu0 0
        %2140 = vmatpush1.bf16.msra.mxu0 0
        %2141 = vmatprep.subr.bf16.mxu0 0
        %2142 = vmatpush1.bf16.msra.mxu0 0
        %2143 = vmatprep.subr.bf16.mxu0 0
        %2144 = vmatpush1.bf16.msra.mxu0 0
        %2145 = vmatprep.subr.bf16.mxu0 0
        %2146 = vmatpush1.bf16.msra.mxu0 0
        %2147 = vmatprep.subr.bf16.mxu0 0
        %2148 = vmatpush1.bf16.msra.mxu0 0
        %2149 = vmatprep.subr.bf16.mxu0 0
        %2150 = vmatpush1.bf16.msra.mxu0 0
        %2151 = vmatprep.subr.bf16.mxu0 0
        %2152 = vmatpush1.bf16.msra.mxu0 0
        %2153 = vmatprep.subr.bf16.mxu0 0
        %2154 = vmatpush1.bf16.msra.mxu0 0
        %2155 = vmatprep.mubr.bf16.mxu0 0
        %2156 = vmatmul.mubr.bf16.gmra.mrb[0].mxu0 %v1317
        %v2157 = vpop.f32.mrb[0].mxu0
        %v2158 = vadd.f32 0.0, %v2157
        %v2159 = vpop.f32.mrb[0].mxu0
        %v2160 = vpop.f32.mrb[0].mxu0
        %v2161 = vadd.f32 0.0, %v2160
        %v2162 = vpop.f32.mrb[0].mxu0
        %2163 = vmatprep.mubr.bf16.mxu0 0
        %2164 = vmatmul.mubr.bf16.gmra.mrb[0].mxu0 %v1318
        %v2165 = vpop.f32.mrb[0].mxu0
        %v2166 = vadd.f32 0.0, %v2165
        %v2167 = vpop.f32.mrb[0].mxu0
        %v2168 = vpop.f32.mrb[0].mxu0
        %v2169 = vadd.f32 0.0, %v2168
        %v2170 = vpop.f32.mrb[0].mxu0
        %2171 = vmatprep.mubr.bf16.mxu0 0
        %2172 = vmatmul.mubr.bf16.gmra.mrb[0].mxu0 %v1319
        %v2173 = vpop.f32.mrb[0].mxu0
        %v2174 = vadd.f32 0.0, %v2173
        %v2175 = vpop.f32.mrb[0].mxu0
        %v2176 = vpop.f32.mrb[0].mxu0
        %v2177 = vadd.f32 0.0, %v2176
        %v2178 = vpop.f32.mrb[0].mxu0
        %2179 = vmatprep.mubr.bf16.mxu0 0
        %2180 = vmatmul.mubr.bf16.gmra.mrb[0].mxu0 %v1320
        %v2181 = vpop.f32.mrb[0].mxu0
        %v2182 = vadd.f32 0.0, %v2181
        %v2183 = vpop.f32.mrb[0].mxu0
        %v2184 = vpop.f32.mrb[0].mxu0
        %v2185 = vadd.f32 0.0, %v2184
        %v2186 = vpop.f32.mrb[0].mxu0
        %2187 = vmatprep.mubr.bf16.mxu0 0
        %2188 = vmatmul.mubr.bf16.gmra.mrb[0].mxu0 %v1321
        %v2189 = vpop.f32.mrb[0].mxu0
        %v2190 = vadd.f32 0.0, %v2189
        %v2191 = vpop.f32.mrb[0].mxu0
        %v2192 = vpop.f32.mrb[0].mxu0
        %v2193 = vadd.f32 0.0, %v2192
        %v2194 = vpop.f32.mrb[0].mxu0
        %2195 = vmatprep.mubr.bf16.mxu0 0
        %2196 = vmatmul.mubr.bf16.gmra.mrb[0].mxu0 %v1322
        %v2197 = vpop.f32.mrb[0].mxu0
        %v2198 = vadd.f32 0.0, %v2197
        %v2199 = vpop.f32.mrb[0].mxu0
        %v2200 = vpop.f32.mrb[0].mxu0
        %v2201 = vadd.f32 0.0, %v2200
        %v2202 = vpop.f32.mrb[0].mxu0
        %2203 = vmatprep.mubr.bf16.mxu0 0
        %2204 = vmatmul.mubr.bf16.gmra.mrb[0].mxu0 %v1323
        %v2205 = vpop.f32.mrb[0].mxu0
        %v2206 = vadd.f32 0.0, %v2205
        %v2207 = vpop.f32.mrb[0].mxu0
        %v2208 = vpop.f32.mrb[0].mxu0
        %v2209 = vadd.f32 0.0, %v2208
        %v2210 = vpop.f32.mrb[0].mxu0
        %2211 = vmatprep.mubr.bf16.mxu0 0
        %2212 = vmatmul.mubr.bf16.gmra.mrb[0].mxu0 %v1324
        %v2213 = vpop.f32.mrb[0].mxu0
        %v2214 = vadd.f32 0.0, %v2213
        %v2215 = vpop.f32.mrb[0].mxu0
        %v2216 = vpop.f32.mrb[0].mxu0
        %v2217 = vadd.f32 0.0, %v2216
        %v2218 = vpop.f32.mrb[0].mxu0
        %2219 = vmatprep.mubr.bf16.mxu0 0
        %2220 = vmatmul.mubr.bf16.gmra.mrb[0].mxu0 %v1325
        %v2221 = vpop.f32.mrb[0].mxu0
        %v2222 = vadd.f32 0.0, %v2221
        %v2223 = vpop.f32.mrb[0].mxu0
        %v2224 = vpop.f32.mrb[0].mxu0
        %v2225 = vadd.f32 0.0, %v2224
        %v2226 = vpop.f32.mrb[0].mxu0
        %2227 = vmatprep.mubr.bf16.mxu0 0
        %2228 = vmatmul.mubr.bf16.gmra.mrb[0].mxu0 %v1326
        %v2229 = vpop.f32.mrb[0].mxu0
        %v2230 = vadd.f32 0.0, %v2229
        %v2231 = vpop.f32.mrb[0].mxu0
        %v2232 = vpop.f32.mrb[0].mxu0
        %v2233 = vadd.f32 0.0, %v2232
        %v2234 = vpop.f32.mrb[0].mxu0
        %2235 = vmatprep.mubr.bf16.mxu0 0
        %2236 = vmatmul.mubr.bf16.gmra.mrb[0].mxu0 %v1327
        %v2237 = vpop.f32.mrb[0].mxu0
        %v2238 = vadd.f32 0.0, %v2237
        %v2239 = vpop.f32.mrb[0].mxu0
        %v2240 = vpop.f32.mrb[0].mxu0
        %v2241 = vadd.f32 0.0, %v2240
        %v2242 = vpop.f32.mrb[0].mxu0
        %2243 = vmatprep.mubr.bf16.mxu0 0
        %2244 = vmatmul.mubr.bf16.gmra.mrb[0].mxu0 %v1328
        %v2245 = vpop.f32.mrb[0].mxu0
        %v2246 = vadd.f32 0.0, %v2245
        %v2247 = vpop.f32.mrb[0].mxu0
        %v2248 = vpop.f32.mrb[0].mxu0
        %v2249 = vadd.f32 0.0, %v2248
        %v2250 = vpop.f32.mrb[0].mxu0
        %2251 = vmatprep.mubr.bf16.mxu0 0
        %2252 = vmatmul.mubr.bf16.gmra.mrb[0].mxu0 %v1329
        %v2253 = vpop.f32.mrb[0].mxu0
        %v2254 = vadd.f32 0.0, %v2253
        %v2255 = vpop.f32.mrb[0].mxu0
        %v2256 = vpop.f32.mrb[0].mxu0
        %v2257 = vadd.f32 0.0, %v2256
        %v2258 = vpop.f32.mrb[0].mxu0
        %2259 = vmatprep.mubr.bf16.mxu0 0
        %2260 = vmatmul.mubr.bf16.gmra.mrb[0].mxu0 %v1330
        %v2261 = vpop.f32.mrb[0].mxu0
        %v2262 = vadd.f32 0.0, %v2261
        %v2263 = vpop.f32.mrb[0].mxu0
        %v2264 = vpop.f32.mrb[0].mxu0
        %v2265 = vadd.f32 0.0, %v2264
        %v2266 = vpop.f32.mrb[0].mxu0
        %2267 = vmatprep.mubr.bf16.mxu0 0
        %2268 = vmatmul.mubr.bf16.gmra.mrb[0].mxu0 %v1331
        %v2269 = vpop.f32.mrb[0].mxu0
        %v2270 = vadd.f32 0.0, %v2269
        %v2271 = vpop.f32.mrb[0].mxu0
        %v2272 = vpop.f32.mrb[0].mxu0
        %v2273 = vadd.f32 0.0, %v2272
        %v2274 = vpop.f32.mrb[0].mxu0
        %2275 = vmatprep.mubr.bf16.mxu0 0
        %2276 = vmatmul.mubr.bf16.gmra.mrb[0].mxu0 %v2074
        %v2277 = vpop.f32.mrb[0].mxu0
        %v2278 = vadd.f32 0.0, %v2277
        %v2279 = vpop.f32.mrb[0].mxu0
        %v2280 = vpop.f32.mrb[0].mxu0
        %v2281 = vadd.f32 0.0, %v2280
        %v2282 = vpop.f32.mrb[0].mxu0
        %2283 = vdwg.mxu0
        %v2284 = vadd.f32 %v2035, %v2158
        %v2285 = vadd.f32 %v2036, %v2161
        %v2286 = vadd.f32 %v2037, %v2166
        %v2287 = vadd.f32 %v2038, %v2169
        %v2288 = vadd.f32 %v2039, %v2174
        %v2289 = vadd.f32 %v2040, %v2177
        %v2290 = vadd.f32 %v2041, %v2182
        %v2291 = vadd.f32 %v2042, %v2185
        %v2292 = vadd.f32 %v2043, %v2190
        %v2293 = vadd.f32 %v2044, %v2193
        %v2294 = vadd.f32 %v2045, %v2198
        %v2295 = vadd.f32 %v2046, %v2201
        %v2296 = vadd.f32 %v2047, %v2206
        %v2297 = vadd.f32 %v2048, %v2209
        %v2298 = vadd.f32 %v2049, %v2214
        %v2299 = vadd.f32 %v2050, %v2217
        %v2300 = vadd.f32 %v2051, %v2222
        %v2301 = vadd.f32 %v2052, %v2225
        %v2302 = vadd.f32 %v2053, %v2230
        %v2303 = vadd.f32 %v2054, %v2233
        %v2304 = vadd.f32 %v2055, %v2238
        %v2305 = vadd.f32 %v2056, %v2241
        %v2306 = vadd.f32 %v2057, %v2246
        %v2307 = vadd.f32 %v2058, %v2249
        %v2308 = vadd.f32 %v2059, %v2254
        %v2309 = vadd.f32 %v2060, %v2257
        %v2310 = vadd.f32 %v2061, %v2262
        %v2311 = vadd.f32 %v2062, %v2265
        %v2312 = vadd.f32 %v2063, %v2270
        %v2313 = vadd.f32 %v2064, %v2273
        %v2314 = vadd.f32 %v2065, %v2278
        %v2315 = vadd.f32 %v2066, %v2281
        %v2316 = vpack.c.bf16 %v446, %v445
        %v2333 = vunpack.c.l.b16 %v544
        %v2334 = vunpack.c.l.b16 %v545
        %v2335 = vunpack.c.l.b16 %v546
        %v2336 = vunpack.c.l.b16 %v547
        %v2337 = vunpack.c.l.b16 %v548
        %v2338 = vunpack.c.l.b16 %v549
        %v2339 = vunpack.c.l.b16 %v550
        %v2340 = vunpack.c.l.b16 %v551
        %v2341 = vunpack.c.l.b16 %v552
        %v2342 = vunpack.c.l.b16 %v553
        %v2343 = vunpack.c.l.b16 %v554
        %v2344 = vunpack.c.l.b16 %v555
        %v2345 = vunpack.c.l.b16 %v556
        %v2346 = vunpack.c.l.b16 %v557
        %v2347 = vunpack.c.l.b16 %v558
        %v2348 = vunpack.c.l.b16 %v559
        %v2349 = vpack.c.b16 %v2334, %v2333
        %v2350 = vpack.c.b16 %v2336, %v2335
        %v2351 = vpack.c.b16 %v2338, %v2337
        %v2352 = vpack.c.b16 %v2340, %v2339
        %v2353 = vpack.c.b16 %v2342, %v2341
        %v2354 = vpack.c.b16 %v2344, %v2343
        %v2355 = vpack.c.b16 %v2346, %v2345
        %v2356 = vpack.c.b16 %v2348, %v2347
        %2365 = vmatprep.subr.bf16.mxu0 0
        %2366 = vmatpush1.bf16.msra.mxu0 %v2349
        %2367 = vmatprep.subr.bf16.mxu0 0
        %2368 = vmatpush1.bf16.msra.mxu0 %v2350
        %2369 = vmatprep.subr.bf16.mxu0 0
        %2370 = vmatpush1.bf16.msra.mxu0 %v2351
        %2371 = vmatprep.subr.bf16.mxu0 0
        %2372 = vmatpush1.bf16.msra.mxu0 %v2352
        %2373 = vmatprep.subr.bf16.mxu0 0
        %2374 = vmatpush1.bf16.msra.mxu0 %v2353
        %2375 = vmatprep.subr.bf16.mxu0 0
        %2376 = vmatpush1.bf16.msra.mxu0 %v2354
        %2377 = vmatprep.subr.bf16.mxu0 0
        %2378 = vmatpush1.bf16.msra.mxu0 %v2355
        %2379 = vmatprep.subr.bf16.mxu0 0
        %2380 = vmatpush1.bf16.msra.mxu0 %v2356
        %2381 = vmatprep.subr.bf16.mxu0 0
        %2382 = vmatpush1.bf16.msra.mxu0 0
        %2383 = vmatprep.subr.bf16.mxu0 0
        %2384 = vmatpush1.bf16.msra.mxu0 0
        %2385 = vmatprep.subr.bf16.mxu0 0
        %2386 = vmatpush1.bf16.msra.mxu0 0
        %2387 = vmatprep.subr.bf16.mxu0 0
        %2388 = vmatpush1.bf16.msra.mxu0 0
        %2389 = vmatprep.subr.bf16.mxu0 0
        %2390 = vmatpush1.bf16.msra.mxu0 0
        %2391 = vmatprep.subr.bf16.mxu0 0
        %2392 = vmatpush1.bf16.msra.mxu0 0
        %2393 = vmatprep.subr.bf16.mxu0 0
        %2394 = vmatpush1.bf16.msra.mxu0 0
        %2395 = vmatprep.subr.bf16.mxu0 0
        %2396 = vmatpush1.bf16.msra.mxu0 0
        %2397 = vmatprep.mubr.bf16.mxu0 0
        %2398 = vmatmul.mubr.bf16.gmra.mrb[0].mxu0 %v594
        %v2399 = vpop.f32.mrb[0].mxu0
        %v2400 = vadd.f32 0.0, %v2399
        %v2401 = vpop.f32.mrb[0].mxu0
        %v2402 = vpop.f32.mrb[0].mxu0
        %v2403 = vadd.f32 0.0, %v2402
        %v2404 = vpop.f32.mrb[0].mxu0
        %2405 = vmatprep.mubr.bf16.mxu0 0
        %2406 = vmatmul.mubr.bf16.gmra.mrb[0].mxu0 %v595
        %v2407 = vpop.f32.mrb[0].mxu0
        %v2408 = vadd.f32 0.0, %v2407
        %v2409 = vpop.f32.mrb[0].mxu0
        %v2410 = vpop.f32.mrb[0].mxu0
        %v2411 = vadd.f32 0.0, %v2410
        %v2412 = vpop.f32.mrb[0].mxu0
        %2413 = vmatprep.mubr.bf16.mxu0 0
        %2414 = vmatmul.mubr.bf16.gmra.mrb[0].mxu0 %v596
        %v2415 = vpop.f32.mrb[0].mxu0
        %v2416 = vadd.f32 0.0, %v2415
        %v2417 = vpop.f32.mrb[0].mxu0
        %v2418 = vpop.f32.mrb[0].mxu0
        %v2419 = vadd.f32 0.0, %v2418
        %v2420 = vpop.f32.mrb[0].mxu0
        %2421 = vmatprep.mubr.bf16.mxu0 0
        %2422 = vmatmul.mubr.bf16.gmra.mrb[0].mxu0 %v597
        %v2423 = vpop.f32.mrb[0].mxu0
        %v2424 = vadd.f32 0.0, %v2423
        %v2425 = vpop.f32.mrb[0].mxu0
        %v2426 = vpop.f32.mrb[0].mxu0
        %v2427 = vadd.f32 0.0, %v2426
        %v2428 = vpop.f32.mrb[0].mxu0
        %2429 = vmatprep.mubr.bf16.mxu0 0
        %2430 = vmatmul.mubr.bf16.gmra.mrb[0].mxu0 %v598
        %v2431 = vpop.f32.mrb[0].mxu0
        %v2432 = vadd.f32 0.0, %v2431
        %v2433 = vpop.f32.mrb[0].mxu0
        %v2434 = vpop.f32.mrb[0].mxu0
        %v2435 = vadd.f32 0.0, %v2434
        %v2436 = vpop.f32.mrb[0].mxu0
        %2437 = vmatprep.mubr.bf16.mxu0 0
        %2438 = vmatmul.mubr.bf16.gmra.mrb[0].mxu0 %v599
        %v2439 = vpop.f32.mrb[0].mxu0
        %v2440 = vadd.f32 0.0, %v2439
        %v2441 = vpop.f32.mrb[0].mxu0
        %v2442 = vpop.f32.mrb[0].mxu0
        %v2443 = vadd.f32 0.0, %v2442
        %v2444 = vpop.f32.mrb[0].mxu0
        %2445 = vmatprep.mubr.bf16.mxu0 0
        %2446 = vmatmul.mubr.bf16.gmra.mrb[0].mxu0 %v600
        %v2447 = vpop.f32.mrb[0].mxu0
        %v2448 = vadd.f32 0.0, %v2447
        %v2449 = vpop.f32.mrb[0].mxu0
        %v2450 = vpop.f32.mrb[0].mxu0
        %v2451 = vadd.f32 0.0, %v2450
        %v2452 = vpop.f32.mrb[0].mxu0
        %2453 = vmatprep.mubr.bf16.mxu0 0
        %2454 = vmatmul.mubr.bf16.gmra.mrb[0].mxu0 %v601
        %v2455 = vpop.f32.mrb[0].mxu0
        %v2456 = vadd.f32 0.0, %v2455
        %v2457 = vpop.f32.mrb[0].mxu0
        %v2458 = vpop.f32.mrb[0].mxu0
        %v2459 = vadd.f32 0.0, %v2458
        %v2460 = vpop.f32.mrb[0].mxu0
        %2461 = vmatprep.mubr.bf16.mxu0 0
        %2462 = vmatmul.mubr.bf16.gmra.mrb[0].mxu0 %v602
        %v2463 = vpop.f32.mrb[0].mxu0
        %v2464 = vadd.f32 0.0, %v2463
        %v2465 = vpop.f32.mrb[0].mxu0
        %v2466 = vpop.f32.mrb[0].mxu0
        %v2467 = vadd.f32 0.0, %v2466
        %v2468 = vpop.f32.mrb[0].mxu0
        %2469 = vmatprep.mubr.bf16.mxu0 0
        %2470 = vmatmul.mubr.bf16.gmra.mrb[0].mxu0 %v603
        %v2471 = vpop.f32.mrb[0].mxu0
        %v2472 = vadd.f32 0.0, %v2471
        %v2473 = vpop.f32.mrb[0].mxu0
        %v2474 = vpop.f32.mrb[0].mxu0
        %v2475 = vadd.f32 0.0, %v2474
        %v2476 = vpop.f32.mrb[0].mxu0
        %2477 = vmatprep.mubr.bf16.mxu0 0
        %2478 = vmatmul.mubr.bf16.gmra.mrb[0].mxu0 %v604
        %v2479 = vpop.f32.mrb[0].mxu0
        %v2480 = vadd.f32 0.0, %v2479
        %v2481 = vpop.f32.mrb[0].mxu0
        %v2482 = vpop.f32.mrb[0].mxu0
        %v2483 = vadd.f32 0.0, %v2482
        %v2484 = vpop.f32.mrb[0].mxu0
        %2485 = vmatprep.mubr.bf16.mxu0 0
        %2486 = vmatmul.mubr.bf16.gmra.mrb[0].mxu0 %v605
        %v2487 = vpop.f32.mrb[0].mxu0
        %v2488 = vadd.f32 0.0, %v2487
        %v2489 = vpop.f32.mrb[0].mxu0
        %v2490 = vpop.f32.mrb[0].mxu0
        %v2491 = vadd.f32 0.0, %v2490
        %v2492 = vpop.f32.mrb[0].mxu0
        %2493 = vmatprep.mubr.bf16.mxu0 0
        %2494 = vmatmul.mubr.bf16.gmra.mrb[0].mxu0 %v606
        %v2495 = vpop.f32.mrb[0].mxu0
        %v2496 = vadd.f32 0.0, %v2495
        %v2497 = vpop.f32.mrb[0].mxu0
        %v2498 = vpop.f32.mrb[0].mxu0
        %v2499 = vadd.f32 0.0, %v2498
        %v2500 = vpop.f32.mrb[0].mxu0
        %2501 = vmatprep.mubr.bf16.mxu0 0
        %2502 = vmatmul.mubr.bf16.gmra.mrb[0].mxu0 %v607
        %v2503 = vpop.f32.mrb[0].mxu0
        %v2504 = vadd.f32 0.0, %v2503
        %v2505 = vpop.f32.mrb[0].mxu0
        %v2506 = vpop.f32.mrb[0].mxu0
        %v2507 = vadd.f32 0.0, %v2506
        %v2508 = vpop.f32.mrb[0].mxu0
        %2509 = vmatprep.mubr.bf16.mxu0 0
        %2510 = vmatmul.mubr.bf16.gmra.mrb[0].mxu0 %v1573
        %v2511 = vpop.f32.mrb[0].mxu0
        %v2512 = vadd.f32 0.0, %v2511
        %v2513 = vpop.f32.mrb[0].mxu0
        %v2514 = vpop.f32.mrb[0].mxu0
        %v2515 = vadd.f32 0.0, %v2514
        %v2516 = vpop.f32.mrb[0].mxu0
        %2517 = vmatprep.mubr.bf16.mxu0 0
        %2518 = vmatmul.mubr.bf16.gmra.mrb[0].mxu0 %v2316
        %v2519 = vpop.f32.mrb[0].mxu0
        %v2520 = vadd.f32 0.0, %v2519
        %v2521 = vpop.f32.mrb[0].mxu0
        %v2522 = vpop.f32.mrb[0].mxu0
        %v2523 = vadd.f32 0.0, %v2522
        %v2524 = vpop.f32.mrb[0].mxu0
        %2525 = vdwg.mxu0
        %v2526 = vadd.f32 %v2284, %v2400
        %v2527 = vadd.f32 %v2285, %v2403
        %v2528 = vadd.f32 %v2286, %v2408
        %v2529 = vadd.f32 %v2287, %v2411
        %v2530 = vadd.f32 %v2288, %v2416
        %v2531 = vadd.f32 %v2289, %v2419
        %v2532 = vadd.f32 %v2290, %v2424
        %v2533 = vadd.f32 %v2291, %v2427
        %v2534 = vadd.f32 %v2292, %v2432
        %v2535 = vadd.f32 %v2293, %v2435
        %v2536 = vadd.f32 %v2294, %v2440
        %v2537 = vadd.f32 %v2295, %v2443
        %v2538 = vadd.f32 %v2296, %v2448
        %v2539 = vadd.f32 %v2297, %v2451
        %v2540 = vadd.f32 %v2298, %v2456
        %v2541 = vadd.f32 %v2299, %v2459
        %v2542 = vadd.f32 %v2300, %v2464
        %v2543 = vadd.f32 %v2301, %v2467
        %v2544 = vadd.f32 %v2302, %v2472
        %v2545 = vadd.f32 %v2303, %v2475
        %v2546 = vadd.f32 %v2304, %v2480
        %v2547 = vadd.f32 %v2305, %v2483
        %v2548 = vadd.f32 %v2306, %v2488
        %v2549 = vadd.f32 %v2307, %v2491
        %v2550 = vadd.f32 %v2308, %v2496
        %v2551 = vadd.f32 %v2309, %v2499
        %v2552 = vadd.f32 %v2310, %v2504
        %v2553 = vadd.f32 %v2311, %v2507
        %v2554 = vadd.f32 %v2312, %v2512
        %v2555 = vadd.f32 %v2313, %v2515
        %v2556 = vadd.f32 %v2314, %v2520
        %v2557 = vadd.f32 %v2315, %v2523
        %v2561 = vrot.slane %v445, 1
        %v2562 = vrot.slane %v446, 1
        %v2563 = vsel %vm656, %v2561, %v2562
        %v2564 = vrot.slane %v447, 1
        %v2565 = vsel %vm656, %v2562, %v2564
        %v2568 = vpack.c.bf16 %v2565, %v2563
        %v2585 = vunpack.c.l.b16 %v560
        %v2586 = vunpack.c.l.b16 %v561
        %v2587 = vunpack.c.l.b16 %v562
        %v2588 = vunpack.c.l.b16 %v563
        %v2589 = vunpack.c.l.b16 %v564
        %v2590 = vunpack.c.l.b16 %v565
        %v2591 = vunpack.c.l.b16 %v566
        %v2592 = vunpack.c.l.b16 %v567
        %v2593 = vunpack.c.l.b16 %v568
        %v2594 = vunpack.c.l.b16 %v569
        %v2595 = vunpack.c.l.b16 %v570
        %v2596 = vunpack.c.l.b16 %v571
        %v2597 = vunpack.c.l.b16 %v572
        %v2598 = vunpack.c.l.b16 %v573
        %v2599 = vunpack.c.l.b16 %v574
        %v2600 = vunpack.c.l.b16 %v575
        %v2601 = vpack.c.b16 %v2586, %v2585
        %v2602 = vpack.c.b16 %v2588, %v2587
        %v2603 = vpack.c.b16 %v2590, %v2589
        %v2604 = vpack.c.b16 %v2592, %v2591
        %v2605 = vpack.c.b16 %v2594, %v2593
        %v2606 = vpack.c.b16 %v2596, %v2595
        %v2607 = vpack.c.b16 %v2598, %v2597
        %v2608 = vpack.c.b16 %v2600, %v2599
        %2617 = vmatprep.subr.bf16.mxu0 0
        %2618 = vmatpush1.bf16.msra.mxu0 %v2601
        %2619 = vmatprep.subr.bf16.mxu0 0
        %2620 = vmatpush1.bf16.msra.mxu0 %v2602
        %2621 = vmatprep.subr.bf16.mxu0 0
        %2622 = vmatpush1.bf16.msra.mxu0 %v2603
        %2623 = vmatprep.subr.bf16.mxu0 0
        %2624 = vmatpush1.bf16.msra.mxu0 %v2604
        %2625 = vmatprep.subr.bf16.mxu0 0
        %2626 = vmatpush1.bf16.msra.mxu0 %v2605
        %2627 = vmatprep.subr.bf16.mxu0 0
        %2628 = vmatpush1.bf16.msra.mxu0 %v2606
        %2629 = vmatprep.subr.bf16.mxu0 0
        %2630 = vmatpush1.bf16.msra.mxu0 %v2607
        %2631 = vmatprep.subr.bf16.mxu0 0
        %2632 = vmatpush1.bf16.msra.mxu0 %v2608
        %2633 = vmatprep.subr.bf16.mxu0 0
        %2634 = vmatpush1.bf16.msra.mxu0 0
        %2635 = vmatprep.subr.bf16.mxu0 0
        %2636 = vmatpush1.bf16.msra.mxu0 0
        %2637 = vmatprep.subr.bf16.mxu0 0
        %2638 = vmatpush1.bf16.msra.mxu0 0
        %2639 = vmatprep.subr.bf16.mxu0 0
        %2640 = vmatpush1.bf16.msra.mxu0 0
        %2641 = vmatprep.subr.bf16.mxu0 0
        %2642 = vmatpush1.bf16.msra.mxu0 0
        %2643 = vmatprep.subr.bf16.mxu0 0
        %2644 = vmatpush1.bf16.msra.mxu0 0
        %2645 = vmatprep.subr.bf16.mxu0 0
        %2646 = vmatpush1.bf16.msra.mxu0 0
        %2647 = vmatprep.subr.bf16.mxu0 0
        %2648 = vmatpush1.bf16.msra.mxu0 0
        %2649 = vmatprep.mubr.bf16.mxu0 0
        %2650 = vmatmul.mubr.bf16.gmra.mrb[0].mxu0 %v771
        %v2651 = vpop.f32.mrb[0].mxu0
        %v2652 = vadd.f32 0.0, %v2651
        %v2653 = vpop.f32.mrb[0].mxu0
        %v2654 = vpop.f32.mrb[0].mxu0
        %v2655 = vadd.f32 0.0, %v2654
        %v2656 = vpop.f32.mrb[0].mxu0
        %2657 = vmatprep.mubr.bf16.mxu0 0
        %2658 = vmatmul.mubr.bf16.gmra.mrb[0].mxu0 %v772
        %v2659 = vpop.f32.mrb[0].mxu0
        %v2660 = vadd.f32 0.0, %v2659
        %v2661 = vpop.f32.mrb[0].mxu0
        %v2662 = vpop.f32.mrb[0].mxu0
        %v2663 = vadd.f32 0.0, %v2662
        %v2664 = vpop.f32.mrb[0].mxu0
        %2665 = vmatprep.mubr.bf16.mxu0 0
        %2666 = vmatmul.mubr.bf16.gmra.mrb[0].mxu0 %v773
        %v2667 = vpop.f32.mrb[0].mxu0
        %v2668 = vadd.f32 0.0, %v2667
        %v2669 = vpop.f32.mrb[0].mxu0
        %v2670 = vpop.f32.mrb[0].mxu0
        %v2671 = vadd.f32 0.0, %v2670
        %v2672 = vpop.f32.mrb[0].mxu0
        %2673 = vmatprep.mubr.bf16.mxu0 0
        %2674 = vmatmul.mubr.bf16.gmra.mrb[0].mxu0 %v774
        %v2675 = vpop.f32.mrb[0].mxu0
        %v2676 = vadd.f32 0.0, %v2675
        %v2677 = vpop.f32.mrb[0].mxu0
        %v2678 = vpop.f32.mrb[0].mxu0
        %v2679 = vadd.f32 0.0, %v2678
        %v2680 = vpop.f32.mrb[0].mxu0
        %2681 = vmatprep.mubr.bf16.mxu0 0
        %2682 = vmatmul.mubr.bf16.gmra.mrb[0].mxu0 %v775
        %v2683 = vpop.f32.mrb[0].mxu0
        %v2684 = vadd.f32 0.0, %v2683
        %v2685 = vpop.f32.mrb[0].mxu0
        %v2686 = vpop.f32.mrb[0].mxu0
        %v2687 = vadd.f32 0.0, %v2686
        %v2688 = vpop.f32.mrb[0].mxu0
        %2689 = vmatprep.mubr.bf16.mxu0 0
        %2690 = vmatmul.mubr.bf16.gmra.mrb[0].mxu0 %v776
        %v2691 = vpop.f32.mrb[0].mxu0
        %v2692 = vadd.f32 0.0, %v2691
        %v2693 = vpop.f32.mrb[0].mxu0
        %v2694 = vpop.f32.mrb[0].mxu0
        %v2695 = vadd.f32 0.0, %v2694
        %v2696 = vpop.f32.mrb[0].mxu0
        %2697 = vmatprep.mubr.bf16.mxu0 0
        %2698 = vmatmul.mubr.bf16.gmra.mrb[0].mxu0 %v777
        %v2699 = vpop.f32.mrb[0].mxu0
        %v2700 = vadd.f32 0.0, %v2699
        %v2701 = vpop.f32.mrb[0].mxu0
        %v2702 = vpop.f32.mrb[0].mxu0
        %v2703 = vadd.f32 0.0, %v2702
        %v2704 = vpop.f32.mrb[0].mxu0
        %2705 = vmatprep.mubr.bf16.mxu0 0
        %2706 = vmatmul.mubr.bf16.gmra.mrb[0].mxu0 %v778
        %v2707 = vpop.f32.mrb[0].mxu0
        %v2708 = vadd.f32 0.0, %v2707
        %v2709 = vpop.f32.mrb[0].mxu0
        %v2710 = vpop.f32.mrb[0].mxu0
        %v2711 = vadd.f32 0.0, %v2710
        %v2712 = vpop.f32.mrb[0].mxu0
        %2713 = vmatprep.mubr.bf16.mxu0 0
        %2714 = vmatmul.mubr.bf16.gmra.mrb[0].mxu0 %v779
        %v2715 = vpop.f32.mrb[0].mxu0
        %v2716 = vadd.f32 0.0, %v2715
        %v2717 = vpop.f32.mrb[0].mxu0
        %v2718 = vpop.f32.mrb[0].mxu0
        %v2719 = vadd.f32 0.0, %v2718
        %v2720 = vpop.f32.mrb[0].mxu0
        %2721 = vmatprep.mubr.bf16.mxu0 0
        %2722 = vmatmul.mubr.bf16.gmra.mrb[0].mxu0 %v780
        %v2723 = vpop.f32.mrb[0].mxu0
        %v2724 = vadd.f32 0.0, %v2723
        %v2725 = vpop.f32.mrb[0].mxu0
        %v2726 = vpop.f32.mrb[0].mxu0
        %v2727 = vadd.f32 0.0, %v2726
        %v2728 = vpop.f32.mrb[0].mxu0
        %2729 = vmatprep.mubr.bf16.mxu0 0
        %2730 = vmatmul.mubr.bf16.gmra.mrb[0].mxu0 %v781
        %v2731 = vpop.f32.mrb[0].mxu0
        %v2732 = vadd.f32 0.0, %v2731
        %v2733 = vpop.f32.mrb[0].mxu0
        %v2734 = vpop.f32.mrb[0].mxu0
        %v2735 = vadd.f32 0.0, %v2734
        %v2736 = vpop.f32.mrb[0].mxu0
        %2737 = vmatprep.mubr.bf16.mxu0 0
        %2738 = vmatmul.mubr.bf16.gmra.mrb[0].mxu0 %v782
        %v2739 = vpop.f32.mrb[0].mxu0
        %v2740 = vadd.f32 0.0, %v2739
        %v2741 = vpop.f32.mrb[0].mxu0
        %v2742 = vpop.f32.mrb[0].mxu0
        %v2743 = vadd.f32 0.0, %v2742
        %v2744 = vpop.f32.mrb[0].mxu0
        %2745 = vmatprep.mubr.bf16.mxu0 0
        %2746 = vmatmul.mubr.bf16.gmra.mrb[0].mxu0 %v783
        %v2747 = vpop.f32.mrb[0].mxu0
        %v2748 = vadd.f32 0.0, %v2747
        %v2749 = vpop.f32.mrb[0].mxu0
        %v2750 = vpop.f32.mrb[0].mxu0
        %v2751 = vadd.f32 0.0, %v2750
        %v2752 = vpop.f32.mrb[0].mxu0
        %2753 = vmatprep.mubr.bf16.mxu0 0
        %2754 = vmatmul.mubr.bf16.gmra.mrb[0].mxu0 %v784
        %v2755 = vpop.f32.mrb[0].mxu0
        %v2756 = vadd.f32 0.0, %v2755
        %v2757 = vpop.f32.mrb[0].mxu0
        %v2758 = vpop.f32.mrb[0].mxu0
        %v2759 = vadd.f32 0.0, %v2758
        %v2760 = vpop.f32.mrb[0].mxu0
        %2761 = vmatprep.mubr.bf16.mxu0 0
        %2762 = vmatmul.mubr.bf16.gmra.mrb[0].mxu0 %v1825
        %v2763 = vpop.f32.mrb[0].mxu0
        %v2764 = vadd.f32 0.0, %v2763
        %v2765 = vpop.f32.mrb[0].mxu0
        %v2766 = vpop.f32.mrb[0].mxu0
        %v2767 = vadd.f32 0.0, %v2766
        %v2768 = vpop.f32.mrb[0].mxu0
        %2769 = vmatprep.mubr.bf16.mxu0 0
        %2770 = vmatmul.mubr.bf16.gmra.mrb[0].mxu0 %v2568
        %v2771 = vpop.f32.mrb[0].mxu0
        %v2772 = vadd.f32 0.0, %v2771
        %v2773 = vpop.f32.mrb[0].mxu0
        %v2774 = vpop.f32.mrb[0].mxu0
        %v2775 = vadd.f32 0.0, %v2774
        %v2776 = vpop.f32.mrb[0].mxu0
        %2777 = vdwg.mxu0
        %v2778 = vadd.f32 %v2526, %v2652
        %v2779 = vadd.f32 %v2527, %v2655
        %v2780 = vadd.f32 %v2528, %v2660
        %v2781 = vadd.f32 %v2529, %v2663
        %v2782 = vadd.f32 %v2530, %v2668
        %v2783 = vadd.f32 %v2531, %v2671
        %v2784 = vadd.f32 %v2532, %v2676
        %v2785 = vadd.f32 %v2533, %v2679
        %v2786 = vadd.f32 %v2534, %v2684
        %v2787 = vadd.f32 %v2535, %v2687
        %v2788 = vadd.f32 %v2536, %v2692
        %v2789 = vadd.f32 %v2537, %v2695
        %v2790 = vadd.f32 %v2538, %v2700
        %v2791 = vadd.f32 %v2539, %v2703
        %v2792 = vadd.f32 %v2540, %v2708
        %v2793 = vadd.f32 %v2541, %v2711
        %v2794 = vadd.f32 %v2542, %v2716
        %v2795 = vadd.f32 %v2543, %v2719
        %v2796 = vadd.f32 %v2544, %v2724
        %v2797 = vadd.f32 %v2545, %v2727
        %v2798 = vadd.f32 %v2546, %v2732
        %v2799 = vadd.f32 %v2547, %v2735
        %v2800 = vadd.f32 %v2548, %v2740
        %v2801 = vadd.f32 %v2549, %v2743
        %v2802 = vadd.f32 %v2550, %v2748
        %v2803 = vadd.f32 %v2551, %v2751
        %v2804 = vadd.f32 %v2552, %v2756
        %v2805 = vadd.f32 %v2553, %v2759
        %v2806 = vadd.f32 %v2554, %v2764
        %v2807 = vadd.f32 %v2555, %v2767
        %v2808 = vadd.f32 %v2556, %v2772
        %v2809 = vadd.f32 %v2557, %v2775
        %v2810 = vrot.slane %v445, 2
        %v2811 = vrot.slane %v446, 2
        %v2812 = vsel %vm1203, %v2810, %v2811
        %v2813 = vrot.slane %v447, 2
        %v2814 = vsel %vm1203, %v2811, %v2813
        %v2817 = vpack.c.bf16 %v2814, %v2812
        %v2834 = vunpack.c.l.b16 %v576
        %v2835 = vunpack.c.l.b16 %v577
        %v2836 = vunpack.c.l.b16 %v578
        %v2837 = vunpack.c.l.b16 %v579
        %v2838 = vunpack.c.l.b16 %v580
        %v2839 = vunpack.c.l.b16 %v581
        %v2840 = vunpack.c.l.b16 %v582
        %v2841 = vunpack.c.l.b16 %v583
        %v2842 = vunpack.c.l.b16 %v584
        %v2843 = vunpack.c.l.b16 %v585
        %v2844 = vunpack.c.l.b16 %v586
        %v2845 = vunpack.c.l.b16 %v587
        %v2846 = vunpack.c.l.b16 %v588
        %v2847 = vunpack.c.l.b16 %v589
        %v2848 = vunpack.c.l.b16 %v590
        %v2849 = vunpack.c.l.b16 %v591
        %v2850 = vpack.c.b16 %v2835, %v2834
        %v2851 = vpack.c.b16 %v2837, %v2836
        %v2852 = vpack.c.b16 %v2839, %v2838
        %v2853 = vpack.c.b16 %v2841, %v2840
        %v2854 = vpack.c.b16 %v2843, %v2842
        %v2855 = vpack.c.b16 %v2845, %v2844
        %v2856 = vpack.c.b16 %v2847, %v2846
        %v2857 = vpack.c.b16 %v2849, %v2848
        %2866 = vmatprep.subr.bf16.mxu0 0
        %2867 = vmatpush1.bf16.msra.mxu0 %v2850
        %2868 = vmatprep.subr.bf16.mxu0 0
        %2869 = vmatpush1.bf16.msra.mxu0 %v2851
        %2870 = vmatprep.subr.bf16.mxu0 0
        %2871 = vmatpush1.bf16.msra.mxu0 %v2852
        %2872 = vmatprep.subr.bf16.mxu0 0
        %2873 = vmatpush1.bf16.msra.mxu0 %v2853
        %2874 = vmatprep.subr.bf16.mxu0 0
        %2875 = vmatpush1.bf16.msra.mxu0 %v2854
        %2876 = vmatprep.subr.bf16.mxu0 0
        %2877 = vmatpush1.bf16.msra.mxu0 %v2855
        %2878 = vmatprep.subr.bf16.mxu0 0
        %2879 = vmatpush1.bf16.msra.mxu0 %v2856
        %2880 = vmatprep.subr.bf16.mxu0 0
        %2881 = vmatpush1.bf16.msra.mxu0 %v2857
        %2882 = vmatprep.subr.bf16.mxu0 0
        %2883 = vmatpush1.bf16.msra.mxu0 0
        %2884 = vmatprep.subr.bf16.mxu0 0
        %2885 = vmatpush1.bf16.msra.mxu0 0
        %2886 = vmatprep.subr.bf16.mxu0 0
        %2887 = vmatpush1.bf16.msra.mxu0 0
        %2888 = vmatprep.subr.bf16.mxu0 0
        %2889 = vmatpush1.bf16.msra.mxu0 0
        %2890 = vmatprep.subr.bf16.mxu0 0
        %2891 = vmatpush1.bf16.msra.mxu0 0
        %2892 = vmatprep.subr.bf16.mxu0 0
        %2893 = vmatpush1.bf16.msra.mxu0 0
        %2894 = vmatprep.subr.bf16.mxu0 0
        %2895 = vmatpush1.bf16.msra.mxu0 0
        %2896 = vmatprep.subr.bf16.mxu0 0
        %2897 = vmatpush1.bf16.msra.mxu0 0
        %2898 = vmatprep.mubr.bf16.mxu0 0
        %2899 = vmatmul.mubr.bf16.gmra.mrb[0].mxu0 %v1318
        %v2900 = vpop.f32.mrb[0].mxu0
        %v2901 = vadd.f32 0.0, %v2900
        %v2902 = vpop.f32.mrb[0].mxu0
        %v2903 = vpop.f32.mrb[0].mxu0
        %v2904 = vadd.f32 0.0, %v2903
        %v2905 = vpop.f32.mrb[0].mxu0
        %2906 = vmatprep.mubr.bf16.mxu0 0
        %2907 = vmatmul.mubr.bf16.gmra.mrb[0].mxu0 %v1319
        %v2908 = vpop.f32.mrb[0].mxu0
        %v2909 = vadd.f32 0.0, %v2908
        %v2910 = vpop.f32.mrb[0].mxu0
        %v2911 = vpop.f32.mrb[0].mxu0
        %v2912 = vadd.f32 0.0, %v2911
        %v2913 = vpop.f32.mrb[0].mxu0
        %2914 = vmatprep.mubr.bf16.mxu0 0
        %2915 = vmatmul.mubr.bf16.gmra.mrb[0].mxu0 %v1320
        %v2916 = vpop.f32.mrb[0].mxu0
        %v2917 = vadd.f32 0.0, %v2916
        %v2918 = vpop.f32.mrb[0].mxu0
        %v2919 = vpop.f32.mrb[0].mxu0
        %v2920 = vadd.f32 0.0, %v2919
        %v2921 = vpop.f32.mrb[0].mxu0
        %2922 = vmatprep.mubr.bf16.mxu0 0
        %2923 = vmatmul.mubr.bf16.gmra.mrb[0].mxu0 %v1321
        %v2924 = vpop.f32.mrb[0].mxu0
        %v2925 = vadd.f32 0.0, %v2924
        %v2926 = vpop.f32.mrb[0].mxu0
        %v2927 = vpop.f32.mrb[0].mxu0
        %v2928 = vadd.f32 0.0, %v2927
        %v2929 = vpop.f32.mrb[0].mxu0
        %2930 = vmatprep.mubr.bf16.mxu0 0
        %2931 = vmatmul.mubr.bf16.gmra.mrb[0].mxu0 %v1322
        %v2932 = vpop.f32.mrb[0].mxu0
        %v2933 = vadd.f32 0.0, %v2932
        %v2934 = vpop.f32.mrb[0].mxu0
        %v2935 = vpop.f32.mrb[0].mxu0
        %v2936 = vadd.f32 0.0, %v2935
        %v2937 = vpop.f32.mrb[0].mxu0
        %2938 = vmatprep.mubr.bf16.mxu0 0
        %2939 = vmatmul.mubr.bf16.gmra.mrb[0].mxu0 %v1323
        %v2940 = vpop.f32.mrb[0].mxu0
        %v2941 = vadd.f32 0.0, %v2940
        %v2942 = vpop.f32.mrb[0].mxu0
        %v2943 = vpop.f32.mrb[0].mxu0
        %v2944 = vadd.f32 0.0, %v2943
        %v2945 = vpop.f32.mrb[0].mxu0
        %2946 = vmatprep.mubr.bf16.mxu0 0
        %2947 = vmatmul.mubr.bf16.gmra.mrb[0].mxu0 %v1324
        %v2948 = vpop.f32.mrb[0].mxu0
        %v2949 = vadd.f32 0.0, %v2948
        %v2950 = vpop.f32.mrb[0].mxu0
        %v2951 = vpop.f32.mrb[0].mxu0
        %v2952 = vadd.f32 0.0, %v2951
        %v2953 = vpop.f32.mrb[0].mxu0
        %2954 = vmatprep.mubr.bf16.mxu0 0
        %2955 = vmatmul.mubr.bf16.gmra.mrb[0].mxu0 %v1325
        %v2956 = vpop.f32.mrb[0].mxu0
        %v2957 = vadd.f32 0.0, %v2956
        %v2958 = vpop.f32.mrb[0].mxu0
        %v2959 = vpop.f32.mrb[0].mxu0
        %v2960 = vadd.f32 0.0, %v2959
        %v2961 = vpop.f32.mrb[0].mxu0
        %2962 = vmatprep.mubr.bf16.mxu0 0
        %2963 = vmatmul.mubr.bf16.gmra.mrb[0].mxu0 %v1326
        %v2964 = vpop.f32.mrb[0].mxu0
        %v2965 = vadd.f32 0.0, %v2964
        %v2966 = vpop.f32.mrb[0].mxu0
        %v2967 = vpop.f32.mrb[0].mxu0
        %v2968 = vadd.f32 0.0, %v2967
        %v2969 = vpop.f32.mrb[0].mxu0
        %2970 = vmatprep.mubr.bf16.mxu0 0
        %2971 = vmatmul.mubr.bf16.gmra.mrb[0].mxu0 %v1327
        %v2972 = vpop.f32.mrb[0].mxu0
        %v2973 = vadd.f32 0.0, %v2972
        %v2974 = vpop.f32.mrb[0].mxu0
        %v2975 = vpop.f32.mrb[0].mxu0
        %v2976 = vadd.f32 0.0, %v2975
        %v2977 = vpop.f32.mrb[0].mxu0
        %2978 = vmatprep.mubr.bf16.mxu0 0
        %2979 = vmatmul.mubr.bf16.gmra.mrb[0].mxu0 %v1328
        %v2980 = vpop.f32.mrb[0].mxu0
        %v2981 = vadd.f32 0.0, %v2980
        %v2982 = vpop.f32.mrb[0].mxu0
        %v2983 = vpop.f32.mrb[0].mxu0
        %v2984 = vadd.f32 0.0, %v2983
        %v2985 = vpop.f32.mrb[0].mxu0
        %2986 = vmatprep.mubr.bf16.mxu0 0
        %2987 = vmatmul.mubr.bf16.gmra.mrb[0].mxu0 %v1329
        %v2988 = vpop.f32.mrb[0].mxu0
        %v2989 = vadd.f32 0.0, %v2988
        %v2990 = vpop.f32.mrb[0].mxu0
        %v2991 = vpop.f32.mrb[0].mxu0
        %v2992 = vadd.f32 0.0, %v2991
        %v2993 = vpop.f32.mrb[0].mxu0
        %2994 = vmatprep.mubr.bf16.mxu0 0
        %2995 = vmatmul.mubr.bf16.gmra.mrb[0].mxu0 %v1330
        %v2996 = vpop.f32.mrb[0].mxu0
        %v2997 = vadd.f32 0.0, %v2996
        %v2998 = vpop.f32.mrb[0].mxu0
        %v2999 = vpop.f32.mrb[0].mxu0
        %v3000 = vadd.f32 0.0, %v2999
        %v3001 = vpop.f32.mrb[0].mxu0
        %3002 = vmatprep.mubr.bf16.mxu0 0
        %3003 = vmatmul.mubr.bf16.gmra.mrb[0].mxu0 %v1331
        %v3004 = vpop.f32.mrb[0].mxu0
        %v3005 = vadd.f32 0.0, %v3004
        %v3006 = vpop.f32.mrb[0].mxu0
        %v3007 = vpop.f32.mrb[0].mxu0
        %v3008 = vadd.f32 0.0, %v3007
        %v3009 = vpop.f32.mrb[0].mxu0
        %3010 = vmatprep.mubr.bf16.mxu0 0
        %3011 = vmatmul.mubr.bf16.gmra.mrb[0].mxu0 %v2074
        %v3012 = vpop.f32.mrb[0].mxu0
        %v3013 = vadd.f32 0.0, %v3012
        %v3014 = vpop.f32.mrb[0].mxu0
        %v3015 = vpop.f32.mrb[0].mxu0
        %v3016 = vadd.f32 0.0, %v3015
        %v3017 = vpop.f32.mrb[0].mxu0
        %3018 = vmatprep.mubr.bf16.mxu0 0
        %3019 = vmatmul.mubr.bf16.gmra.mrb[0].mxu0 %v2817
        %v3020 = vpop.f32.mrb[0].mxu0
        %v3021 = vadd.f32 0.0, %v3020
        %v3022 = vpop.f32.mrb[0].mxu0
        %v3023 = vpop.f32.mrb[0].mxu0
        %v3024 = vadd.f32 0.0, %v3023
        %v3025 = vpop.f32.mrb[0].mxu0
        %3026 = vdwg.mxu0
        %v3027 = vadd.f32 %v2778, %v2901
        %v3028 = vadd.f32 %v2779, %v2904
        %v3029 = vadd.f32 %v2780, %v2909
        %v3030 = vadd.f32 %v2781, %v2912
        %v3031 = vadd.f32 %v2782, %v2917
        %v3032 = vadd.f32 %v2783, %v2920
        %v3033 = vadd.f32 %v2784, %v2925
        %v3034 = vadd.f32 %v2785, %v2928
        %v3035 = vadd.f32 %v2786, %v2933
        %v3036 = vadd.f32 %v2787, %v2936
        %v3037 = vadd.f32 %v2788, %v2941
        %v3038 = vadd.f32 %v2789, %v2944
        %v3039 = vadd.f32 %v2790, %v2949
        %v3040 = vadd.f32 %v2791, %v2952
        %v3041 = vadd.f32 %v2792, %v2957
        %v3042 = vadd.f32 %v2793, %v2960
        %v3043 = vadd.f32 %v2794, %v2965
        %v3044 = vadd.f32 %v2795, %v2968
        %v3045 = vadd.f32 %v2796, %v2973
        %v3046 = vadd.f32 %v2797, %v2976
        %v3047 = vadd.f32 %v2798, %v2981
        %v3048 = vadd.f32 %v2799, %v2984
        %v3049 = vadd.f32 %v2800, %v2989
        %v3050 = vadd.f32 %v2801, %v2992
        %v3051 = vadd.f32 %v2802, %v2997
        %v3052 = vadd.f32 %v2803, %v3000
        %v3053 = vadd.f32 %v2804, %v3005
        %v3054 = vadd.f32 %v2805, %v3008
        %v3055 = vadd.f32 %v2806, %v3013
        %v3056 = vadd.f32 %v2807, %v3016
        %v3057 = vadd.f32 %v2808, %v3021
        %v3058 = vadd.f32 %v2809, %v3024
        %v3059 = vld [vmem:[%s2] sm:$0x1]
        %v3061 = vlaneseq
        %v3062 = vshrl.u32 %v3061, 7
        %v3063 = vsub.s32 0, %v3062
        %v3064 = vrot.slane %v3059, %v3063
        %v3066 = vadd.f32 %v3027, %v3064
        %v3067 = vadd.f32 %v3028, %v3064
        %v3068 = vadd.f32 %v3029, %v3064
        %v3069 = vadd.f32 %v3030, %v3064
        %v3070 = vadd.f32 %v3031, %v3064
        %v3071 = vadd.f32 %v3032, %v3064
        %v3072 = vadd.f32 %v3033, %v3064
        %v3073 = vadd.f32 %v3034, %v3064
        %v3074 = vadd.f32 %v3035, %v3064
        %v3075 = vadd.f32 %v3036, %v3064
        %v3076 = vadd.f32 %v3037, %v3064
        %v3077 = vadd.f32 %v3038, %v3064
        %v3078 = vadd.f32 %v3039, %v3064
        %v3079 = vadd.f32 %v3040, %v3064
        %v3080 = vadd.f32 %v3041, %v3064
        %v3081 = vadd.f32 %v3042, %v3064
        %v3082 = vadd.f32 %v3043, %v3064
        %v3083 = vadd.f32 %v3044, %v3064
        %v3084 = vadd.f32 %v3045, %v3064
        %v3085 = vadd.f32 %v3046, %v3064
        %v3086 = vadd.f32 %v3047, %v3064
        %v3087 = vadd.f32 %v3048, %v3064
        %v3088 = vadd.f32 %v3049, %v3064
        %v3089 = vadd.f32 %v3050, %v3064
        %v3090 = vadd.f32 %v3051, %v3064
        %v3091 = vadd.f32 %v3052, %v3064
        %v3092 = vadd.f32 %v3053, %v3064
        %v3093 = vadd.f32 %v3054, %v3064
        %v3094 = vadd.f32 %v3055, %v3064
        %v3095 = vadd.f32 %v3056, %v3064
        %v3096 = vadd.f32 %v3057, %v3064
        %v3097 = vadd.f32 %v3058, %v3064
        %v3098 = vadd.f32 %v3066, %v3067
        %v3099 = vadd.f32 %v3098, %v3068
        %v3100 = vadd.f32 %v3099, %v3069
        %v3101 = vadd.f32 %v3100, %v3070
        %v3102 = vadd.f32 %v3101, %v3071
        %v3103 = vadd.f32 %v3102, %v3072
        %v3104 = vadd.f32 %v3103, %v3073
        %v3105 = vadd.f32 %v3104, %v3074
        %v3106 = vadd.f32 %v3105, %v3075
        %v3107 = vadd.f32 %v3106, %v3076
        %v3108 = vadd.f32 %v3107, %v3077
        %v3109 = vadd.f32 %v3108, %v3078
        %v3110 = vadd.f32 %v3109, %v3079
        %v3111 = vadd.f32 %v3110, %v3080
        %v3112 = vadd.f32 %v3111, %v3081
        %v3113 = vadd.f32 %v3112, %v3082
        %v3114 = vadd.f32 %v3113, %v3083
        %v3115 = vadd.f32 %v3114, %v3084
        %v3116 = vadd.f32 %v3115, %v3085
        %v3117 = vadd.f32 %v3116, %v3086
        %v3118 = vadd.f32 %v3117, %v3087
        %v3119 = vadd.f32 %v3118, %v3088
        %v3120 = vadd.f32 %v3119, %v3089
        %v3121 = vadd.f32 %v3120, %v3090
        %v3122 = vadd.f32 %v3121, %v3091
        %v3123 = vadd.f32 %v3122, %v3092
        %v3124 = vadd.f32 %v3123, %v3093
        %v3125 = vadd.f32 %v3124, %v3094
        %v3126 = vadd.f32 %v3125, %v3095
        %v3127 = vadd.f32 %v3126, %v3096
        %v3128 = vadd.f32 %v3127, %v3097
        %v3129 = vrot.slane %v3128, 4
        %v3130 = vadd.f32 %v3128, %v3129
        %v3131 = vrot.slane %v3130, 2
        %v3132 = vadd.f32 %v3130, %v3131
        %v3133 = vrot.slane %v3132, 1
        %v3134 = vadd.f32 %v3132, %v3133
        %3135 = vst [vmem:[%s267] sm:$0x1] %v3134
        %v3136 = vmul.f32 %v3066, %v3066
        %v3137 = vmul.f32 %v3067, %v3067
        %v3138 = vmul.f32 %v3068, %v3068
        %v3139 = vmul.f32 %v3069, %v3069
        %v3140 = vmul.f32 %v3070, %v3070
        %v3141 = vmul.f32 %v3071, %v3071
        %v3142 = vmul.f32 %v3072, %v3072
        %v3143 = vmul.f32 %v3073, %v3073
        %v3144 = vmul.f32 %v3074, %v3074
        %v3145 = vmul.f32 %v3075, %v3075
        %v3146 = vmul.f32 %v3076, %v3076
        %v3147 = vmul.f32 %v3077, %v3077
        %v3148 = vmul.f32 %v3078, %v3078
        %v3149 = vmul.f32 %v3079, %v3079
        %v3150 = vmul.f32 %v3080, %v3080
        %v3151 = vmul.f32 %v3081, %v3081
        %v3152 = vmul.f32 %v3082, %v3082
        %v3153 = vmul.f32 %v3083, %v3083
        %v3154 = vmul.f32 %v3084, %v3084
        %v3155 = vmul.f32 %v3085, %v3085
        %v3156 = vmul.f32 %v3086, %v3086
        %v3157 = vmul.f32 %v3087, %v3087
        %v3158 = vmul.f32 %v3088, %v3088
        %v3159 = vmul.f32 %v3089, %v3089
        %v3160 = vmul.f32 %v3090, %v3090
        %v3161 = vmul.f32 %v3091, %v3091
        %v3162 = vmul.f32 %v3092, %v3092
        %v3163 = vmul.f32 %v3093, %v3093
        %v3164 = vmul.f32 %v3094, %v3094
        %v3165 = vmul.f32 %v3095, %v3095
        %v3166 = vmul.f32 %v3096, %v3096
        %v3167 = vmul.f32 %v3097, %v3097
        %v3168 = vadd.f32 %v3136, %v3137
        %v3169 = vadd.f32 %v3168, %v3138
        %v3170 = vadd.f32 %v3169, %v3139
        %v3171 = vadd.f32 %v3170, %v3140
        %v3172 = vadd.f32 %v3171, %v3141
        %v3173 = vadd.f32 %v3172, %v3142
        %v3174 = vadd.f32 %v3173, %v3143
        %v3175 = vadd.f32 %v3174, %v3144
        %v3176 = vadd.f32 %v3175, %v3145
        %v3177 = vadd.f32 %v3176, %v3146
        %v3178 = vadd.f32 %v3177, %v3147
        %v3179 = vadd.f32 %v3178, %v3148
        %v3180 = vadd.f32 %v3179, %v3149
        %v3181 = vadd.f32 %v3180, %v3150
        %v3182 = vadd.f32 %v3181, %v3151
        %v3183 = vadd.f32 %v3182, %v3152
        %v3184 = vadd.f32 %v3183, %v3153
        %v3185 = vadd.f32 %v3184, %v3154
        %v3186 = vadd.f32 %v3185, %v3155
        %v3187 = vadd.f32 %v3186, %v3156
        %v3188 = vadd.f32 %v3187, %v3157
        %v3189 = vadd.f32 %v3188, %v3158
        %v3190 = vadd.f32 %v3189, %v3159
        %v3191 = vadd.f32 %v3190, %v3160
        %v3192 = vadd.f32 %v3191, %v3161
        %v3193 = vadd.f32 %v3192, %v3162
        %v3194 = vadd.f32 %v3193, %v3163
        %v3195 = vadd.f32 %v3194, %v3164
        %v3196 = vadd.f32 %v3195, %v3165
        %v3197 = vadd.f32 %v3196, %v3166
        %v3198 = vadd.f32 %v3197, %v3167
        %v3199 = vrot.slane %v3198, 4
        %v3200 = vadd.f32 %v3198, %v3199
        %v3201 = vrot.slane %v3200, 2
        %v3202 = vadd.f32 %v3200, %v3201
        %v3203 = vrot.slane %v3202, 1
        %v3204 = vadd.f32 %v3202, %v3203
        %3205 = vst [vmem:[%s273] sm:$0x1] %v3204
        %3206 = vst [vmem:[%s261] sm:$0xff] %v3066
        %3207 = vst [vmem:[%s261 + $0x8] sm:$0xff] %v3067
        %3208 = vst [vmem:[%s261 + $0x10] sm:$0xff] %v3068
        %3209 = vst [vmem:[%s261 + $0x18] sm:$0xff] %v3069
        %3210 = vst [vmem:[%s261 + $0x20] sm:$0xff] %v3070
        %3211 = vst [vmem:[%s261 + $0x28] sm:$0xff] %v3071
        %3212 = vst [vmem:[%s261 + $0x30] sm:$0xff] %v3072
        %3213 = vst [vmem:[%s261 + $0x38] sm:$0xff] %v3073
        %3214 = vst [vmem:[%s261 + $0x40] sm:$0xff] %v3074
        %3215 = vst [vmem:[%s261 + $0x48] sm:$0xff] %v3075
        %3216 = vst [vmem:[%s261 + $0x50] sm:$0xff] %v3076
        %3217 = vst [vmem:[%s261 + $0x58] sm:$0xff] %v3077
        %3218 = vst [vmem:[%s261 + $0x60] sm:$0xff] %v3078
        %3219 = vst [vmem:[%s261 + $0x68] sm:$0xff] %v3079
        %3220 = vst [vmem:[%s261 + $0x70] sm:$0xff] %v3080
        %3221 = vst [vmem:[%s261 + $0x78] sm:$0xff] %v3081
        %3222 = vst [vmem:[%s261 + $0x80] sm:$0xff] %v3082
        %3223 = vst [vmem:[%s261 + $0x88] sm:$0xff] %v3083
        %3224 = vst [vmem:[%s261 + $0x90] sm:$0xff] %v3084
        %3225 = vst [vmem:[%s261 + $0x98] sm:$0xff] %v3085
        %3226 = vst [vmem:[%s261 + $0xa0] sm:$0xff] %v3086
        %3227 = vst [vmem:[%s261 + $0xa8] sm:$0xff] %v3087
        %3228 = vst [vmem:[%s261 + $0xb0] sm:$0xff] %v3088
        %3229 = vst [vmem:[%s261 + $0xb8] sm:$0xff] %v3089
        %3230 = vst [vmem:[%s261 + $0xc0] sm:$0xff] %v3090
        %3231 = vst [vmem:[%s261 + $0xc8] sm:$0xff] %v3091
        %3232 = vst [vmem:[%s261 + $0xd0] sm:$0xff] %v3092
        %3233 = vst [vmem:[%s261 + $0xd8] sm:$0xff] %v3093
        %3234 = vst [vmem:[%s261 + $0xe0] sm:$0xff] %v3094
        %3235 = vst [vmem:[%s261 + $0xe8] sm:$0xff] %v3095
        %3236 = vst [vmem:[%s261 + $0xf0] sm:$0xff] %v3096
        %3237 = vst [vmem:[%s261 + $0xf8] sm:$0xff] %v3097
        %s3238 = sand.u32 %s103, 1
        %s3239 = scalar_lea.sflag [#allocation5], %s3238
        %s3240 = sand.u32 %s103, 1
        %s3241 = smul.addr %s3240, 256
        %s3242 = scalar_lea.vmem [#allocation8], %s3241
        %s3243 = sand.u32 %s27, 1
        %s3244 = scalar_lea.sflag [#allocation10], %s3243
        %s3245 = sand.u32 %s129, 1
        %s3246 = scalar_lea.vmem [#allocation9], %s3245
        %s3247 = sand.u32 %s27, 1
        %s3248 = scalar_lea.sflag [#allocation10], %s3247
        %s3249 = sand.u32 %s155, 1
        %s3250 = scalar_lea.vmem [#allocation11], %s3249
        // Predicated region
        $region41: #{tpu_custom_call.1} parent=31 // pred_check
          %p3251 = pneg %p113
        $region42: #{tpu_custom_call.1} parent=31 // pred_check_branch
          %3253 = sbr.rel (%p3251) target = $region44
        $region43: #{tpu_custom_call.1} parent=31 // pred_region
          %s3255 = ssub.s32 4096, 4096
          %3256 = vsyncadd %s3239, %s3255
          %s3257 = smul.addr %s27, 32
          %s3258 = smul.addr %s3257, 128
          %s3259 = scalar_lea.hbm %s3, %s3258
          %s3260 = sshll.u32 %s3242, 4
          %s3261 = int_to_ptr.vmem [resolvable:$true] %s3260
          %3266 = dma.vmem_to_hbm [thread:$0]  %s3261, 4096, %s3259, %s3239, 128, 128, 8
        $region44: #{tpu_custom_call.1} parent=31 // pred_fallthru
          _
        // Predicated region
        $region45: #{tpu_custom_call.1} parent=31 // pred_check
          %p3267 = pneg %p139
        $region46: #{tpu_custom_call.1} parent=31 // pred_check_branch
          %3269 = sbr.rel (%p3267) target = $region48
        $region47: #{tpu_custom_call.1} parent=31 // pred_region
          %s3271 = ssub.s32 16, 16
          %3272 = vsyncadd %s3244, %s3271
          %s3273 = smul.addr %s27, 16
          %s3274 = scalar_lea.hbm %s4, %s3273
          %s3276 = sshll.u32 %s3246, 4
          %s3277 = int_to_ptr.vmem [resolvable:$true] %s3276
          %3279 = dma.vmem_to_hbm [thread:$0]  %s3277, 16, %s3274, %s3244
        $region48: #{tpu_custom_call.1} parent=31 // pred_fallthru
          _
        // Predicated region
        $region49: #{tpu_custom_call.1} parent=31 // pred_check
          %p3280 = pneg %p165
        $region50: #{tpu_custom_call.1} parent=31 // pred_check_branch
          %3282 = sbr.rel (%p3280) target = $region52
        $region51: #{tpu_custom_call.1} parent=31 // pred_region
          %s3284 = ssub.s32 16, 16
          %3285 = vsyncadd %s3248, %s3284
          %s3286 = smul.addr %s27, 16
          %s3287 = scalar_lea.hbm %s5, %s3286
          %s3289 = sshll.u32 %s3250, 4
          %s3290 = int_to_ptr.vmem [resolvable:$true] %s3289
          %3292 = dma.vmem_to_hbm [thread:$0]  %s3290, 16, %s3287, %s3248
        $region52: #{tpu_custom_call.1} parent=31 // pred_fallthru
          _
      $region32: #{tpu_custom_call.1} parent=5 // pred_fallthru
        _
      %p3293 = scmp.le.s32.totalorder 2, %s22
      // Predicated region
      $region53: #{tpu_custom_call.1} parent=5 // pred_check
        %p3294 = pneg %p3293
      $region54: #{tpu_custom_call.1} parent=5 // pred_check_branch
        %3296 = sbr.rel (%p3294) target = $region56
      $region55: #{tpu_custom_call.1} parent=5 // pred_region
        %s3297 = ssub.s32 %s22, 2
        // Predicated region
        $region57: #{tpu_custom_call.1} parent=55 // pred_check
          %p3298 = pneg %p119
        $region58: #{tpu_custom_call.1} parent=55 // pred_check_branch
          %3300 = sbr.rel (%p3298) target = $region60
        $region59: #{tpu_custom_call.1} parent=55 // pred_region
          %s3301 = sand.u32 %s104, 1
          %s3302 = scalar_lea.sflag [#allocation5], %s3301
          %s3303 = sand.u32 %s104, 1
          %s3304 = smul.addr %s3303, 256
          %s3305 = scalar_lea.vmem [#allocation8], %s3304
          %3306 = dma.done %s3302, 4096
        $region60: #{tpu_custom_call.1} parent=55 // pred_fallthru
          _
        // Predicated region
        $region61: #{tpu_custom_call.1} parent=55 // pred_check
          %p3307 = pneg %p145
        $region62: #{tpu_custom_call.1} parent=55 // pred_check_branch
          %3309 = sbr.rel (%p3307) target = $region64
        $region63: #{tpu_custom_call.1} parent=55 // pred_region
          %s3310 = sand.u32 %s28, 1
          %s3311 = scalar_lea.sflag [#allocation10], %s3310
          %s3312 = sand.u32 %s130, 1
          %s3313 = scalar_lea.vmem [#allocation9], %s3312
          %3314 = dma.done %s3311, 16
        $region64: #{tpu_custom_call.1} parent=55 // pred_fallthru
          _
        // Predicated region
        $region65: #{tpu_custom_call.1} parent=55 // pred_check
          %p3315 = pneg %p171
        $region66: #{tpu_custom_call.1} parent=55 // pred_check_branch
          %3317 = sbr.rel (%p3315) target = $region68
        $region67: #{tpu_custom_call.1} parent=55 // pred_region
          %s3318 = sand.u32 %s28, 1
          %s3319 = scalar_lea.sflag [#allocation10], %s3318
          %s3320 = sand.u32 %s156, 1
          %s3321 = scalar_lea.vmem [#allocation11], %s3320
          %3322 = dma.done %s3319, 16
        $region68: #{tpu_custom_call.1} parent=55 // pred_fallthru
          _
      $region56: #{tpu_custom_call.1} parent=5 // pred_fallthru
        _
    $region6: #{tpu_custom_call.1} parent=1 // loop_footer
      %s26 = sadd.s32 1, %s22
    $region7: #{tpu_custom_call.1} parent=1 // loop_footer_branch
      %21 = sbr.rel target = $region3
    $region8: #{tpu_custom_call.1} parent=1 // loop_exit
      _
    %3323 = vsyncpa [#allocation4], 1
    %s3324 = scalar_lea.sflag [#allocation4], 1
    %3325 = vsyncpa %s3324, 1
    %3326 = vsyncpa [#allocation7], 1
    %3327 = vsyncpa [#allocation5], 1
    %s3328 = scalar_lea.sflag [#allocation5], 1
    %3329 = vsyncpa %s3328, 1
    %3330 = vsyncpa [#allocation10], 1
    %s3331 = scalar_lea.sflag [#allocation10], 1
    %3332 = vsyncpa %s3331, 1

</llo_original>
